<compile_context>
chip_gen: v7x
topology: tpu7x:2x2x1
jax: 0.10.0
libtpu: 0.0.40
codegen_flags: <defaults>
</compile_context>

<pallas_src>
import functools
import math

import jax
import jax.numpy as jnp
from jax.experimental import pallas as pl
from jax.experimental.pallas import tpu as pltpu


# ----------------------------- config (tiny) -----------------------------
B = 2              # batch
S = 8              # sequence length
D = 32             # hidden dim ("config.dim")
H = 4              # attention heads
HD = D // H        # dim per head
FFN = 64           # feed-forward hidden dim
LAYERS = 2         # transformer layers
VOCAB = 100
MAX_POS = 32
NUM_CLASSES = 3
LN_EPS = 1e-12
MASK_NEG = -1e9    # additive mask bias (safer than -inf w.r.t. NaN)


# ----------------------------- shared helpers -----------------------------
def _ln(x, g, b, eps):
    mu = jnp.mean(x, axis=-1, keepdims=True)
    xc = x - mu
    var = jnp.mean(xc * xc, axis=-1, keepdims=True)
    return xc * jax.lax.rsqrt(var + eps) * g + b


def _gelu(x):
    # exact-erf GELU (DistilBERT numerics).  tanh approx would move the
    # transcendental to the EUP slot but changes numerics slightly.
    return 0.5 * x * (1.0 + jax.lax.erf(x * (1.0 / math.sqrt(2.0))))


# ----------------------------- fused kernel -----------------------------
def _fused_bert_kernel(
    we_ref, pe_ref, mask_ref, eg_ref, eb_ref,
    wq_ref, bq_ref, wk_ref, bk_ref, wv_ref, bv_ref,
    wo_ref, bo_ref, sa_g_ref, sa_b_ref,
    f1_w_ref, f1_b_ref, f2_w_ref, f2_b_ref, ln2_g_ref, ln2_b_ref,
    pre_w_ref, pre_b_ref, cls_w_ref, cls_b_ref,
    logits_ref,
    x_vmem,
    *, eps):
    """grid = (batch, layer); x stays resident in VMEM across layers."""
    layer = pl.program_id(1)

    # ---- layer 0 preamble: (word + pos) embeddings -> LayerNorm -> scratch
    @pl.when(layer == 0)
    def _():
        x_vmem[...] = _ln(we_ref[...] + pe_ref[...], eg_ref[...], eb_ref[...], eps)

    x = x_vmem[...]                                              # (S, D)

    # additive attention-mask bias for this batch row: keep=0 / pad=-1e9
    bias = (1.0 - mask_ref[...].astype(jnp.float32)) * MASK_NEG  # (1, S)

    # ---- multi-head self-attention, head-major (no lane slicing / reshape)
    # per-head projections: x @ (D, HD) weight slabs indexed on the untiled
    # leading H dim; 1/sqrt(HD) is pre-folded into wq/bq.
    q_list, k_list, v_list = [], [], []
    for h in range(H):
        q_list.append(jnp.dot(x, wq_ref[h], preferred_element_type=jnp.float32)
                      + bq_ref[h])
        k_list.append(jnp.dot(x, wk_ref[h], preferred_element_type=jnp.float32)
                      + bk_ref[h])
        v_list.append(jnp.dot(x, wv_ref[h], preferred_element_type=jnp.float32)
                      + bv_ref[h])
    q = jnp.stack(q_list, axis=0)                                # (H, S, HD)
    k = jnp.stack(k_list, axis=0)                                # (H, S, HD)
    v = jnp.stack(v_list, axis=0)                                # (H, S, HD)

    s = jnp.einsum("hqd,hkd->hqk", q, k,
                   preferred_element_type=jnp.float32)           # (H, S, S)
    s = s + bias[None, :, :]                                     # bcast h, q
    m = jnp.max(s, axis=-1, keepdims=True)
    p = jnp.exp(s - m)
    p = p * pl.reciprocal(jnp.sum(p, axis=-1, keepdims=True), approx=True)
    ctx = jnp.einsum("hqk,hkd->hqd", p, v,
                     preferred_element_type=jnp.float32)         # (H, S, HD)

    # attention output projection via per-head (HD, D) slabs + residual + LN
    sa = bo_ref[...]                                             # (1, D)
    for h in range(H):
        sa = sa + jnp.dot(ctx[h], wo_ref[h],
                          preferred_element_type=jnp.float32)
    x1 = _ln(sa + x, sa_g_ref[...], sa_b_ref[...], eps)

    # ---- feed-forward (GELU) + residual + LN
    ff = _gelu(jnp.dot(x1, f1_w_ref[...],
                       preferred_element_type=jnp.float32) + f1_b_ref[...])
    ff2 = jnp.dot(ff, f2_w_ref[...],
                  preferred_element_type=jnp.float32) + f2_b_ref[...]
    x_out = _ln(ff2 + x1, ln2_g_ref[...], ln2_b_ref[...], eps)
    x_vmem[...] = x_out

    # ---- last layer epilogue: CLS pool + pre_classifier(ReLU) + classifier
    # (dropout = identity in eval mode)
    @pl.when(layer == pl.num_programs(1) - 1)
    def _():
        pooled = x_out[0:1, :]                                   # (1, D) CLS
        y = jnp.dot(pooled, pre_w_ref[...],
                    preferred_element_type=jnp.float32) + pre_b_ref[...]
        y = jnp.maximum(y, 0.0)
        logits_ref[...] = jnp.dot(y, cls_w_ref[...],
                                  preferred_element_type=jnp.float32) + cls_b_ref[...]


def _layer_spec(shape):
    """Stacked (LAYERS, ...) parameter: new layer block each step along l."""
    return pl.BlockSpec((None,) + shape,
                        lambda b, l, _s=shape: (l,) + (0,) * len(_s))


def _const_spec(shape):
    """Shared parameter: same (full-array) block for every grid step."""
    return pl.BlockSpec(shape, lambda b, l, _s=shape: (0,) * len(_s))


def bert_classifier_forward(params, input_ids, attention_mask):
    """Mirrors BertClassifier.forward (eval mode: dropout = identity)."""
    # token-id gather stays in XLA (data-dependent row lookup)
    we2d = jnp.take(params["word_emb"], input_ids, axis=0).reshape(B * S, D)
    pe = params["pos_emb"][:S]                                   # (S, D)
    mask3 = attention_mask.reshape(B, 1, S)                      # (B, 1, S)

    in_specs = [
        pl.BlockSpec((S, D), lambda b, l: (b, 0)),               # we rows of b
        _const_spec((S, D)),                                     # pos emb
        pl.BlockSpec((None, 1, S), lambda b, l: (b, 0, 0)),      # attn mask row
        _const_spec((1, D)), _const_spec((1, D)),                # emb LN g/b
        _layer_spec((H, D, HD)), _layer_spec((H, 1, HD)),        # wq, bq
        _layer_spec((H, D, HD)), _layer_spec((H, 1, HD)),        # wk, bk
        _layer_spec((H, D, HD)), _layer_spec((H, 1, HD)),        # wv, bv
        _layer_spec((H, HD, D)), _layer_spec((1, D)),            # wo, bo
        _layer_spec((1, D)), _layer_spec((1, D)),                # sa LN g/b
        _layer_spec((D, FFN)), _layer_spec((1, FFN)),            # ffn1
        _layer_spec((FFN, D)), _layer_spec((1, D)),              # ffn2
        _layer_spec((1, D)), _layer_spec((1, D)),                # out LN g/b
        _const_spec((D, D)), _const_spec((1, D)),                # pre_classifier
        _const_spec((D, NUM_CLASSES)), _const_spec((1, NUM_CLASSES)),  # classifier
    ]

    logits3 = pl.pallas_call(
        functools.partial(_fused_bert_kernel, eps=LN_EPS),
        out_shape=jax.ShapeDtypeStruct((B, 1, NUM_CLASSES), jnp.float32),
        grid_spec=pltpu.PrefetchScalarGridSpec(
            num_scalar_prefetch=0,
            grid=(B, LAYERS),
            in_specs=in_specs,
            out_specs=pl.BlockSpec((None, 1, NUM_CLASSES),
                                   lambda b, l: (b, 0, 0)),
            scratch_shapes=[pltpu.VMEM((S, D), jnp.float32)],
        ),
        compiler_params=pltpu.CompilerParams(
            dimension_semantics=("parallel", "arbitrary")),
    )(we2d, pe, mask3, params["emb_ln_g"], params["emb_ln_b"],
      params["wq"], params["bq"], params["wk"], params["bk"],
      params["wv"], params["bv"], params["wo"], params["bo"],
      params["sa_ln_g"], params["sa_ln_b"],
      params["f1_w"], params["f1_b"], params["f2_w"], params["f2_b"],
      params["out_ln_g"], params["out_ln_b"],
      params["pre_w"], params["pre_b"], params["cls_w"], params["cls_b"])

    return logits3.reshape(B, NUM_CLASSES)


# ----------------------------- parameters -----------------------------
def init_params(seed=0):
    """Random weights, stored directly in the kernel layout:
       attention weights as per-head slabs (LAYERS, H, D, HD) / (LAYERS, H, HD, D),
       all other linears pre-transposed to (K, N).  The 1/sqrt(HD) softmax
       scale is folded into wq (and bq) once here."""
    key = jax.random.PRNGKey(seed)
    ks = jax.random.split(key, 10)
    std = 0.02
    scale = 1.0 / math.sqrt(HD)
    normal = lambda kk, shape: std * jax.random.normal(kk, shape, jnp.float32)
    return {
        "word_emb": normal(ks[0], (VOCAB, D)),
        "pos_emb": normal(ks[1], (MAX_POS, D)),
        "emb_ln_g": jnp.ones((1, D), jnp.float32),
        "emb_ln_b": jnp.zeros((1, D), jnp.float32),
        "wq": normal(ks[2], (LAYERS, H, D, HD)) * scale,     # scale folded in
        "bq": jnp.zeros((LAYERS, H, 1, HD), jnp.float32),    # (already scaled)
        "wk": normal(ks[3], (LAYERS, H, D, HD)),
        "bk": jnp.zeros((LAYERS, H, 1, HD), jnp.float32),
        "wv": normal(ks[4], (LAYERS, H, D, HD)),
        "bv": jnp.zeros((LAYERS, H, 1, HD), jnp.float32),
        "wo": normal(ks[5], (LAYERS, H, HD, D)),
        "bo": jnp.zeros((LAYERS, 1, D), jnp.float32),
        "sa_ln_g": jnp.ones((LAYERS, 1, D), jnp.float32),
        "sa_ln_b": jnp.zeros((LAYERS, 1, D), jnp.float32),
        "f1_w": normal(ks[6], (LAYERS, D, FFN)),
        "f1_b": jnp.zeros((LAYERS, 1, FFN), jnp.float32),
        "f2_w": normal(ks[7], (LAYERS, FFN, D)),
        "f2_b": jnp.zeros((LAYERS, 1, D), jnp.float32),
        "out_ln_g": jnp.ones((LAYERS, 1, D), jnp.float32),
        "out_ln_b": jnp.zeros((LAYERS, 1, D), jnp.float32),
        "pre_w": normal(ks[8], (D, D)),
        "pre_b": jnp.zeros((1, D), jnp.float32),
        "cls_w": normal(ks[9], (D, NUM_CLASSES)),
        "cls_b": jnp.zeros((1, NUM_CLASSES), jnp.float32),
    }


# ----------------------------- pure-JAX reference -----------------------------
def reference_forward(params, input_ids, attention_mask):
    we = jnp.take(params["word_emb"], input_ids, axis=0)             # (B,S,D)
    x = _ln(we + params["pos_emb"][None, :S, :],
            params["emb_ln_g"], params["emb_ln_b"], LN_EPS)
    bias = (1.0 - attention_mask.astype(jnp.float32)) * MASK_NEG      # (B,S)
    for l in range(LAYERS):
        q = jnp.einsum("bsd,hde->bhse", x, params["wq"][l]) + params["bq"][l][None]
        k = jnp.einsum("bsd,hde->bhse", x, params["wk"][l]) + params["bk"][l][None]
        v = jnp.einsum("bsd,hde->bhse", x, params["wv"][l]) + params["bv"][l][None]
        s = jnp.einsum("bhqe,bhke->bhqk", q, k) + bias[:, None, None, :]
        p = jax.nn.softmax(s, axis=-1)
        ctx = jnp.einsum("bhqk,bhke->bhqe", p, v)
        sa = jnp.einsum("bhqe,hef->bqf", ctx, params["wo"][l]) + params["bo"][l][None]
        x1 = _ln(sa + x, params["sa_ln_g"][l], params["sa_ln_b"][l], LN_EPS)
        ff = _gelu(jnp.einsum("bqf,fg->bqg", x1, params["f1_w"][l])
                   + params["f1_b"][l][None])
        ff2 = jnp.einsum("bqg,gf->bqf", ff, params["f2_w"][l]) + params["f2_b"][l][None]
        x = _ln(ff2 + x1, params["out_ln_g"][l], params["out_ln_b"][l], LN_EPS)
    pooled = x[:, 0]                                                   # (B, D)
    y = jnp.maximum(pooled @ params["pre_w"] + params["pre_b"], 0.0)
    return y @ params["cls_w"] + params["cls_b"]


# ----------------------------- main -----------------------------
if __name__ == "__main__":
    key = jax.random.PRNGKey(0)
    k_ids, _ = jax.random.split(key)
    input_ids = jax.random.randint(k_ids, (B, S), 0, VOCAB, dtype=jnp.int32)
    # last two positions of sample 1 are padding
    attention_mask = jnp.array(
        [[1, 1, 1, 1, 1, 1, 1, 1],
         [1, 1, 1, 1, 1, 1, 0, 0]], dtype=jnp.int32)

    params = init_params(seed=0)

    logits = jax.jit(bert_classifier_forward)(params, input_ids, attention_mask)
    logits = jax.block_until_ready(logits)

    assert logits.shape == (B, NUM_CLASSES)
    assert bool(jnp.all(jnp.isfinite(logits)))

    ref = reference_forward(params, input_ids, attention_mask)
    # loose tolerance: approximate softmax reciprocal (~1e-3 rel) by design
    assert bool(jnp.allclose(logits, ref, atol=5e-3, rtol=5e-2)), (logits, ref)

    print("KERNEL_OK")
</pallas_src>

<mosaic_0001>
module attributes {stable_mosaic.version = 11 : i64} {
  func.func @_fused_bert_kernel(%arg0: i32, %arg1: i32, %arg2: memref<8x32xf32, #tpu.memory_space<vmem>>, %arg3: memref<8x32xf32, #tpu.memory_space<vmem>>, %arg4: memref<1x1x8xi32, #tpu.memory_space<vmem>>, %arg5: memref<1x32xf32, #tpu.memory_space<vmem>>, %arg6: memref<1x32xf32, #tpu.memory_space<vmem>>, %arg7: memref<1x4x32x8xf32, #tpu.memory_space<vmem>>, %arg8: memref<1x4x1x8xf32, #tpu.memory_space<vmem>>, %arg9: memref<1x4x32x8xf32, #tpu.memory_space<vmem>>, %arg10: memref<1x4x1x8xf32, #tpu.memory_space<vmem>>, %arg11: memref<1x4x32x8xf32, #tpu.memory_space<vmem>>, %arg12: memref<1x4x1x8xf32, #tpu.memory_space<vmem>>, %arg13: memref<1x4x8x32xf32, #tpu.memory_space<vmem>>, %arg14: memref<1x1x32xf32, #tpu.memory_space<vmem>>, %arg15: memref<1x1x32xf32, #tpu.memory_space<vmem>>, %arg16: memref<1x1x32xf32, #tpu.memory_space<vmem>>, %arg17: memref<1x32x64xf32, #tpu.memory_space<vmem>>, %arg18: memref<1x1x64xf32, #tpu.memory_space<vmem>>, %arg19: memref<1x64x32xf32, #tpu.memory_space<vmem>>, %arg20: memref<1x1x32xf32, #tpu.memory_space<vmem>>, %arg21: memref<1x1x32xf32, #tpu.memory_space<vmem>>, %arg22: memref<1x1x32xf32, #tpu.memory_space<vmem>>, %arg23: memref<32x32xf32, #tpu.memory_space<vmem>>, %arg24: memref<1x32xf32, #tpu.memory_space<vmem>>, %arg25: memref<32x3xf32, #tpu.memory_space<vmem>>, %arg26: memref<1x3xf32, #tpu.memory_space<vmem>>, %arg27: memref<1x1x3xf32, #tpu.memory_space<vmem>>, %arg28: memref<8x32xf32, #tpu.memory_space<vmem>>) attributes {dimension_semantics = [#tpu.dimension_semantics<parallel>, #tpu.dimension_semantics<arbitrary>], iteration_bounds = array<i64: 2, 2>, scalar_prefetch = 0 : i64, scratch_operands = 1 : i64, tpu.core_type = #tpu.core_type<tc>, window_params = [{transform_indices = @transform_0, window_bounds = array<i64: 8, 32>}, {pipeline_mode = #tpu.pipeline_mode<synchronous>, transform_indices = @transform_1, window_bounds = array<i64: 8, 32>}, {transform_indices = @transform_2, window_bounds = array<i64: 1, 1, 8>}, {pipeline_mode = #tpu.pipeline_mode<synchronous>, transform_indices = @transform_3, window_bounds = array<i64: 1, 32>}, {pipeline_mode = #tpu.pipeline_mode<synchronous>, transform_indices = @transform_4, window_bounds = array<i64: 1, 32>}, {transform_indices = @transform_5, window_bounds = array<i64: 1, 4, 32, 8>}, {transform_indices = @transform_6, window_bounds = array<i64: 1, 4, 1, 8>}, {transform_indices = @transform_7, window_bounds = array<i64: 1, 4, 32, 8>}, {transform_indices = @transform_8, window_bounds = array<i64: 1, 4, 1, 8>}, {transform_indices = @transform_9, window_bounds = array<i64: 1, 4, 32, 8>}, {transform_indices = @transform_10, window_bounds = array<i64: 1, 4, 1, 8>}, {transform_indices = @transform_11, window_bounds = array<i64: 1, 4, 8, 32>}, {transform_indices = @transform_12, window_bounds = array<i64: 1, 1, 32>}, {transform_indices = @transform_13, window_bounds = array<i64: 1, 1, 32>}, {transform_indices = @transform_14, window_bounds = array<i64: 1, 1, 32>}, {transform_indices = @transform_15, window_bounds = array<i64: 1, 32, 64>}, {transform_indices = @transform_16, window_bounds = array<i64: 1, 1, 64>}, {transform_indices = @transform_17, window_bounds = array<i64: 1, 64, 32>}, {transform_indices = @transform_18, window_bounds = array<i64: 1, 1, 32>}, {transform_indices = @transform_19, window_bounds = array<i64: 1, 1, 32>}, {transform_indices = @transform_20, window_bounds = array<i64: 1, 1, 32>}, {pipeline_mode = #tpu.pipeline_mode<synchronous>, transform_indices = @transform_21, window_bounds = array<i64: 32, 32>}, {pipeline_mode = #tpu.pipeline_mode<synchronous>, transform_indices = @transform_22, window_bounds = array<i64: 1, 32>}, {pipeline_mode = #tpu.pipeline_mode<synchronous>, transform_indices = @transform_23, window_bounds = array<i64: 32, 3>}, {pipeline_mode = #tpu.pipeline_mode<synchronous>, transform_indices = @transform_24, window_bounds = array<i64: 1, 3>}, {transform_indices = @transform_25, window_bounds = array<i64: 1, 1, 3>}]} {
    %c0_i32 = arith.constant 0 : i32
    %0 = arith.cmpi eq, %arg1, %c0_i32 : i32
    %1 = arith.extui %0 : i1 to i32
    %c0_i32_0 = arith.constant 0 : i32
    %2 = arith.cmpi ne, %1, %c0_i32_0 : i32
    scf.if %2 {
      %c0_180 = arith.constant 0 : index
      %c0_181 = arith.constant 0 : index
      %228 = vector.load %arg2[%c0_180, %c0_181] : memref<8x32xf32, #tpu.memory_space<vmem>>, vector<8x32xf32>
      %c0_182 = arith.constant 0 : index
      %c0_183 = arith.constant 0 : index
      %229 = vector.load %arg3[%c0_182, %c0_183] : memref<8x32xf32, #tpu.memory_space<vmem>>, vector<8x32xf32>
      %230 = arith.addf %228, %229 : vector<8x32xf32>
      %c0_184 = arith.constant 0 : index
      %c0_185 = arith.constant 0 : index
      %231 = vector.load %arg5[%c0_184, %c0_185] : memref<1x32xf32, #tpu.memory_space<vmem>>, vector<1x32xf32>
      %c0_186 = arith.constant 0 : index
      %c0_187 = arith.constant 0 : index
      %232 = vector.load %arg6[%c0_186, %c0_187] : memref<1x32xf32, #tpu.memory_space<vmem>>, vector<1x32xf32>
      %cst_188 = arith.constant dense<0.000000e+00> : vector<8xf32>
      %233 = vector.multi_reduction <add>, %230, %cst_188 [1] : vector<8x32xf32> to vector<8xf32>
      %234 = vector.shape_cast %233 : vector<8xf32> to vector<8x1xf32>
      %cst_189 = arith.constant 3.200000e+01 : f32
      %235 = vector.broadcast %cst_189 : f32 to vector<8x1xf32>
      %236 = arith.divf %234, %235 : vector<8x1xf32>
      %237 = vector.broadcast %236 : vector<8x1xf32> to vector<8x32xf32>
      %238 = arith.subf %230, %237 : vector<8x32xf32>
      %239 = arith.mulf %238, %238 : vector<8x32xf32>
      %cst_190 = arith.constant dense<0.000000e+00> : vector<8xf32>
      %240 = vector.multi_reduction <add>, %239, %cst_190 [1] : vector<8x32xf32> to vector<8xf32>
      %241 = vector.shape_cast %240 : vector<8xf32> to vector<8x1xf32>
      %cst_191 = arith.constant 3.200000e+01 : f32
      %242 = vector.broadcast %cst_191 : f32 to vector<8x1xf32>
      %243 = arith.divf %241, %242 : vector<8x1xf32>
      %cst_192 = arith.constant 9.99999996E-13 : f32
      %244 = vector.broadcast %cst_192 : f32 to vector<8x1xf32>
      %245 = arith.addf %243, %244 : vector<8x1xf32>
      %246 = math.rsqrt %245 : vector<8x1xf32>
      %247 = vector.broadcast %246 : vector<8x1xf32> to vector<8x32xf32>
      %248 = arith.mulf %238, %247 : vector<8x32xf32>
      %249 = vector.broadcast %231 : vector<1x32xf32> to vector<8x32xf32>
      %250 = arith.mulf %248, %249 : vector<8x32xf32>
      %251 = vector.broadcast %232 : vector<1x32xf32> to vector<8x32xf32>
      %252 = arith.addf %250, %251 : vector<8x32xf32>
      %c0_193 = arith.constant 0 : index
      %c0_194 = arith.constant 0 : index
      %253 = vector.load %arg28[%c0_193, %c0_194] : memref<8x32xf32, #tpu.memory_space<vmem>>, vector<8x32xf32>
      tpu.vector_store %arg28[%c0_193, %c0_194], %252 {strides = array<i32>} : memref<8x32xf32, #tpu.memory_space<vmem>>, vector<8x32xf32>,
    } else {
    }
    %c0 = arith.constant 0 : index
    %c0_1 = arith.constant 0 : index
    %3 = vector.load %arg28[%c0, %c0_1] : memref<8x32xf32, #tpu.memory_space<vmem>>, vector<8x32xf32>
    %c0_2 = arith.constant 0 : index
    %c0_3 = arith.constant 0 : index
    %c0_4 = arith.constant 0 : index
    %4 = vector.load %arg4[%c0_2, %c0_3, %c0_4] : memref<1x1x8xi32, #tpu.memory_space<vmem>>, vector<1x1x8xi32>
    %5 = vector.shape_cast %4 : vector<1x1x8xi32> to vector<1x8xi32>
    %6 = arith.sitofp %5 : vector<1x8xi32> to vector<1x8xf32>
    %cst = arith.constant 1.000000e+00 : f32
    %7 = vector.broadcast %cst : f32 to vector<1x8xf32>
    %8 = arith.subf %7, %6 : vector<1x8xf32>
    %cst_5 = arith.constant -1.000000e+09 : f32
    %9 = vector.broadcast %cst_5 : f32 to vector<1x8xf32>
    %10 = arith.mulf %8, %9 : vector<1x8xf32>
    %c0_6 = arith.constant 0 : index
    %c0_7 = arith.constant 0 : index
    %c0_8 = arith.constant 0 : index
    %c0_9 = arith.constant 0 : index
    %11 = vector.load %arg7[%c0_6, %c0_7, %c0_8, %c0_9] : memref<1x4x32x8xf32, #tpu.memory_space<vmem>>, vector<1x1x32x8xf32>
    %12 = vector.shape_cast %11 : vector<1x1x32x8xf32> to vector<32x8xf32>
    %cst_10 = arith.constant dense<0.000000e+00> : vector<8x8xf32>
    %13 = tpu.matmul %3, %12, %cst_10 {dimension_numbers = #tpu.dot_dimension_numbers<[1], [0], [0], [1], [0, 0, 1, 1], [], []>} : vector<8x32xf32>, vector<32x8xf32>, vector<8x8xf32> -> vector<8x8xf32>
    %c0_11 = arith.constant 0 : index
    %c0_12 = arith.constant 0 : index
    %c0_13 = arith.constant 0 : index
    %c0_14 = arith.constant 0 : index
    %14 = vector.load %arg8[%c0_11, %c0_12, %c0_13, %c0_14] : memref<1x4x1x8xf32, #tpu.memory_space<vmem>>, vector<1x1x1x8xf32>
    %15 = vector.shape_cast %14 : vector<1x1x1x8xf32> to vector<1x8xf32>
    %16 = vector.broadcast %15 : vector<1x8xf32> to vector<8x8xf32>
    %17 = arith.addf %13, %16 : vector<8x8xf32>
    %c0_15 = arith.constant 0 : index
    %c0_16 = arith.constant 0 : index
    %c0_17 = arith.constant 0 : index
    %c0_18 = arith.constant 0 : index
    %18 = vector.load %arg9[%c0_15, %c0_16, %c0_17, %c0_18] : memref<1x4x32x8xf32, #tpu.memory_space<vmem>>, vector<1x1x32x8xf32>
    %19 = vector.shape_cast %18 : vector<1x1x32x8xf32> to vector<32x8xf32>
    %cst_19 = arith.constant dense<0.000000e+00> : vector<8x8xf32>
    %20 = tpu.matmul %3, %19, %cst_19 {dimension_numbers = #tpu.dot_dimension_numbers<[1], [0], [0], [1], [0, 0, 1, 1], [], []>} : vector<8x32xf32>, vector<32x8xf32>, vector<8x8xf32> -> vector<8x8xf32>
    %c0_20 = arith.constant 0 : index
    %c0_21 = arith.constant 0 : index
    %c0_22 = arith.constant 0 : index
    %c0_23 = arith.constant 0 : index
    %21 = vector.load %arg10[%c0_20, %c0_21, %c0_22, %c0_23] : memref<1x4x1x8xf32, #tpu.memory_space<vmem>>, vector<1x1x1x8xf32>
    %22 = vector.shape_cast %21 : vector<1x1x1x8xf32> to vector<1x8xf32>
    %23 = vector.broadcast %22 : vector<1x8xf32> to vector<8x8xf32>
    %24 = arith.addf %20, %23 : vector<8x8xf32>
    %c0_24 = arith.constant 0 : index
    %c0_25 = arith.constant 0 : index
    %c0_26 = arith.constant 0 : index
    %c0_27 = arith.constant 0 : index
    %25 = vector.load %arg11[%c0_24, %c0_25, %c0_26, %c0_27] : memref<1x4x32x8xf32, #tpu.memory_space<vmem>>, vector<1x1x32x8xf32>
    %26 = vector.shape_cast %25 : vector<1x1x32x8xf32> to vector<32x8xf32>
    %cst_28 = arith.constant dense<0.000000e+00> : vector<8x8xf32>
    %27 = tpu.matmul %3, %26, %cst_28 {dimension_numbers = #tpu.dot_dimension_numbers<[1], [0], [0], [1], [0, 0, 1, 1], [], []>} : vector<8x32xf32>, vector<32x8xf32>, vector<8x8xf32> -> vector<8x8xf32>
    %c0_29 = arith.constant 0 : index
    %c0_30 = arith.constant 0 : index
    %c0_31 = arith.constant 0 : index
    %c0_32 = arith.constant 0 : index
    %28 = vector.load %arg12[%c0_29, %c0_30, %c0_31, %c0_32] : memref<1x4x1x8xf32, #tpu.memory_space<vmem>>, vector<1x1x1x8xf32>
    %29 = vector.shape_cast %28 : vector<1x1x1x8xf32> to vector<1x8xf32>
    %30 = vector.broadcast %29 : vector<1x8xf32> to vector<8x8xf32>
    %31 = arith.addf %27, %30 : vector<8x8xf32>
    %c0_33 = arith.constant 0 : index
    %c1 = arith.constant 1 : index
    %c0_34 = arith.constant 0 : index
    %c0_35 = arith.constant 0 : index
    %32 = vector.load %arg7[%c0_33, %c1, %c0_34, %c0_35] : memref<1x4x32x8xf32, #tpu.memory_space<vmem>>, vector<1x1x32x8xf32>
    %33 = vector.shape_cast %32 : vector<1x1x32x8xf32> to vector<32x8xf32>
    %cst_36 = arith.constant dense<0.000000e+00> : vector<8x8xf32>
    %34 = tpu.matmul %3, %33, %cst_36 {dimension_numbers = #tpu.dot_dimension_numbers<[1], [0], [0], [1], [0, 0, 1, 1], [], []>} : vector<8x32xf32>, vector<32x8xf32>, vector<8x8xf32> -> vector<8x8xf32>
    %c0_37 = arith.constant 0 : index
    %c1_38 = arith.constant 1 : index
    %c0_39 = arith.constant 0 : index
    %c0_40 = arith.constant 0 : index
    %35 = vector.load %arg8[%c0_37, %c1_38, %c0_39, %c0_40] : memref<1x4x1x8xf32, #tpu.memory_space<vmem>>, vector<1x1x1x8xf32>
    %36 = vector.shape_cast %35 : vector<1x1x1x8xf32> to vector<1x8xf32>
    %37 = vector.broadcast %36 : vector<1x8xf32> to vector<8x8xf32>
    %38 = arith.addf %34, %37 : vector<8x8xf32>
    %c0_41 = arith.constant 0 : index
    %c1_42 = arith.constant 1 : index
    %c0_43 = arith.constant 0 : index
    %c0_44 = arith.constant 0 : index
    %39 = vector.load %arg9[%c0_41, %c1_42, %c0_43, %c0_44] : memref<1x4x32x8xf32, #tpu.memory_space<vmem>>, vector<1x1x32x8xf32>
    %40 = vector.shape_cast %39 : vector<1x1x32x8xf32> to vector<32x8xf32>
    %cst_45 = arith.constant dense<0.000000e+00> : vector<8x8xf32>
    %41 = tpu.matmul %3, %40, %cst_45 {dimension_numbers = #tpu.dot_dimension_numbers<[1], [0], [0], [1], [0, 0, 1, 1], [], []>} : vector<8x32xf32>, vector<32x8xf32>, vector<8x8xf32> -> vector<8x8xf32>
    %c0_46 = arith.constant 0 : index
    %c1_47 = arith.constant 1 : index
    %c0_48 = arith.constant 0 : index
    %c0_49 = arith.constant 0 : index
    %42 = vector.load %arg10[%c0_46, %c1_47, %c0_48, %c0_49] : memref<1x4x1x8xf32, #tpu.memory_space<vmem>>, vector<1x1x1x8xf32>
    %43 = vector.shape_cast %42 : vector<1x1x1x8xf32> to vector<1x8xf32>
    %44 = vector.broadcast %43 : vector<1x8xf32> to vector<8x8xf32>
    %45 = arith.addf %41, %44 : vector<8x8xf32>
    %c0_50 = arith.constant 0 : index
    %c1_51 = arith.constant 1 : index
    %c0_52 = arith.constant 0 : index
    %c0_53 = arith.constant 0 : index
    %46 = vector.load %arg11[%c0_50, %c1_51, %c0_52, %c0_53] : memref<1x4x32x8xf32, #tpu.memory_space<vmem>>, vector<1x1x32x8xf32>
    %47 = vector.shape_cast %46 : vector<1x1x32x8xf32> to vector<32x8xf32>
    %cst_54 = arith.constant dense<0.000000e+00> : vector<8x8xf32>
    %48 = tpu.matmul %3, %47, %cst_54 {dimension_numbers = #tpu.dot_dimension_numbers<[1], [0], [0], [1], [0, 0, 1, 1], [], []>} : vector<8x32xf32>, vector<32x8xf32>, vector<8x8xf32> -> vector<8x8xf32>
    %c0_55 = arith.constant 0 : index
    %c1_56 = arith.constant 1 : index
    %c0_57 = arith.constant 0 : index
    %c0_58 = arith.constant 0 : index
    %49 = vector.load %arg12[%c0_55, %c1_56, %c0_57, %c0_58] : memref<1x4x1x8xf32, #tpu.memory_space<vmem>>, vector<1x1x1x8xf32>
    %50 = vector.shape_cast %49 : vector<1x1x1x8xf32> to vector<1x8xf32>
    %51 = vector.broadcast %50 : vector<1x8xf32> to vector<8x8xf32>
    %52 = arith.addf %48, %51 : vector<8x8xf32>
    %c0_59 = arith.constant 0 : index
    %c2 = arith.constant 2 : index
    %c0_60 = arith.constant 0 : index
    %c0_61 = arith.constant 0 : index
    %53 = vector.load %arg7[%c0_59, %c2, %c0_60, %c0_61] : memref<1x4x32x8xf32, #tpu.memory_space<vmem>>, vector<1x1x32x8xf32>
    %54 = vector.shape_cast %53 : vector<1x1x32x8xf32> to vector<32x8xf32>
    %cst_62 = arith.constant dense<0.000000e+00> : vector<8x8xf32>
    %55 = tpu.matmul %3, %54, %cst_62 {dimension_numbers = #tpu.dot_dimension_numbers<[1], [0], [0], [1], [0, 0, 1, 1], [], []>} : vector<8x32xf32>, vector<32x8xf32>, vector<8x8xf32> -> vector<8x8xf32>
    %c0_63 = arith.constant 0 : index
    %c2_64 = arith.constant 2 : index
    %c0_65 = arith.constant 0 : index
    %c0_66 = arith.constant 0 : index
    %56 = vector.load %arg8[%c0_63, %c2_64, %c0_65, %c0_66] : memref<1x4x1x8xf32, #tpu.memory_space<vmem>>, vector<1x1x1x8xf32>
    %57 = vector.shape_cast %56 : vector<1x1x1x8xf32> to vector<1x8xf32>
    %58 = vector.broadcast %57 : vector<1x8xf32> to vector<8x8xf32>
    %59 = arith.addf %55, %58 : vector<8x8xf32>
    %c0_67 = arith.constant 0 : index
    %c2_68 = arith.constant 2 : index
    %c0_69 = arith.constant 0 : index
    %c0_70 = arith.constant 0 : index
    %60 = vector.load %arg9[%c0_67, %c2_68, %c0_69, %c0_70] : memref<1x4x32x8xf32, #tpu.memory_space<vmem>>, vector<1x1x32x8xf32>
    %61 = vector.shape_cast %60 : vector<1x1x32x8xf32> to vector<32x8xf32>
    %cst_71 = arith.constant dense<0.000000e+00> : vector<8x8xf32>
    %62 = tpu.matmul %3, %61, %cst_71 {dimension_numbers = #tpu.dot_dimension_numbers<[1], [0], [0], [1], [0, 0, 1, 1], [], []>} : vector<8x32xf32>, vector<32x8xf32>, vector<8x8xf32> -> vector<8x8xf32>
    %c0_72 = arith.constant 0 : index
    %c2_73 = arith.constant 2 : index
    %c0_74 = arith.constant 0 : index
    %c0_75 = arith.constant 0 : index
    %63 = vector.load %arg10[%c0_72, %c2_73, %c0_74, %c0_75] : memref<1x4x1x8xf32, #tpu.memory_space<vmem>>, vector<1x1x1x8xf32>
    %64 = vector.shape_cast %63 : vector<1x1x1x8xf32> to vector<1x8xf32>
    %65 = vector.broadcast %64 : vector<1x8xf32> to vector<8x8xf32>
    %66 = arith.addf %62, %65 : vector<8x8xf32>
    %c0_76 = arith.constant 0 : index
    %c2_77 = arith.constant 2 : index
    %c0_78 = arith.constant 0 : index
    %c0_79 = arith.constant 0 : index
    %67 = vector.load %arg11[%c0_76, %c2_77, %c0_78, %c0_79] : memref<1x4x32x8xf32, #tpu.memory_space<vmem>>, vector<1x1x32x8xf32>
    %68 = vector.shape_cast %67 : vector<1x1x32x8xf32> to vector<32x8xf32>
    %cst_80 = arith.constant dense<0.000000e+00> : vector<8x8xf32>
    %69 = tpu.matmul %3, %68, %cst_80 {dimension_numbers = #tpu.dot_dimension_numbers<[1], [0], [0], [1], [0, 0, 1, 1], [], []>} : vector<8x32xf32>, vector<32x8xf32>, vector<8x8xf32> -> vector<8x8xf32>
    %c0_81 = arith.constant 0 : index
    %c2_82 = arith.constant 2 : index
    %c0_83 = arith.constant 0 : index
    %c0_84 = arith.constant 0 : index
    %70 = vector.load %arg12[%c0_81, %c2_82, %c0_83, %c0_84] : memref<1x4x1x8xf32, #tpu.memory_space<vmem>>, vector<1x1x1x8xf32>
    %71 = vector.shape_cast %70 : vector<1x1x1x8xf32> to vector<1x8xf32>
    %72 = vector.broadcast %71 : vector<1x8xf32> to vector<8x8xf32>
    %73 = arith.addf %69, %72 : vector<8x8xf32>
    %c0_85 = arith.constant 0 : index
    %c3 = arith.constant 3 : index
    %c0_86 = arith.constant 0 : index
    %c0_87 = arith.constant 0 : index
    %74 = vector.load %arg7[%c0_85, %c3, %c0_86, %c0_87] : memref<1x4x32x8xf32, #tpu.memory_space<vmem>>, vector<1x1x32x8xf32>
    %75 = vector.shape_cast %74 : vector<1x1x32x8xf32> to vector<32x8xf32>
    %cst_88 = arith.constant dense<0.000000e+00> : vector<8x8xf32>
    %76 = tpu.matmul %3, %75, %cst_88 {dimension_numbers = #tpu.dot_dimension_numbers<[1], [0], [0], [1], [0, 0, 1, 1], [], []>} : vector<8x32xf32>, vector<32x8xf32>, vector<8x8xf32> -> vector<8x8xf32>
    %c0_89 = arith.constant 0 : index
    %c3_90 = arith.constant 3 : index
    %c0_91 = arith.constant 0 : index
    %c0_92 = arith.constant 0 : index
    %77 = vector.load %arg8[%c0_89, %c3_90, %c0_91, %c0_92] : memref<1x4x1x8xf32, #tpu.memory_space<vmem>>, vector<1x1x1x8xf32>
    %78 = vector.shape_cast %77 : vector<1x1x1x8xf32> to vector<1x8xf32>
    %79 = vector.broadcast %78 : vector<1x8xf32> to vector<8x8xf32>
    %80 = arith.addf %76, %79 : vector<8x8xf32>
    %c0_93 = arith.constant 0 : index
    %c3_94 = arith.constant 3 : index
    %c0_95 = arith.constant 0 : index
    %c0_96 = arith.constant 0 : index
    %81 = vector.load %arg9[%c0_93, %c3_94, %c0_95, %c0_96] : memref<1x4x32x8xf32, #tpu.memory_space<vmem>>, vector<1x1x32x8xf32>
    %82 = vector.shape_cast %81 : vector<1x1x32x8xf32> to vector<32x8xf32>
    %cst_97 = arith.constant dense<0.000000e+00> : vector<8x8xf32>
    %83 = tpu.matmul %3, %82, %cst_97 {dimension_numbers = #tpu.dot_dimension_numbers<[1], [0], [0], [1], [0, 0, 1, 1], [], []>} : vector<8x32xf32>, vector<32x8xf32>, vector<8x8xf32> -> vector<8x8xf32>
    %c0_98 = arith.constant 0 : index
    %c3_99 = arith.constant 3 : index
    %c0_100 = arith.constant 0 : index
    %c0_101 = arith.constant 0 : index
    %84 = vector.load %arg10[%c0_98, %c3_99, %c0_100, %c0_101] : memref<1x4x1x8xf32, #tpu.memory_space<vmem>>, vector<1x1x1x8xf32>
    %85 = vector.shape_cast %84 : vector<1x1x1x8xf32> to vector<1x8xf32>
    %86 = vector.broadcast %85 : vector<1x8xf32> to vector<8x8xf32>
    %87 = arith.addf %83, %86 : vector<8x8xf32>
    %c0_102 = arith.constant 0 : index
    %c3_103 = arith.constant 3 : index
    %c0_104 = arith.constant 0 : index
    %c0_105 = arith.constant 0 : index
    %88 = vector.load %arg11[%c0_102, %c3_103, %c0_104, %c0_105] : memref<1x4x32x8xf32, #tpu.memory_space<vmem>>, vector<1x1x32x8xf32>
    %89 = vector.shape_cast %88 : vector<1x1x32x8xf32> to vector<32x8xf32>
    %cst_106 = arith.constant dense<0.000000e+00> : vector<8x8xf32>
    %90 = tpu.matmul %3, %89, %cst_106 {dimension_numbers = #tpu.dot_dimension_numbers<[1], [0], [0], [1], [0, 0, 1, 1], [], []>} : vector<8x32xf32>, vector<32x8xf32>, vector<8x8xf32> -> vector<8x8xf32>
    %c0_107 = arith.constant 0 : index
    %c3_108 = arith.constant 3 : index
    %c0_109 = arith.constant 0 : index
    %c0_110 = arith.constant 0 : index
    %91 = vector.load %arg12[%c0_107, %c3_108, %c0_109, %c0_110] : memref<1x4x1x8xf32, #tpu.memory_space<vmem>>, vector<1x1x1x8xf32>
    %92 = vector.shape_cast %91 : vector<1x1x1x8xf32> to vector<1x8xf32>
    %93 = vector.broadcast %92 : vector<1x8xf32> to vector<8x8xf32>
    %94 = arith.addf %90, %93 : vector<8x8xf32>
    %95 = vector.shape_cast %17 : vector<8x8xf32> to vector<1x8x8xf32>
    %96 = vector.shape_cast %38 : vector<8x8xf32> to vector<1x8x8xf32>
    %97 = vector.shape_cast %59 : vector<8x8xf32> to vector<1x8x8xf32>
    %98 = vector.shape_cast %80 : vector<8x8xf32> to vector<1x8x8xf32>
    %99 = tpu.concatenate %95, %96, %97, %98 in 0 : vector<1x8x8xf32>, vector<1x8x8xf32>, vector<1x8x8xf32>, vector<1x8x8xf32> -> vector<4x8x8xf32>
    %100 = vector.shape_cast %24 : vector<8x8xf32> to vector<1x8x8xf32>
    %101 = vector.shape_cast %45 : vector<8x8xf32> to vector<1x8x8xf32>
    %102 = vector.shape_cast %66 : vector<8x8xf32> to vector<1x8x8xf32>
    %103 = vector.shape_cast %87 : vector<8x8xf32> to vector<1x8x8xf32>
    %104 = tpu.concatenate %100, %101, %102, %103 in 0 : vector<1x8x8xf32>, vector<1x8x8xf32>, vector<1x8x8xf32>, vector<1x8x8xf32> -> vector<4x8x8xf32>
    %105 = vector.shape_cast %31 : vector<8x8xf32> to vector<1x8x8xf32>
    %106 = vector.shape_cast %52 : vector<8x8xf32> to vector<1x8x8xf32>
    %107 = vector.shape_cast %73 : vector<8x8xf32> to vector<1x8x8xf32>
    %108 = vector.shape_cast %94 : vector<8x8xf32> to vector<1x8x8xf32>
    %109 = tpu.concatenate %105, %106, %107, %108 in 0 : vector<1x8x8xf32>, vector<1x8x8xf32>, vector<1x8x8xf32>, vector<1x8x8xf32> -> vector<4x8x8xf32>
    "tpu.trace_start"() <{level = 10 : i32, message = "hqd,hkd->hqk"}> : () -> ()
    %cst_111 = arith.constant dense<0.000000e+00> : vector<4x8x8xf32>
    %110 = tpu.matmul %99, %104, %cst_111 {dimension_numbers = #tpu.dot_dimension_numbers<[2], [2], [1], [1], [0, 0, 0, 1, 1, 1], [0], [0]>} : vector<4x8x8xf32>, vector<4x8x8xf32>, vector<4x8x8xf32> -> vector<4x8x8xf32>
    "tpu.trace_stop"() : () -> ()
    %111 = vector.shape_cast %10 : vector<1x8xf32> to vector<1x1x8xf32>
    %112 = vector.broadcast %111 : vector<1x1x8xf32> to vector<4x8x8xf32>
    %113 = arith.addf %110, %112 : vector<4x8x8xf32>
    %cst_112 = arith.constant dense<0xFF800000> : vector<4x8xf32>
    %114 = vector.multi_reduction <maximumf>, %113, %cst_112 [2] : vector<4x8x8xf32> to vector<4x8xf32>
    %115 = vector.shape_cast %114 : vector<4x8xf32> to vector<4x8x1xf32>
    %116 = vector.broadcast %115 : vector<4x8x1xf32> to vector<4x8x8xf32>
    %117 = arith.subf %113, %116 : vector<4x8x8xf32>
    %118 = math.exp %117 : vector<4x8x8xf32>
    %cst_113 = arith.constant dense<0.000000e+00> : vector<4x8xf32>
    %119 = vector.multi_reduction <add>, %118, %cst_113 [2] : vector<4x8x8xf32> to vector<4x8xf32>
    %120 = vector.shape_cast %119 : vector<4x8xf32> to vector<4x8x1xf32>
    %121 = tpu.reciprocal %120 {approx = true} : vector<4x8x1xf32> -> vector<4x8x1xf32>
    %122 = vector.broadcast %121 : vector<4x8x1xf32> to vector<4x8x8xf32>
    %123 = arith.mulf %118, %122 : vector<4x8x8xf32>
    "tpu.trace_start"() <{level = 10 : i32, message = "hqk,hkd->hqd"}> : () -> ()
    %cst_114 = arith.constant dense<0.000000e+00> : vector<4x8x8xf32>
    %124 = tpu.matmul %123, %109, %cst_114 {dimension_numbers = #tpu.dot_dimension_numbers<[2], [1], [1], [2], [0, 0, 0, 1, 1, 2], [0], [0]>} : vector<4x8x8xf32>, vector<4x8x8xf32>, vector<4x8x8xf32> -> vector<4x8x8xf32>
    "tpu.trace_stop"() : () -> ()
    %c0_115 = arith.constant 0 : index
    %c0_116 = arith.constant 0 : index
    %c0_117 = arith.constant 0 : index
    %125 = vector.load %arg14[%c0_115, %c0_116, %c0_117] : memref<1x1x32xf32, #tpu.memory_space<vmem>>, vector<1x1x32xf32>
    %126 = vector.shape_cast %125 : vector<1x1x32xf32> to vector<1x32xf32>
    %127 = vector.extract_strided_slice %124 {offsets = [0, 0, 0], sizes = [1, 8, 8], strides = [1, 1, 1]} : vector<4x8x8xf32> to vector<1x8x8xf32>
    %128 = vector.shape_cast %127 : vector<1x8x8xf32> to vector<8x8xf32>
    %c0_118 = arith.constant 0 : index
    %c0_119 = arith.constant 0 : index
    %c0_120 = arith.constant 0 : index
    %c0_121 = arith.constant 0 : index
    %129 = vector.load %arg13[%c0_118, %c0_119, %c0_120, %c0_121] : memref<1x4x8x32xf32, #tpu.memory_space<vmem>>, vector<1x1x8x32xf32>
    %130 = vector.shape_cast %129 : vector<1x1x8x32xf32> to vector<8x32xf32>
    %cst_122 = arith.constant dense<0.000000e+00> : vector<8x32xf32>
    %131 = tpu.matmul %128, %130, %cst_122 {dimension_numbers = #tpu.dot_dimension_numbers<[1], [0], [0], [1], [0, 0, 1, 1], [], []>} : vector<8x8xf32>, vector<8x32xf32>, vector<8x32xf32> -> vector<8x32xf32>
    %132 = vector.broadcast %126 : vector<1x32xf32> to vector<8x32xf32>
    %133 = arith.addf %132, %131 : vector<8x32xf32>
    %134 = vector.extract_strided_slice %124 {offsets = [1, 0, 0], sizes = [1, 8, 8], strides = [1, 1, 1]} : vector<4x8x8xf32> to vector<1x8x8xf32>
    %135 = vector.shape_cast %134 : vector<1x8x8xf32> to vector<8x8xf32>
    %c0_123 = arith.constant 0 : index
    %c1_124 = arith.constant 1 : index
    %c0_125 = arith.constant 0 : index
    %c0_126 = arith.constant 0 : index
    %136 = vector.load %arg13[%c0_123, %c1_124, %c0_125, %c0_126] : memref<1x4x8x32xf32, #tpu.memory_space<vmem>>, vector<1x1x8x32xf32>
    %137 = vector.shape_cast %136 : vector<1x1x8x32xf32> to vector<8x32xf32>
    %cst_127 = arith.constant dense<0.000000e+00> : vector<8x32xf32>
    %138 = tpu.matmul %135, %137, %cst_127 {dimension_numbers = #tpu.dot_dimension_numbers<[1], [0], [0], [1], [0, 0, 1, 1], [], []>} : vector<8x8xf32>, vector<8x32xf32>, vector<8x32xf32> -> vector<8x32xf32>
    %139 = arith.addf %133, %138 : vector<8x32xf32>
    %140 = vector.extract_strided_slice %124 {offsets = [2, 0, 0], sizes = [1, 8, 8], strides = [1, 1, 1]} : vector<4x8x8xf32> to vector<1x8x8xf32>
    %141 = vector.shape_cast %140 : vector<1x8x8xf32> to vector<8x8xf32>
    %c0_128 = arith.constant 0 : index
    %c2_129 = arith.constant 2 : index
    %c0_130 = arith.constant 0 : index
    %c0_131 = arith.constant 0 : index
    %142 = vector.load %arg13[%c0_128, %c2_129, %c0_130, %c0_131] : memref<1x4x8x32xf32, #tpu.memory_space<vmem>>, vector<1x1x8x32xf32>
    %143 = vector.shape_cast %142 : vector<1x1x8x32xf32> to vector<8x32xf32>
    %cst_132 = arith.constant dense<0.000000e+00> : vector<8x32xf32>
    %144 = tpu.matmul %141, %143, %cst_132 {dimension_numbers = #tpu.dot_dimension_numbers<[1], [0], [0], [1], [0, 0, 1, 1], [], []>} : vector<8x8xf32>, vector<8x32xf32>, vector<8x32xf32> -> vector<8x32xf32>
    %145 = arith.addf %139, %144 : vector<8x32xf32>
    %146 = vector.extract_strided_slice %124 {offsets = [3, 0, 0], sizes = [1, 8, 8], strides = [1, 1, 1]} : vector<4x8x8xf32> to vector<1x8x8xf32>
    %147 = vector.shape_cast %146 : vector<1x8x8xf32> to vector<8x8xf32>
    %c0_133 = arith.constant 0 : index
    %c3_134 = arith.constant 3 : index
    %c0_135 = arith.constant 0 : index
    %c0_136 = arith.constant 0 : index
    %148 = vector.load %arg13[%c0_133, %c3_134, %c0_135, %c0_136] : memref<1x4x8x32xf32, #tpu.memory_space<vmem>>, vector<1x1x8x32xf32>
    %149 = vector.shape_cast %148 : vector<1x1x8x32xf32> to vector<8x32xf32>
    %cst_137 = arith.constant dense<0.000000e+00> : vector<8x32xf32>
    %150 = tpu.matmul %147, %149, %cst_137 {dimension_numbers = #tpu.dot_dimension_numbers<[1], [0], [0], [1], [0, 0, 1, 1], [], []>} : vector<8x8xf32>, vector<8x32xf32>, vector<8x32xf32> -> vector<8x32xf32>
    %151 = arith.addf %145, %150 : vector<8x32xf32>
    %152 = arith.addf %151, %3 : vector<8x32xf32>
    %c0_138 = arith.constant 0 : index
    %c0_139 = arith.constant 0 : index
    %c0_140 = arith.constant 0 : index
    %153 = vector.load %arg15[%c0_138, %c0_139, %c0_140] : memref<1x1x32xf32, #tpu.memory_space<vmem>>, vector<1x1x32xf32>
    %154 = vector.shape_cast %153 : vector<1x1x32xf32> to vector<1x32xf32>
    %c0_141 = arith.constant 0 : index
    %c0_142 = arith.constant 0 : index
    %c0_143 = arith.constant 0 : index
    %155 = vector.load %arg16[%c0_141, %c0_142, %c0_143] : memref<1x1x32xf32, #tpu.memory_space<vmem>>, vector<1x1x32xf32>
    %156 = vector.shape_cast %155 : vector<1x1x32xf32> to vector<1x32xf32>
    %cst_144 = arith.constant dense<0.000000e+00> : vector<8xf32>
    %157 = vector.multi_reduction <add>, %152, %cst_144 [1] : vector<8x32xf32> to vector<8xf32>
    %158 = vector.shape_cast %157 : vector<8xf32> to vector<8x1xf32>
    %cst_145 = arith.constant 3.200000e+01 : f32
    %159 = vector.broadcast %cst_145 : f32 to vector<8x1xf32>
    %160 = arith.divf %158, %159 : vector<8x1xf32>
    %161 = vector.broadcast %160 : vector<8x1xf32> to vector<8x32xf32>
    %162 = arith.subf %152, %161 : vector<8x32xf32>
    %163 = arith.mulf %162, %162 : vector<8x32xf32>
    %cst_146 = arith.constant dense<0.000000e+00> : vector<8xf32>
    %164 = vector.multi_reduction <add>, %163, %cst_146 [1] : vector<8x32xf32> to vector<8xf32>
    %165 = vector.shape_cast %164 : vector<8xf32> to vector<8x1xf32>
    %cst_147 = arith.constant 3.200000e+01 : f32
    %166 = vector.broadcast %cst_147 : f32 to vector<8x1xf32>
    %167 = arith.divf %165, %166 : vector<8x1xf32>
    %cst_148 = arith.constant 9.99999996E-13 : f32
    %168 = vector.broadcast %cst_148 : f32 to vector<8x1xf32>
    %169 = arith.addf %167, %168 : vector<8x1xf32>
    %170 = math.rsqrt %169 : vector<8x1xf32>
    %171 = vector.broadcast %170 : vector<8x1xf32> to vector<8x32xf32>
    %172 = arith.mulf %162, %171 : vector<8x32xf32>
    %173 = vector.broadcast %154 : vector<1x32xf32> to vector<8x32xf32>
    %174 = arith.mulf %172, %173 : vector<8x32xf32>
    %175 = vector.broadcast %156 : vector<1x32xf32> to vector<8x32xf32>
    %176 = arith.addf %174, %175 : vector<8x32xf32>
    %c0_149 = arith.constant 0 : index
    %c0_150 = arith.constant 0 : index
    %c0_151 = arith.constant 0 : index
    %177 = vector.load %arg17[%c0_149, %c0_150, %c0_151] : memref<1x32x64xf32, #tpu.memory_space<vmem>>, vector<1x32x64xf32>
    %178 = vector.shape_cast %177 : vector<1x32x64xf32> to vector<32x64xf32>
    %cst_152 = arith.constant dense<0.000000e+00> : vector<8x64xf32>
    %179 = tpu.matmul %176, %178, %cst_152 {dimension_numbers = #tpu.dot_dimension_numbers<[1], [0], [0], [1], [0, 0, 1, 1], [], []>} : vector<8x32xf32>, vector<32x64xf32>, vector<8x64xf32> -> vector<8x64xf32>
    %c0_153 = arith.constant 0 : index
    %c0_154 = arith.constant 0 : index
    %c0_155 = arith.constant 0 : index
    %180 = vector.load %arg18[%c0_153, %c0_154, %c0_155] : memref<1x1x64xf32, #tpu.memory_space<vmem>>, vector<1x1x64xf32>
    %181 = vector.shape_cast %180 : vector<1x1x64xf32> to vector<1x64xf32>
    %182 = vector.broadcast %181 : vector<1x64xf32> to vector<8x64xf32>
    %183 = arith.addf %179, %182 : vector<8x64xf32>
    %cst_156 = arith.constant 5.000000e-01 : f32
    %184 = vector.broadcast %cst_156 : f32 to vector<8x64xf32>
    %185 = arith.mulf %184, %183 : vector<8x64xf32>
    %cst_157 = arith.constant 0.707106769 : f32
    %186 = vector.broadcast %cst_157 : f32 to vector<8x64xf32>
    %187 = arith.mulf %183, %186 : vector<8x64xf32>
    %188 = math.erf %187 : vector<8x64xf32>
    %cst_158 = arith.constant 1.000000e+00 : f32
    %189 = vector.broadcast %cst_158 : f32 to vector<8x64xf32>
    %190 = arith.addf %189, %188 : vector<8x64xf32>
    %191 = arith.mulf %185, %190 : vector<8x64xf32>
    %c0_159 = arith.constant 0 : index
    %c0_160 = arith.constant 0 : index
    %c0_161 = arith.constant 0 : index
    %192 = vector.load %arg19[%c0_159, %c0_160, %c0_161] : memref<1x64x32xf32, #tpu.memory_space<vmem>>, vector<1x64x32xf32>
    %193 = vector.shape_cast %192 : vector<1x64x32xf32> to vector<64x32xf32>
    %cst_162 = arith.constant dense<0.000000e+00> : vector<8x32xf32>
    %194 = tpu.matmul %191, %193, %cst_162 {dimension_numbers = #tpu.dot_dimension_numbers<[1], [0], [0], [1], [0, 0, 1, 1], [], []>} : vector<8x64xf32>, vector<64x32xf32>, vector<8x32xf32> -> vector<8x32xf32>
    %c0_163 = arith.constant 0 : index
    %c0_164 = arith.constant 0 : index
    %c0_165 = arith.constant 0 : index
    %195 = vector.load %arg20[%c0_163, %c0_164, %c0_165] : memref<1x1x32xf32, #tpu.memory_space<vmem>>, vector<1x1x32xf32>
    %196 = vector.shape_cast %195 : vector<1x1x32xf32> to vector<1x32xf32>
    %197 = vector.broadcast %196 : vector<1x32xf32> to vector<8x32xf32>
    %198 = arith.addf %194, %197 : vector<8x32xf32>
    %199 = arith.addf %198, %176 : vector<8x32xf32>
    %c0_166 = arith.constant 0 : index
    %c0_167 = arith.constant 0 : index
    %c0_168 = arith.constant 0 : index
    %200 = vector.load %arg21[%c0_166, %c0_167, %c0_168] : memref<1x1x32xf32, #tpu.memory_space<vmem>>, vector<1x1x32xf32>
    %201 = vector.shape_cast %200 : vector<1x1x32xf32> to vector<1x32xf32>
    %c0_169 = arith.constant 0 : index
    %c0_170 = arith.constant 0 : index
    %c0_171 = arith.constant 0 : index
    %202 = vector.load %arg22[%c0_169, %c0_170, %c0_171] : memref<1x1x32xf32, #tpu.memory_space<vmem>>, vector<1x1x32xf32>
    %203 = vector.shape_cast %202 : vector<1x1x32xf32> to vector<1x32xf32>
    %cst_172 = arith.constant dense<0.000000e+00> : vector<8xf32>
    %204 = vector.multi_reduction <add>, %199, %cst_172 [1] : vector<8x32xf32> to vector<8xf32>
    %205 = vector.shape_cast %204 : vector<8xf32> to vector<8x1xf32>
    %cst_173 = arith.constant 3.200000e+01 : f32
    %206 = vector.broadcast %cst_173 : f32 to vector<8x1xf32>
    %207 = arith.divf %205, %206 : vector<8x1xf32>
    %208 = vector.broadcast %207 : vector<8x1xf32> to vector<8x32xf32>
    %209 = arith.subf %199, %208 : vector<8x32xf32>
    %210 = arith.mulf %209, %209 : vector<8x32xf32>
    %cst_174 = arith.constant dense<0.000000e+00> : vector<8xf32>
    %211 = vector.multi_reduction <add>, %210, %cst_174 [1] : vector<8x32xf32> to vector<8xf32>
    %212 = vector.shape_cast %211 : vector<8xf32> to vector<8x1xf32>
    %cst_175 = arith.constant 3.200000e+01 : f32
    %213 = vector.broadcast %cst_175 : f32 to vector<8x1xf32>
    %214 = arith.divf %212, %213 : vector<8x1xf32>
    %cst_176 = arith.constant 9.99999996E-13 : f32
    %215 = vector.broadcast %cst_176 : f32 to vector<8x1xf32>
    %216 = arith.addf %214, %215 : vector<8x1xf32>
    %217 = math.rsqrt %216 : vector<8x1xf32>
    %218 = vector.broadcast %217 : vector<8x1xf32> to vector<8x32xf32>
    %219 = arith.mulf %209, %218 : vector<8x32xf32>
    %220 = vector.broadcast %201 : vector<1x32xf32> to vector<8x32xf32>
    %221 = arith.mulf %219, %220 : vector<8x32xf32>
    %222 = vector.broadcast %203 : vector<1x32xf32> to vector<8x32xf32>
    %223 = arith.addf %221, %222 : vector<8x32xf32>
    %c0_177 = arith.constant 0 : index
    %c0_178 = arith.constant 0 : index
    %224 = vector.load %arg28[%c0_177, %c0_178] : memref<8x32xf32, #tpu.memory_space<vmem>>, vector<8x32xf32>
    tpu.vector_store %arg28[%c0_177, %c0_178], %223 {strides = array<i32>} : memref<8x32xf32, #tpu.memory_space<vmem>>, vector<8x32xf32>,
    %c1_i32 = arith.constant 1 : i32
    %225 = arith.cmpi eq, %arg1, %c1_i32 : i32
    %226 = arith.extui %225 : i1 to i32
    %c0_i32_179 = arith.constant 0 : i32
    %227 = arith.cmpi ne, %226, %c0_i32_179 : i32
    scf.if %227 {
      %228 = vector.extract_strided_slice %223 {offsets = [0, 0], sizes = [1, 32], strides = [1, 1]} : vector<8x32xf32> to vector<1x32xf32>
      %c0_180 = arith.constant 0 : index
      %c0_181 = arith.constant 0 : index
      %229 = vector.load %arg23[%c0_180, %c0_181] : memref<32x32xf32, #tpu.memory_space<vmem>>, vector<32x32xf32>
      %cst_182 = arith.constant dense<0.000000e+00> : vector<1x32xf32>
      %230 = tpu.matmul %228, %229, %cst_182 {dimension_numbers = #tpu.dot_dimension_numbers<[1], [0], [0], [1], [0, 0, 1, 1], [], []>} : vector<1x32xf32>, vector<32x32xf32>, vector<1x32xf32> -> vector<1x32xf32>
      %c0_183 = arith.constant 0 : index
      %c0_184 = arith.constant 0 : index
      %231 = vector.load %arg24[%c0_183, %c0_184] : memref<1x32xf32, #tpu.memory_space<vmem>>, vector<1x32xf32>
      %232 = arith.addf %230, %231 : vector<1x32xf32>
      %cst_185 = arith.constant 0.000000e+00 : f32
      %233 = vector.broadcast %cst_185 : f32 to vector<1x32xf32>
      %234 = arith.maximumf %232, %233 : vector<1x32xf32>
      %c0_186 = arith.constant 0 : index
      %c0_187 = arith.constant 0 : index
      %235 = vector.load %arg25[%c0_186, %c0_187] : memref<32x3xf32, #tpu.memory_space<vmem>>, vector<32x3xf32>
      %cst_188 = arith.constant dense<0.000000e+00> : vector<1x3xf32>
      %236 = tpu.matmul %234, %235, %cst_188 {dimension_numbers = #tpu.dot_dimension_numbers<[1], [0], [0], [1], [0, 0, 1, 1], [], []>} : vector<1x32xf32>, vector<32x3xf32>, vector<1x3xf32> -> vector<1x3xf32>
      %c0_189 = arith.constant 0 : index
      %c0_190 = arith.constant 0 : index
      %237 = vector.load %arg26[%c0_189, %c0_190] : memref<1x3xf32, #tpu.memory_space<vmem>>, vector<1x3xf32>
      %238 = arith.addf %236, %237 : vector<1x3xf32>
      %c0_191 = arith.constant 0 : index
      %c0_192 = arith.constant 0 : index
      %c0_193 = arith.constant 0 : index
      %239 = vector.load %arg27[%c0_191, %c0_192, %c0_193] : memref<1x1x3xf32, #tpu.memory_space<vmem>>, vector<1x1x3xf32>
      %240 = vector.shape_cast %239 : vector<1x1x3xf32> to vector<1x3xf32>
      %241 = vector.shape_cast %238 : vector<1x3xf32> to vector<1x1x3xf32>
      tpu.vector_store %arg27[%c0_191, %c0_192, %c0_193], %241 {strides = array<i32>} : memref<1x1x3xf32, #tpu.memory_space<vmem>>, vector<1x1x3xf32>,
    } else {
    }
    return
  }
  func.func @transform_0(%arg0: i32, %arg1: i32) -> (i32, i32) {
    %c0_i32 = arith.constant 0 : i32
    %c0_i32_0 = arith.constant 0 : i32
    return %arg0, %c0_i32 : i32, i32
  }
  func.func @transform_1(%arg0: i32, %arg1: i32) -> (i32, i32) {
    %c0_i32 = arith.constant 0 : i32
    %c0_i32_0 = arith.constant 0 : i32
    %c0_i32_1 = arith.constant 0 : i32
    return %c0_i32, %c0_i32_0 : i32, i32
  }
  func.func @transform_2(%arg0: i32, %arg1: i32) -> (i32, i32, i32) {
    %c0_i32 = arith.constant 0 : i32
    %c0_i32_0 = arith.constant 0 : i32
    %c0_i32_1 = arith.constant 0 : i32
    return %arg0, %c0_i32, %c0_i32_0 : i32, i32, i32
  }
  func.func @transform_3(%arg0: i32, %arg1: i32) -> (i32, i32) {
    %c0_i32 = arith.constant 0 : i32
    %c0_i32_0 = arith.constant 0 : i32
    %c0_i32_1 = arith.constant 0 : i32
    return %c0_i32, %c0_i32_0 : i32, i32
  }
  func.func @transform_4(%arg0: i32, %arg1: i32) -> (i32, i32) {
    %c0_i32 = arith.constant 0 : i32
    %c0_i32_0 = arith.constant 0 : i32
    %c0_i32_1 = arith.constant 0 : i32
    return %c0_i32, %c0_i32_0 : i32, i32
  }
  func.func @transform_5(%arg0: i32, %arg1: i32) -> (i32, i32, i32, i32) {
    %c0_i32 = arith.constant 0 : i32
    %c0_i32_0 = arith.constant 0 : i32
    %c0_i32_1 = arith.constant 0 : i32
    %c0_i32_2 = arith.constant 0 : i32
    return %arg1, %c0_i32, %c0_i32_0, %c0_i32_1 : i32, i32, i32, i32
  }
  func.func @transform_6(%arg0: i32, %arg1: i32) -> (i32, i32, i32, i32) {
    %c0_i32 = arith.constant 0 : i32
    %c0_i32_0 = arith.constant 0 : i32
    %c0_i32_1 = arith.constant 0 : i32
    %c0_i32_2 = arith.constant 0 : i32
    return %arg1, %c0_i32, %c0_i32_0, %c0_i32_1 : i32, i32, i32, i32
  }
  func.func @transform_7(%arg0: i32, %arg1: i32) -> (i32, i32, i32, i32) {
    %c0_i32 = arith.constant 0 : i32
    %c0_i32_0 = arith.constant 0 : i32
    %c0_i32_1 = arith.constant 0 : i32
    %c0_i32_2 = arith.constant 0 : i32
    return %arg1, %c0_i32, %c0_i32_0, %c0_i32_1 : i32, i32, i32, i32
  }
  func.func @transform_8(%arg0: i32, %arg1: i32) -> (i32, i32, i32, i32) {
    %c0_i32 = arith.constant 0 : i32
    %c0_i32_0 = arith.constant 0 : i32
    %c0_i32_1 = arith.constant 0 : i32
    %c0_i32_2 = arith.constant 0 : i32
    return %arg1, %c0_i32, %c0_i32_0, %c0_i32_1 : i32, i32, i32, i32
  }
  func.func @transform_9(%arg0: i32, %arg1: i32) -> (i32, i32, i32, i32) {
    %c0_i32 = arith.constant 0 : i32
    %c0_i32_0 = arith.constant 0 : i32
    %c0_i32_1 = arith.constant 0 : i32
    %c0_i32_2 = arith.constant 0 : i32
    return %arg1, %c0_i32, %c0_i32_0, %c0_i32_1 : i32, i32, i32, i32
  }
  func.func @transform_10(%arg0: i32, %arg1: i32) -> (i32, i32, i32, i32) {
    %c0_i32 = arith.constant 0 : i32
    %c0_i32_0 = arith.constant 0 : i32
    %c0_i32_1 = arith.constant 0 : i32
    %c0_i32_2 = arith.constant 0 : i32
    return %arg1, %c0_i32, %c0_i32_0, %c0_i32_1 : i32, i32, i32, i32
  }
  func.func @transform_11(%arg0: i32, %arg1: i32) -> (i32, i32, i32, i32) {
    %c0_i32 = arith.constant 0 : i32
    %c0_i32_0 = arith.constant 0 : i32
    %c0_i32_1 = arith.constant 0 : i32
    %c0_i32_2 = arith.constant 0 : i32
    return %arg1, %c0_i32, %c0_i32_0, %c0_i32_1 : i32, i32, i32, i32
  }
  func.func @transform_12(%arg0: i32, %arg1: i32) -> (i32, i32, i32) {
    %c0_i32 = arith.constant 0 : i32
    %c0_i32_0 = arith.constant 0 : i32
    %c0_i32_1 = arith.constant 0 : i32
    return %arg1, %c0_i32, %c0_i32_0 : i32, i32, i32
  }
  func.func @transform_13(%arg0: i32, %arg1: i32) -> (i32, i32, i32) {
    %c0_i32 = arith.constant 0 : i32
    %c0_i32_0 = arith.constant 0 : i32
    %c0_i32_1 = arith.constant 0 : i32
    return %arg1, %c0_i32, %c0_i32_0 : i32, i32, i32
  }
  func.func @transform_14(%arg0: i32, %arg1: i32) -> (i32, i32, i32) {
    %c0_i32 = arith.constant 0 : i32
    %c0_i32_0 = arith.constant 0 : i32
    %c0_i32_1 = arith.constant 0 : i32
    return %arg1, %c0_i32, %c0_i32_0 : i32, i32, i32
  }
  func.func @transform_15(%arg0: i32, %arg1: i32) -> (i32, i32, i32) {
    %c0_i32 = arith.constant 0 : i32
    %c0_i32_0 = arith.constant 0 : i32
    %c0_i32_1 = arith.constant 0 : i32
    return %arg1, %c0_i32, %c0_i32_0 : i32, i32, i32
  }
  func.func @transform_16(%arg0: i32, %arg1: i32) -> (i32, i32, i32) {
    %c0_i32 = arith.constant 0 : i32
    %c0_i32_0 = arith.constant 0 : i32
    %c0_i32_1 = arith.constant 0 : i32
    return %arg1, %c0_i32, %c0_i32_0 : i32, i32, i32
  }
  func.func @transform_17(%arg0: i32, %arg1: i32) -> (i32, i32, i32) {
    %c0_i32 = arith.constant 0 : i32
    %c0_i32_0 = arith.constant 0 : i32
    %c0_i32_1 = arith.constant 0 : i32
    return %arg1, %c0_i32, %c0_i32_0 : i32, i32, i32
  }
  func.func @transform_18(%arg0: i32, %arg1: i32) -> (i32, i32, i32) {
    %c0_i32 = arith.constant 0 : i32
    %c0_i32_0 = arith.constant 0 : i32
    %c0_i32_1 = arith.constant 0 : i32
    return %arg1, %c0_i32, %c0_i32_0 : i32, i32, i32
  }
  func.func @transform_19(%arg0: i32, %arg1: i32) -> (i32, i32, i32) {
    %c0_i32 = arith.constant 0 : i32
    %c0_i32_0 = arith.constant 0 : i32
    %c0_i32_1 = arith.constant 0 : i32
    return %arg1, %c0_i32, %c0_i32_0 : i32, i32, i32
  }
  func.func @transform_20(%arg0: i32, %arg1: i32) -> (i32, i32, i32) {
    %c0_i32 = arith.constant 0 : i32
    %c0_i32_0 = arith.constant 0 : i32
    %c0_i32_1 = arith.constant 0 : i32
    return %arg1, %c0_i32, %c0_i32_0 : i32, i32, i32
  }
  func.func @transform_21(%arg0: i32, %arg1: i32) -> (i32, i32) {
    %c0_i32 = arith.constant 0 : i32
    %c0_i32_0 = arith.constant 0 : i32
    %c0_i32_1 = arith.constant 0 : i32
    return %c0_i32, %c0_i32_0 : i32, i32
  }
  func.func @transform_22(%arg0: i32, %arg1: i32) -> (i32, i32) {
    %c0_i32 = arith.constant 0 : i32
    %c0_i32_0 = arith.constant 0 : i32
    %c0_i32_1 = arith.constant 0 : i32
    return %c0_i32, %c0_i32_0 : i32, i32
  }
  func.func @transform_23(%arg0: i32, %arg1: i32) -> (i32, i32) {
    %c0_i32 = arith.constant 0 : i32
    %c0_i32_0 = arith.constant 0 : i32
    %c0_i32_1 = arith.constant 0 : i32
    return %c0_i32, %c0_i32_0 : i32, i32
  }
  func.func @transform_24(%arg0: i32, %arg1: i32) -> (i32, i32) {
    %c0_i32 = arith.constant 0 : i32
    %c0_i32_0 = arith.constant 0 : i32
    %c0_i32_1 = arith.constant 0 : i32
    return %c0_i32, %c0_i32_0 : i32, i32
  }
  func.func @transform_25(%arg0: i32, %arg1: i32) -> (i32, i32, i32) {
    %c0_i32 = arith.constant 0 : i32
    %c0_i32_0 = arith.constant 0 : i32
    %c0_i32_1 = arith.constant 0 : i32
    return %arg0, %c0_i32, %c0_i32_0 : i32, i32, i32
  }
}

</mosaic_0001>

<llo_original>
// kernel: bert_classifier_forward.1
$region0: #{bert_classifier_forward.1}
  #allocation0 [shape = 'u32[]', space=smem, size = 0x4, offset = 0x4, fixed_abs, tag = 'smem constant byte address 0x4 - core index']
  #allocation1 [shape = 'u32[144,128]{1,0:T(1,128)}', space=vmem, size = 0x12000, scoped, tag = 'internal scratch']
  #allocation2 [shape = 'f32[8,32]{1,0:T(8,128)}', space=vmem, size = 0x1000, scoped, tag = 'scratch operand']
  %s0 = inlined_call_operand.vmem [shape: f32[16,32], index: 0, kind: input, shape index: {}]
  %s1 = inlined_call_operand.vmem [shape: f32[8,32], index: 1, kind: input, shape index: {}]
  %s2 = inlined_call_operand.vmem [shape: s32[2,1,8], index: 2, kind: input, shape index: {}]
  %s3 = inlined_call_operand.vmem [shape: f32[1,32], index: 3, kind: input, shape index: {}]
  %s4 = inlined_call_operand.vmem [shape: f32[1,32], index: 4, kind: input, shape index: {}]
  %s5 = inlined_call_operand.vmem [shape: f32[2,4,32,8], index: 5, kind: input, shape index: {}]
  %s6 = inlined_call_operand.vmem [shape: f32[2,4,1,8], index: 6, kind: input, shape index: {}]
  %s7 = inlined_call_operand.vmem [shape: f32[2,4,32,8], index: 7, kind: input, shape index: {}]
  %s8 = inlined_call_operand.vmem [shape: f32[2,4,1,8], index: 8, kind: input, shape index: {}]
  %s9 = inlined_call_operand.vmem [shape: f32[2,4,32,8], index: 9, kind: input, shape index: {}]
  %s10 = inlined_call_operand.vmem [shape: f32[2,4,1,8], index: 10, kind: input, shape index: {}]
  %s11 = inlined_call_operand.vmem [shape: f32[2,4,8,32], index: 11, kind: input, shape index: {}]
  %s12 = inlined_call_operand.vmem [shape: f32[2,1,32], index: 12, kind: input, shape index: {}]
  %s13 = inlined_call_operand.vmem [shape: f32[2,1,32], index: 13, kind: input, shape index: {}]
  %s14 = inlined_call_operand.vmem [shape: f32[2,1,32], index: 14, kind: input, shape index: {}]
  %s15 = inlined_call_operand.vmem [shape: f32[2,32,64], index: 15, kind: input, shape index: {}]
  %s16 = inlined_call_operand.vmem [shape: f32[2,1,64], index: 16, kind: input, shape index: {}]
  %s17 = inlined_call_operand.vmem [shape: f32[2,64,32], index: 17, kind: input, shape index: {}]
  %s18 = inlined_call_operand.vmem [shape: f32[2,1,32], index: 18, kind: input, shape index: {}]
  %s19 = inlined_call_operand.vmem [shape: f32[2,1,32], index: 19, kind: input, shape index: {}]
  %s20 = inlined_call_operand.vmem [shape: f32[2,1,32], index: 20, kind: input, shape index: {}]
  %s21 = inlined_call_operand.vmem [shape: f32[32,32], index: 21, kind: input, shape index: {}]
  %s22 = inlined_call_operand.vmem [shape: f32[1,32], index: 22, kind: input, shape index: {}]
  %s23 = inlined_call_operand.vmem [shape: f32[32,3], index: 23, kind: input, shape index: {}]
  %s24 = inlined_call_operand.vmem [shape: f32[1,3], index: 24, kind: input, shape index: {}]
  %s25 = inlined_call_operand.hbm [shape: f32[2,1,3], index: 25, kind: output, shape index: {}]
  %s26 = sld [smem:[#allocation0]]
  $region141: #{bert_classifier_forward.1} parent=0
    _
  %s28 = ssub.s32 1, %s26
  %s29 = scalar_select 0, %s28, %s26
  $region1: #{bert_classifier_forward.1} parent=0
    #allocation3 [shape = 'u8[1024]{0}', space=vmem, size = 0x400, scoped, tag = 'output window, operand 0']
    #allocation4 [shape = 's32[2]{0}', space=sflag, size = 0x8, scoped, tag = 'scoped memory for bert_classifier_forward.1']
    %30 = vsyncpa [#allocation4], 0
    %s31 = scalar_lea.sflag [#allocation4], 1
    %32 = vsyncpa %s31, 0
    loop: start=0, step=1, limit=6
    $region2: #{bert_classifier_forward.1} parent=1 // loop_pre_header
      _
    $region3: #{bert_classifier_forward.1} parent=1 // loop_header
      %s34 = sphi 0, %s38
      %p35 = scmp.ge.s32.totalorder %s34, 6
      %s41 = sphi 0, %s53
      %s42 = sphi 0, %s49
      %s43 = sphi 0, %s41
      %s44 = sphi 0, %s42
      %s45 = sphi 0, %s43
      %s46 = sphi 0, %s44
      %s56 = sphi 0, %s58
      %s59 = sphi 0, %s56
      %s60 = sphi 0, %s59
      %s76 = sphi 0, %s60
      %s80 = sphi 0, %s80
      %s82 = sphi 0, %s80
      %s83 = sphi 0, %s82
      %s97 = sphi 0, %s83
      %s103 = sphi 0, %s105
      %s106 = sphi 0, %s103
      %s107 = sphi 0, %s106
      %s123 = sphi 0, %s107
      %s127 = sphi 0, %s127
      %s129 = sphi 0, %s127
      %s130 = sphi 0, %s129
      %s144 = sphi 0, %s130
      %s148 = sphi 0, %s148
      %s150 = sphi 0, %s148
      %s151 = sphi 0, %s150
      %s165 = sphi 0, %s151
      %s171 = sphi 0, %s173
      %s174 = sphi 0, %s171
      %s175 = sphi 0, %s174
      %s191 = sphi 0, %s175
      %s197 = sphi 0, %s199
      %s200 = sphi 0, %s197
      %s201 = sphi 0, %s200
      %s217 = sphi 0, %s201
      %s223 = sphi 0, %s225
      %s226 = sphi 0, %s223
      %s227 = sphi 0, %s226
      %s243 = sphi 0, %s227
      %s249 = sphi 0, %s251
      %s252 = sphi 0, %s249
      %s253 = sphi 0, %s252
      %s269 = sphi 0, %s253
      %s275 = sphi 0, %s277
      %s278 = sphi 0, %s275
      %s279 = sphi 0, %s278
      %s295 = sphi 0, %s279
      %s301 = sphi 0, %s303
      %s304 = sphi 0, %s301
      %s305 = sphi 0, %s304
      %s321 = sphi 0, %s305
      %s327 = sphi 0, %s329
      %s330 = sphi 0, %s327
      %s331 = sphi 0, %s330
      %s347 = sphi 0, %s331
      %s353 = sphi 0, %s355
      %s356 = sphi 0, %s353
      %s357 = sphi 0, %s356
      %s373 = sphi 0, %s357
      %s379 = sphi 0, %s381
      %s382 = sphi 0, %s379
      %s383 = sphi 0, %s382
      %s399 = sphi 0, %s383
      %s405 = sphi 0, %s407
      %s408 = sphi 0, %s405
      %s409 = sphi 0, %s408
      %s425 = sphi 0, %s409
      %s431 = sphi 0, %s433
      %s434 = sphi 0, %s431
      %s435 = sphi 0, %s434
      %s451 = sphi 0, %s435
      %s457 = sphi 0, %s459
      %s460 = sphi 0, %s457
      %s461 = sphi 0, %s460
      %s477 = sphi 0, %s461
      %s483 = sphi 0, %s485
      %s486 = sphi 0, %s483
      %s487 = sphi 0, %s486
      %s503 = sphi 0, %s487
      %s509 = sphi 0, %s511
      %s512 = sphi 0, %s509
      %s513 = sphi 0, %s512
      %s529 = sphi 0, %s513
      %s535 = sphi 0, %s537
      %s538 = sphi 0, %s535
      %s539 = sphi 0, %s538
      %s555 = sphi 0, %s539
      %s561 = sphi 0, %s563
      %s564 = sphi 0, %s561
      %s565 = sphi 0, %s564
      %s581 = sphi 0, %s565
      %s585 = sphi 0, %s585
      %s587 = sphi 0, %s585
      %s588 = sphi 0, %s587
      %s602 = sphi 0, %s588
      %s606 = sphi 0, %s606
      %s608 = sphi 0, %s606
      %s609 = sphi 0, %s608
      %s623 = sphi 0, %s609
      %s627 = sphi 0, %s627
      %s629 = sphi 0, %s627
      %s630 = sphi 0, %s629
      %s644 = sphi 0, %s630
      %s648 = sphi 0, %s648
      %s650 = sphi 0, %s648
      %s651 = sphi 0, %s650
      %s665 = sphi 0, %s651
      %s671 = sphi 0, %s673
      %s674 = sphi 0, %s671
      %s675 = sphi 0, %s674
      %s691 = sphi 0, %s675
    $region4: #{bert_classifier_forward.1} parent=1 // loop_header_branch
      %37 = sbr.rel (%p35) target = $region8
    $region5: #{bert_classifier_forward.1} parent=1 // loop_body
      %s39 = ssub.s32 %s34, 1
      %s40 = ssub.s32 %s34, 2
      %s47 = sadd.s32 1, %s42
      %p48 = scmp.ge.s32.totalorder %s47, 2
      %s49 = scalar_select %p48, 0, %s47
      %s50 = sadd.s32 1, %s41
      %s51 = scalar_select %p48, %s50, %s41
      %p52 = scmp.ge.s32.totalorder %s51, 2
      %s53 = scalar_select %p52, 0, %s51
      %s54 = ssub.s32 %s41, %s53
      %p55 = scmp.eq.s32.totalorder %s54, 0
      %s57 = sadd.s32 %s56, 1
      %s58 = scalar_select %p55, %s56, %s57
      %p61 = pneg %p55
      %p62 = scmp.eq.s32.totalorder %s34, 3
      %p63 = por %p61, %p62
      %p64 = scmp.ne.s32.totalorder %s56, %s59
      %p65 = scmp.eq.s32.totalorder %s34, 0
      %p66 = por %p64, %p65
      %p67 = scmp.ne.s32.totalorder %s56, %s59
      %p68 = scmp.eq.s32.totalorder %s39, 3
      %p69 = por %p67, %p68
      %p70 = scmp.ne.s32.totalorder %s59, %s60
      %p71 = scmp.eq.s32.totalorder %s39, 0
      %p72 = por %p70, %p71
      %p73 = scmp.ne.s32.totalorder %s59, %s60
      %p74 = scmp.eq.s32.totalorder %s40, 3
      %p75 = por %p73, %p74
      %p77 = scmp.ne.s32.totalorder %s60, %s76
      %p78 = scmp.eq.s32.totalorder %s40, 0
      %p79 = por %p77, %p78
      %s81 = sadd.s32 %s80, 1
      %p84 = scmp.eq.s32.totalorder %s34, 3
      %p85 = scmp.ne.s32.totalorder %s80, %s82
      %p86 = scmp.eq.s32.totalorder %s34, 0
      %p87 = por %p85, %p86
      %p88 = scmp.ne.s32.totalorder %s80, %s82
      %p89 = scmp.eq.s32.totalorder %s39, 3
      %p90 = por %p88, %p89
      %p91 = scmp.ne.s32.totalorder %s82, %s83
      %p92 = scmp.eq.s32.totalorder %s39, 0
      %p93 = por %p91, %p92
      %p94 = scmp.ne.s32.totalorder %s82, %s83
      %p95 = scmp.eq.s32.totalorder %s40, 3
      %p96 = por %p94, %p95
      %p98 = scmp.ne.s32.totalorder %s83, %s97
      %p99 = scmp.eq.s32.totalorder %s40, 0
      %p100 = por %p98, %p99
      %s101 = ssub.s32 %s41, %s53
      %p102 = scmp.eq.s32.totalorder %s101, 0
      %s104 = sadd.s32 %s103, 1
      %s105 = scalar_select %p102, %s103, %s104
      %p108 = pneg %p102
      %p109 = scmp.eq.s32.totalorder %s34, 3
      %p110 = por %p108, %p109
      %p111 = scmp.ne.s32.totalorder %s103, %s106
      %p112 = scmp.eq.s32.totalorder %s34, 0
      %p113 = por %p111, %p112
      %p114 = scmp.ne.s32.totalorder %s103, %s106
      %p115 = scmp.eq.s32.totalorder %s39, 3
      %p116 = por %p114, %p115
      %p117 = scmp.ne.s32.totalorder %s106, %s107
      %p118 = scmp.eq.s32.totalorder %s39, 0
      %p119 = por %p117, %p118
      %p120 = scmp.ne.s32.totalorder %s106, %s107
      %p121 = scmp.eq.s32.totalorder %s40, 3
      %p122 = por %p120, %p121
      %p124 = scmp.ne.s32.totalorder %s107, %s123
      %p125 = scmp.eq.s32.totalorder %s40, 0
      %p126 = por %p124, %p125
      %s128 = sadd.s32 %s127, 1
      %p131 = scmp.eq.s32.totalorder %s34, 3
      %p132 = scmp.ne.s32.totalorder %s127, %s129
      %p133 = scmp.eq.s32.totalorder %s34, 0
      %p134 = por %p132, %p133
      %p135 = scmp.ne.s32.totalorder %s127, %s129
      %p136 = scmp.eq.s32.totalorder %s39, 3
      %p137 = por %p135, %p136
      %p138 = scmp.ne.s32.totalorder %s129, %s130
      %p139 = scmp.eq.s32.totalorder %s39, 0
      %p140 = por %p138, %p139
      %p141 = scmp.ne.s32.totalorder %s129, %s130
      %p142 = scmp.eq.s32.totalorder %s40, 3
      %p143 = por %p141, %p142
      %p145 = scmp.ne.s32.totalorder %s130, %s144
      %p146 = scmp.eq.s32.totalorder %s40, 0
      %p147 = por %p145, %p146
      %s149 = sadd.s32 %s148, 1
      %p152 = scmp.eq.s32.totalorder %s34, 3
      %p153 = scmp.ne.s32.totalorder %s148, %s150
      %p154 = scmp.eq.s32.totalorder %s34, 0
      %p155 = por %p153, %p154
      %p156 = scmp.ne.s32.totalorder %s148, %s150
      %p157 = scmp.eq.s32.totalorder %s39, 3
      %p158 = por %p156, %p157
      %p159 = scmp.ne.s32.totalorder %s150, %s151
      %p160 = scmp.eq.s32.totalorder %s39, 0
      %p161 = por %p159, %p160
      %p162 = scmp.ne.s32.totalorder %s150, %s151
      %p163 = scmp.eq.s32.totalorder %s40, 3
      %p164 = por %p162, %p163
      %p166 = scmp.ne.s32.totalorder %s151, %s165
      %p167 = scmp.eq.s32.totalorder %s40, 0
      %p168 = por %p166, %p167
      %s169 = ssub.s32 %s42, %s49
      %p170 = scmp.eq.s32.totalorder %s169, 0
      %s172 = sadd.s32 %s171, 1
      %s173 = scalar_select %p170, %s171, %s172
      %p176 = pneg %p170
      %p177 = scmp.eq.s32.totalorder %s34, 3
      %p178 = por %p176, %p177
      %p179 = scmp.ne.s32.totalorder %s171, %s174
      %p180 = scmp.eq.s32.totalorder %s34, 0
      %p181 = por %p179, %p180
      %p182 = scmp.ne.s32.totalorder %s171, %s174
      %p183 = scmp.eq.s32.totalorder %s39, 3
      %p184 = por %p182, %p183
      %p185 = scmp.ne.s32.totalorder %s174, %s175
      %p186 = scmp.eq.s32.totalorder %s39, 0
      %p187 = por %p185, %p186
      %p188 = scmp.ne.s32.totalorder %s174, %s175
      %p189 = scmp.eq.s32.totalorder %s40, 3
      %p190 = por %p188, %p189
      %p192 = scmp.ne.s32.totalorder %s175, %s191
      %p193 = scmp.eq.s32.totalorder %s40, 0
      %p194 = por %p192, %p193
      %s195 = ssub.s32 %s42, %s49
      %p196 = scmp.eq.s32.totalorder %s195, 0
      %s198 = sadd.s32 %s197, 1
      %s199 = scalar_select %p196, %s197, %s198
      %p202 = pneg %p196
      %p203 = scmp.eq.s32.totalorder %s34, 3
      %p204 = por %p202, %p203
      %p205 = scmp.ne.s32.totalorder %s197, %s200
      %p206 = scmp.eq.s32.totalorder %s34, 0
      %p207 = por %p205, %p206
      %p208 = scmp.ne.s32.totalorder %s197, %s200
      %p209 = scmp.eq.s32.totalorder %s39, 3
      %p210 = por %p208, %p209
      %p211 = scmp.ne.s32.totalorder %s200, %s201
      %p212 = scmp.eq.s32.totalorder %s39, 0
      %p213 = por %p211, %p212
      %p214 = scmp.ne.s32.totalorder %s200, %s201
      %p215 = scmp.eq.s32.totalorder %s40, 3
      %p216 = por %p214, %p215
      %p218 = scmp.ne.s32.totalorder %s201, %s217
      %p219 = scmp.eq.s32.totalorder %s40, 0
      %p220 = por %p218, %p219
      %s221 = ssub.s32 %s42, %s49
      %p222 = scmp.eq.s32.totalorder %s221, 0
      %s224 = sadd.s32 %s223, 1
      %s225 = scalar_select %p222, %s223, %s224
      %p228 = pneg %p222
      %p229 = scmp.eq.s32.totalorder %s34, 3
      %p230 = por %p228, %p229
      %p231 = scmp.ne.s32.totalorder %s223, %s226
      %p232 = scmp.eq.s32.totalorder %s34, 0
      %p233 = por %p231, %p232
      %p234 = scmp.ne.s32.totalorder %s223, %s226
      %p235 = scmp.eq.s32.totalorder %s39, 3
      %p236 = por %p234, %p235
      %p237 = scmp.ne.s32.totalorder %s226, %s227
      %p238 = scmp.eq.s32.totalorder %s39, 0
      %p239 = por %p237, %p238
      %p240 = scmp.ne.s32.totalorder %s226, %s227
      %p241 = scmp.eq.s32.totalorder %s40, 3
      %p242 = por %p240, %p241
      %p244 = scmp.ne.s32.totalorder %s227, %s243
      %p245 = scmp.eq.s32.totalorder %s40, 0
      %p246 = por %p244, %p245
      %s247 = ssub.s32 %s42, %s49
      %p248 = scmp.eq.s32.totalorder %s247, 0
      %s250 = sadd.s32 %s249, 1
      %s251 = scalar_select %p248, %s249, %s250
      %p254 = pneg %p248
      %p255 = scmp.eq.s32.totalorder %s34, 3
      %p256 = por %p254, %p255
      %p257 = scmp.ne.s32.totalorder %s249, %s252
      %p258 = scmp.eq.s32.totalorder %s34, 0
      %p259 = por %p257, %p258
      %p260 = scmp.ne.s32.totalorder %s249, %s252
      %p261 = scmp.eq.s32.totalorder %s39, 3
      %p262 = por %p260, %p261
      %p263 = scmp.ne.s32.totalorder %s252, %s253
      %p264 = scmp.eq.s32.totalorder %s39, 0
      %p265 = por %p263, %p264
      %p266 = scmp.ne.s32.totalorder %s252, %s253
      %p267 = scmp.eq.s32.totalorder %s40, 3
      %p268 = por %p266, %p267
      %p270 = scmp.ne.s32.totalorder %s253, %s269
      %p271 = scmp.eq.s32.totalorder %s40, 0
      %p272 = por %p270, %p271
      %s273 = ssub.s32 %s42, %s49
      %p274 = scmp.eq.s32.totalorder %s273, 0
      %s276 = sadd.s32 %s275, 1
      %s277 = scalar_select %p274, %s275, %s276
      %p280 = pneg %p274
      %p281 = scmp.eq.s32.totalorder %s34, 3
      %p282 = por %p280, %p281
      %p283 = scmp.ne.s32.totalorder %s275, %s278
      %p284 = scmp.eq.s32.totalorder %s34, 0
      %p285 = por %p283, %p284
      %p286 = scmp.ne.s32.totalorder %s275, %s278
      %p287 = scmp.eq.s32.totalorder %s39, 3
      %p288 = por %p286, %p287
      %p289 = scmp.ne.s32.totalorder %s278, %s279
      %p290 = scmp.eq.s32.totalorder %s39, 0
      %p291 = por %p289, %p290
      %p292 = scmp.ne.s32.totalorder %s278, %s279
      %p293 = scmp.eq.s32.totalorder %s40, 3
      %p294 = por %p292, %p293
      %p296 = scmp.ne.s32.totalorder %s279, %s295
      %p297 = scmp.eq.s32.totalorder %s40, 0
      %p298 = por %p296, %p297
      %s299 = ssub.s32 %s42, %s49
      %p300 = scmp.eq.s32.totalorder %s299, 0
      %s302 = sadd.s32 %s301, 1
      %s303 = scalar_select %p300, %s301, %s302
      %p306 = pneg %p300
      %p307 = scmp.eq.s32.totalorder %s34, 3
      %p308 = por %p306, %p307
      %p309 = scmp.ne.s32.totalorder %s301, %s304
      %p310 = scmp.eq.s32.totalorder %s34, 0
      %p311 = por %p309, %p310
      %p312 = scmp.ne.s32.totalorder %s301, %s304
      %p313 = scmp.eq.s32.totalorder %s39, 3
      %p314 = por %p312, %p313
      %p315 = scmp.ne.s32.totalorder %s304, %s305
      %p316 = scmp.eq.s32.totalorder %s39, 0
      %p317 = por %p315, %p316
      %p318 = scmp.ne.s32.totalorder %s304, %s305
      %p319 = scmp.eq.s32.totalorder %s40, 3
      %p320 = por %p318, %p319
      %p322 = scmp.ne.s32.totalorder %s305, %s321
      %p323 = scmp.eq.s32.totalorder %s40, 0
      %p324 = por %p322, %p323
      %s325 = ssub.s32 %s42, %s49
      %p326 = scmp.eq.s32.totalorder %s325, 0
      %s328 = sadd.s32 %s327, 1
      %s329 = scalar_select %p326, %s327, %s328
      %p332 = pneg %p326
      %p333 = scmp.eq.s32.totalorder %s34, 3
      %p334 = por %p332, %p333
      %p335 = scmp.ne.s32.totalorder %s327, %s330
      %p336 = scmp.eq.s32.totalorder %s34, 0
      %p337 = por %p335, %p336
      %p338 = scmp.ne.s32.totalorder %s327, %s330
      %p339 = scmp.eq.s32.totalorder %s39, 3
      %p340 = por %p338, %p339
      %p341 = scmp.ne.s32.totalorder %s330, %s331
      %p342 = scmp.eq.s32.totalorder %s39, 0
      %p343 = por %p341, %p342
      %p344 = scmp.ne.s32.totalorder %s330, %s331
      %p345 = scmp.eq.s32.totalorder %s40, 3
      %p346 = por %p344, %p345
      %p348 = scmp.ne.s32.totalorder %s331, %s347
      %p349 = scmp.eq.s32.totalorder %s40, 0
      %p350 = por %p348, %p349
      %s351 = ssub.s32 %s42, %s49
      %p352 = scmp.eq.s32.totalorder %s351, 0
      %s354 = sadd.s32 %s353, 1
      %s355 = scalar_select %p352, %s353, %s354
      %p358 = pneg %p352
      %p359 = scmp.eq.s32.totalorder %s34, 3
      %p360 = por %p358, %p359
      %p361 = scmp.ne.s32.totalorder %s353, %s356
      %p362 = scmp.eq.s32.totalorder %s34, 0
      %p363 = por %p361, %p362
      %p364 = scmp.ne.s32.totalorder %s353, %s356
      %p365 = scmp.eq.s32.totalorder %s39, 3
      %p366 = por %p364, %p365
      %p367 = scmp.ne.s32.totalorder %s356, %s357
      %p368 = scmp.eq.s32.totalorder %s39, 0
      %p369 = por %p367, %p368
      %p370 = scmp.ne.s32.totalorder %s356, %s357
      %p371 = scmp.eq.s32.totalorder %s40, 3
      %p372 = por %p370, %p371
      %p374 = scmp.ne.s32.totalorder %s357, %s373
      %p375 = scmp.eq.s32.totalorder %s40, 0
      %p376 = por %p374, %p375
      %s377 = ssub.s32 %s42, %s49
      %p378 = scmp.eq.s32.totalorder %s377, 0
      %s380 = sadd.s32 %s379, 1
      %s381 = scalar_select %p378, %s379, %s380
      %p384 = pneg %p378
      %p385 = scmp.eq.s32.totalorder %s34, 3
      %p386 = por %p384, %p385
      %p387 = scmp.ne.s32.totalorder %s379, %s382
      %p388 = scmp.eq.s32.totalorder %s34, 0
      %p389 = por %p387, %p388
      %p390 = scmp.ne.s32.totalorder %s379, %s382
      %p391 = scmp.eq.s32.totalorder %s39, 3
      %p392 = por %p390, %p391
      %p393 = scmp.ne.s32.totalorder %s382, %s383
      %p394 = scmp.eq.s32.totalorder %s39, 0
      %p395 = por %p393, %p394
      %p396 = scmp.ne.s32.totalorder %s382, %s383
      %p397 = scmp.eq.s32.totalorder %s40, 3
      %p398 = por %p396, %p397
      %p400 = scmp.ne.s32.totalorder %s383, %s399
      %p401 = scmp.eq.s32.totalorder %s40, 0
      %p402 = por %p400, %p401
      %s403 = ssub.s32 %s42, %s49
      %p404 = scmp.eq.s32.totalorder %s403, 0
      %s406 = sadd.s32 %s405, 1
      %s407 = scalar_select %p404, %s405, %s406
      %p410 = pneg %p404
      %p411 = scmp.eq.s32.totalorder %s34, 3
      %p412 = por %p410, %p411
      %p413 = scmp.ne.s32.totalorder %s405, %s408
      %p414 = scmp.eq.s32.totalorder %s34, 0
      %p415 = por %p413, %p414
      %p416 = scmp.ne.s32.totalorder %s405, %s408
      %p417 = scmp.eq.s32.totalorder %s39, 3
      %p418 = por %p416, %p417
      %p419 = scmp.ne.s32.totalorder %s408, %s409
      %p420 = scmp.eq.s32.totalorder %s39, 0
      %p421 = por %p419, %p420
      %p422 = scmp.ne.s32.totalorder %s408, %s409
      %p423 = scmp.eq.s32.totalorder %s40, 3
      %p424 = por %p422, %p423
      %p426 = scmp.ne.s32.totalorder %s409, %s425
      %p427 = scmp.eq.s32.totalorder %s40, 0
      %p428 = por %p426, %p427
      %s429 = ssub.s32 %s42, %s49
      %p430 = scmp.eq.s32.totalorder %s429, 0
      %s432 = sadd.s32 %s431, 1
      %s433 = scalar_select %p430, %s431, %s432
      %p436 = pneg %p430
      %p437 = scmp.eq.s32.totalorder %s34, 3
      %p438 = por %p436, %p437
      %p439 = scmp.ne.s32.totalorder %s431, %s434
      %p440 = scmp.eq.s32.totalorder %s34, 0
      %p441 = por %p439, %p440
      %p442 = scmp.ne.s32.totalorder %s431, %s434
      %p443 = scmp.eq.s32.totalorder %s39, 3
      %p444 = por %p442, %p443
      %p445 = scmp.ne.s32.totalorder %s434, %s435
      %p446 = scmp.eq.s32.totalorder %s39, 0
      %p447 = por %p445, %p446
      %p448 = scmp.ne.s32.totalorder %s434, %s435
      %p449 = scmp.eq.s32.totalorder %s40, 3
      %p450 = por %p448, %p449
      %p452 = scmp.ne.s32.totalorder %s435, %s451
      %p453 = scmp.eq.s32.totalorder %s40, 0
      %p454 = por %p452, %p453
      %s455 = ssub.s32 %s42, %s49
      %p456 = scmp.eq.s32.totalorder %s455, 0
      %s458 = sadd.s32 %s457, 1
      %s459 = scalar_select %p456, %s457, %s458
      %p462 = pneg %p456
      %p463 = scmp.eq.s32.totalorder %s34, 3
      %p464 = por %p462, %p463
      %p465 = scmp.ne.s32.totalorder %s457, %s460
      %p466 = scmp.eq.s32.totalorder %s34, 0
      %p467 = por %p465, %p466
      %p468 = scmp.ne.s32.totalorder %s457, %s460
      %p469 = scmp.eq.s32.totalorder %s39, 3
      %p470 = por %p468, %p469
      %p471 = scmp.ne.s32.totalorder %s460, %s461
      %p472 = scmp.eq.s32.totalorder %s39, 0
      %p473 = por %p471, %p472
      %p474 = scmp.ne.s32.totalorder %s460, %s461
      %p475 = scmp.eq.s32.totalorder %s40, 3
      %p476 = por %p474, %p475
      %p478 = scmp.ne.s32.totalorder %s461, %s477
      %p479 = scmp.eq.s32.totalorder %s40, 0
      %p480 = por %p478, %p479
      %s481 = ssub.s32 %s42, %s49
      %p482 = scmp.eq.s32.totalorder %s481, 0
      %s484 = sadd.s32 %s483, 1
      %s485 = scalar_select %p482, %s483, %s484
      %p488 = pneg %p482
      %p489 = scmp.eq.s32.totalorder %s34, 3
      %p490 = por %p488, %p489
      %p491 = scmp.ne.s32.totalorder %s483, %s486
      %p492 = scmp.eq.s32.totalorder %s34, 0
      %p493 = por %p491, %p492
      %p494 = scmp.ne.s32.totalorder %s483, %s486
      %p495 = scmp.eq.s32.totalorder %s39, 3
      %p496 = por %p494, %p495
      %p497 = scmp.ne.s32.totalorder %s486, %s487
      %p498 = scmp.eq.s32.totalorder %s39, 0
      %p499 = por %p497, %p498
      %p500 = scmp.ne.s32.totalorder %s486, %s487
      %p501 = scmp.eq.s32.totalorder %s40, 3
      %p502 = por %p500, %p501
      %p504 = scmp.ne.s32.totalorder %s487, %s503
      %p505 = scmp.eq.s32.totalorder %s40, 0
      %p506 = por %p504, %p505
      %s507 = ssub.s32 %s42, %s49
      %p508 = scmp.eq.s32.totalorder %s507, 0
      %s510 = sadd.s32 %s509, 1
      %s511 = scalar_select %p508, %s509, %s510
      %p514 = pneg %p508
      %p515 = scmp.eq.s32.totalorder %s34, 3
      %p516 = por %p514, %p515
      %p517 = scmp.ne.s32.totalorder %s509, %s512
      %p518 = scmp.eq.s32.totalorder %s34, 0
      %p519 = por %p517, %p518
      %p520 = scmp.ne.s32.totalorder %s509, %s512
      %p521 = scmp.eq.s32.totalorder %s39, 3
      %p522 = por %p520, %p521
      %p523 = scmp.ne.s32.totalorder %s512, %s513
      %p524 = scmp.eq.s32.totalorder %s39, 0
      %p525 = por %p523, %p524
      %p526 = scmp.ne.s32.totalorder %s512, %s513
      %p527 = scmp.eq.s32.totalorder %s40, 3
      %p528 = por %p526, %p527
      %p530 = scmp.ne.s32.totalorder %s513, %s529
      %p531 = scmp.eq.s32.totalorder %s40, 0
      %p532 = por %p530, %p531
      %s533 = ssub.s32 %s42, %s49
      %p534 = scmp.eq.s32.totalorder %s533, 0
      %s536 = sadd.s32 %s535, 1
      %s537 = scalar_select %p534, %s535, %s536
      %p540 = pneg %p534
      %p541 = scmp.eq.s32.totalorder %s34, 3
      %p542 = por %p540, %p541
      %p543 = scmp.ne.s32.totalorder %s535, %s538
      %p544 = scmp.eq.s32.totalorder %s34, 0
      %p545 = por %p543, %p544
      %p546 = scmp.ne.s32.totalorder %s535, %s538
      %p547 = scmp.eq.s32.totalorder %s39, 3
      %p548 = por %p546, %p547
      %p549 = scmp.ne.s32.totalorder %s538, %s539
      %p550 = scmp.eq.s32.totalorder %s39, 0
      %p551 = por %p549, %p550
      %p552 = scmp.ne.s32.totalorder %s538, %s539
      %p553 = scmp.eq.s32.totalorder %s40, 3
      %p554 = por %p552, %p553
      %p556 = scmp.ne.s32.totalorder %s539, %s555
      %p557 = scmp.eq.s32.totalorder %s40, 0
      %p558 = por %p556, %p557
      %s559 = ssub.s32 %s42, %s49
      %p560 = scmp.eq.s32.totalorder %s559, 0
      %s562 = sadd.s32 %s561, 1
      %s563 = scalar_select %p560, %s561, %s562
      %p566 = pneg %p560
      %p567 = scmp.eq.s32.totalorder %s34, 3
      %p568 = por %p566, %p567
      %p569 = scmp.ne.s32.totalorder %s561, %s564
      %p570 = scmp.eq.s32.totalorder %s34, 0
      %p571 = por %p569, %p570
      %p572 = scmp.ne.s32.totalorder %s561, %s564
      %p573 = scmp.eq.s32.totalorder %s39, 3
      %p574 = por %p572, %p573
      %p575 = scmp.ne.s32.totalorder %s564, %s565
      %p576 = scmp.eq.s32.totalorder %s39, 0
      %p577 = por %p575, %p576
      %p578 = scmp.ne.s32.totalorder %s564, %s565
      %p579 = scmp.eq.s32.totalorder %s40, 3
      %p580 = por %p578, %p579
      %p582 = scmp.ne.s32.totalorder %s565, %s581
      %p583 = scmp.eq.s32.totalorder %s40, 0
      %p584 = por %p582, %p583
      %s586 = sadd.s32 %s585, 1
      %p589 = scmp.eq.s32.totalorder %s34, 3
      %p590 = scmp.ne.s32.totalorder %s585, %s587
      %p591 = scmp.eq.s32.totalorder %s34, 0
      %p592 = por %p590, %p591
      %p593 = scmp.ne.s32.totalorder %s585, %s587
      %p594 = scmp.eq.s32.totalorder %s39, 3
      %p595 = por %p593, %p594
      %p596 = scmp.ne.s32.totalorder %s587, %s588
      %p597 = scmp.eq.s32.totalorder %s39, 0
      %p598 = por %p596, %p597
      %p599 = scmp.ne.s32.totalorder %s587, %s588
      %p600 = scmp.eq.s32.totalorder %s40, 3
      %p601 = por %p599, %p600
      %p603 = scmp.ne.s32.totalorder %s588, %s602
      %p604 = scmp.eq.s32.totalorder %s40, 0
      %p605 = por %p603, %p604
      %s607 = sadd.s32 %s606, 1
      %p610 = scmp.eq.s32.totalorder %s34, 3
      %p611 = scmp.ne.s32.totalorder %s606, %s608
      %p612 = scmp.eq.s32.totalorder %s34, 0
      %p613 = por %p611, %p612
      %p614 = scmp.ne.s32.totalorder %s606, %s608
      %p615 = scmp.eq.s32.totalorder %s39, 3
      %p616 = por %p614, %p615
      %p617 = scmp.ne.s32.totalorder %s608, %s609
      %p618 = scmp.eq.s32.totalorder %s39, 0
      %p619 = por %p617, %p618
      %p620 = scmp.ne.s32.totalorder %s608, %s609
      %p621 = scmp.eq.s32.totalorder %s40, 3
      %p622 = por %p620, %p621
      %p624 = scmp.ne.s32.totalorder %s609, %s623
      %p625 = scmp.eq.s32.totalorder %s40, 0
      %p626 = por %p624, %p625
      %s628 = sadd.s32 %s627, 1
      %p631 = scmp.eq.s32.totalorder %s34, 3
      %p632 = scmp.ne.s32.totalorder %s627, %s629
      %p633 = scmp.eq.s32.totalorder %s34, 0
      %p634 = por %p632, %p633
      %p635 = scmp.ne.s32.totalorder %s627, %s629
      %p636 = scmp.eq.s32.totalorder %s39, 3
      %p637 = por %p635, %p636
      %p638 = scmp.ne.s32.totalorder %s629, %s630
      %p639 = scmp.eq.s32.totalorder %s39, 0
      %p640 = por %p638, %p639
      %p641 = scmp.ne.s32.totalorder %s629, %s630
      %p642 = scmp.eq.s32.totalorder %s40, 3
      %p643 = por %p641, %p642
      %p645 = scmp.ne.s32.totalorder %s630, %s644
      %p646 = scmp.eq.s32.totalorder %s40, 0
      %p647 = por %p645, %p646
      %s649 = sadd.s32 %s648, 1
      %p652 = scmp.eq.s32.totalorder %s34, 3
      %p653 = scmp.ne.s32.totalorder %s648, %s650
      %p654 = scmp.eq.s32.totalorder %s34, 0
      %p655 = por %p653, %p654
      %p656 = scmp.ne.s32.totalorder %s648, %s650
      %p657 = scmp.eq.s32.totalorder %s39, 3
      %p658 = por %p656, %p657
      %p659 = scmp.ne.s32.totalorder %s650, %s651
      %p660 = scmp.eq.s32.totalorder %s39, 0
      %p661 = por %p659, %p660
      %p662 = scmp.ne.s32.totalorder %s650, %s651
      %p663 = scmp.eq.s32.totalorder %s40, 3
      %p664 = por %p662, %p663
      %p666 = scmp.ne.s32.totalorder %s651, %s665
      %p667 = scmp.eq.s32.totalorder %s40, 0
      %p668 = por %p666, %p667
      %s669 = ssub.s32 %s41, %s53
      %p670 = scmp.eq.s32.totalorder %s669, 0
      %s672 = sadd.s32 %s671, 1
      %s673 = scalar_select %p670, %s671, %s672
      %p676 = pneg %p670
      %p677 = scmp.eq.s32.totalorder %s34, 3
      %p678 = por %p676, %p677
      %p679 = scmp.ne.s32.totalorder %s671, %s674
      %p680 = scmp.eq.s32.totalorder %s34, 0
      %p681 = por %p679, %p680
      %p682 = scmp.ne.s32.totalorder %s671, %s674
      %p683 = scmp.eq.s32.totalorder %s39, 3
      %p684 = por %p682, %p683
      %p685 = scmp.ne.s32.totalorder %s674, %s675
      %p686 = scmp.eq.s32.totalorder %s39, 0
      %p687 = por %p685, %p686
      %p688 = scmp.ne.s32.totalorder %s674, %s675
      %p689 = scmp.eq.s32.totalorder %s40, 3
      %p690 = por %p688, %p689
      %p692 = scmp.ne.s32.totalorder %s675, %s691
      %p693 = scmp.eq.s32.totalorder %s40, 0
      %p694 = por %p692, %p693
      %p695 = scmp.le.s32.totalorder 1, %s34
      %p696 = scmp.lt.s32.totalorder %s34, 5
      %p697 = pnand %p695, %p696
      %p698 = pneg %p697
      // Predicated region
      $region9: #{bert_classifier_forward.1} parent=5 // pred_check
        _
      $region10: #{bert_classifier_forward.1} parent=5 // pred_check_branch
        %700 = sbr.rel (%p697) target = $region12
      $region11: #{bert_classifier_forward.1} parent=5 // pred_region
        %s701 = ssub.s32 %s34, 1
        // Predicated region
        $region13: #{bert_classifier_forward.1} parent=11 // pred_check
          %p702 = pneg %p93
        $region14: #{bert_classifier_forward.1} parent=11 // pred_check_branch
          %704 = sbr.rel (%p702) target = $region16
        $region15: #{bert_classifier_forward.1} parent=11 // pred_region
          _
        $region16: #{bert_classifier_forward.1} parent=11 // pred_fallthru
          _
        // Predicated region
        $region17: #{bert_classifier_forward.1} parent=11 // pred_check
          %p705 = pneg %p140
        $region18: #{bert_classifier_forward.1} parent=11 // pred_check_branch
          %707 = sbr.rel (%p705) target = $region20
        $region19: #{bert_classifier_forward.1} parent=11 // pred_region
          _
        $region20: #{bert_classifier_forward.1} parent=11 // pred_fallthru
          _
        // Predicated region
        $region21: #{bert_classifier_forward.1} parent=11 // pred_check
          %p708 = pneg %p161
        $region22: #{bert_classifier_forward.1} parent=11 // pred_check_branch
          %710 = sbr.rel (%p708) target = $region24
        $region23: #{bert_classifier_forward.1} parent=11 // pred_region
          _
        $region24: #{bert_classifier_forward.1} parent=11 // pred_fallthru
          _
        // Predicated region
        $region25: #{bert_classifier_forward.1} parent=11 // pred_check
          %p711 = pneg %p598
        $region26: #{bert_classifier_forward.1} parent=11 // pred_check_branch
          %713 = sbr.rel (%p711) target = $region28
        $region27: #{bert_classifier_forward.1} parent=11 // pred_region
          _
        $region28: #{bert_classifier_forward.1} parent=11 // pred_fallthru
          _
        // Predicated region
        $region29: #{bert_classifier_forward.1} parent=11 // pred_check
          %p714 = pneg %p619
        $region30: #{bert_classifier_forward.1} parent=11 // pred_check_branch
          %716 = sbr.rel (%p714) target = $region32
        $region31: #{bert_classifier_forward.1} parent=11 // pred_region
          _
        $region32: #{bert_classifier_forward.1} parent=11 // pred_fallthru
          _
        // Predicated region
        $region33: #{bert_classifier_forward.1} parent=11 // pred_check
          %p717 = pneg %p640
        $region34: #{bert_classifier_forward.1} parent=11 // pred_check_branch
          %719 = sbr.rel (%p717) target = $region36
        $region35: #{bert_classifier_forward.1} parent=11 // pred_region
          _
        $region36: #{bert_classifier_forward.1} parent=11 // pred_fallthru
          _
        // Predicated region
        $region37: #{bert_classifier_forward.1} parent=11 // pred_check
          %p720 = pneg %p661
        $region38: #{bert_classifier_forward.1} parent=11 // pred_check_branch
          %722 = sbr.rel (%p720) target = $region40
        $region39: #{bert_classifier_forward.1} parent=11 // pred_region
          _
        $region40: #{bert_classifier_forward.1} parent=11 // pred_fallthru
          _
      $region12: #{bert_classifier_forward.1} parent=5 // pred_fallthru
        _
      %p723 = scmp.lt.s32.totalorder %s34, 4
      // Predicated region
      $region41: #{bert_classifier_forward.1} parent=5 // pred_check
        %p724 = pneg %p723
      $region42: #{bert_classifier_forward.1} parent=5 // pred_check_branch
        %726 = sbr.rel (%p724) target = $region44
      $region43: #{bert_classifier_forward.1} parent=5 // pred_region
        // Predicated region
        $region45: #{bert_classifier_forward.1} parent=43 // pred_check
          %p727 = pneg %p66
        $region46: #{bert_classifier_forward.1} parent=43 // pred_check_branch
          %729 = sbr.rel (%p727) target = $region48
        $region47: #{bert_classifier_forward.1} parent=43 // pred_region
          %p730 = scmp.lt.s32.totalorder %s41, 1
          %s731 = scalar_select %p730, %s41, 1
          %s732 = smul.addr %s731, 8
          %s733 = scalar_lea.vmem %s0, %s732
        $region48: #{bert_classifier_forward.1} parent=43 // pred_fallthru
          _
        // Predicated region
        $region49: #{bert_classifier_forward.1} parent=43 // pred_check
          %p734 = pneg %p113
        $region50: #{bert_classifier_forward.1} parent=43 // pred_check_branch
          %736 = sbr.rel (%p734) target = $region52
        $region51: #{bert_classifier_forward.1} parent=43 // pred_region
          %p737 = scmp.lt.s32.totalorder %s41, 1
          %s738 = scalar_select %p737, %s41, 1
          %s739 = scalar_lea.vmem %s2, %s738
        $region52: #{bert_classifier_forward.1} parent=43 // pred_fallthru
          _
        // Predicated region
        $region53: #{bert_classifier_forward.1} parent=43 // pred_check
          %p740 = pneg %p181
        $region54: #{bert_classifier_forward.1} parent=43 // pred_check_branch
          %742 = sbr.rel (%p740) target = $region56
        $region55: #{bert_classifier_forward.1} parent=43 // pred_region
          %p743 = scmp.lt.s32.totalorder %s42, 1
          %s744 = scalar_select %p743, %s42, 1
          %s745 = smul.addr %s744, 16
          %s746 = smul.addr %s745, 8
          %s747 = scalar_lea.vmem %s5, %s746
        $region56: #{bert_classifier_forward.1} parent=43 // pred_fallthru
          _
        // Predicated region
        $region57: #{bert_classifier_forward.1} parent=43 // pred_check
          %p748 = pneg %p207
        $region58: #{bert_classifier_forward.1} parent=43 // pred_check_branch
          %750 = sbr.rel (%p748) target = $region60
        $region59: #{bert_classifier_forward.1} parent=43 // pred_region
          %p751 = scmp.lt.s32.totalorder %s42, 1
          %s752 = scalar_select %p751, %s42, 1
          %s753 = smul.addr %s752, 4
          %s754 = scalar_lea.vmem %s6, %s753
        $region60: #{bert_classifier_forward.1} parent=43 // pred_fallthru
          _
        // Predicated region
        $region61: #{bert_classifier_forward.1} parent=43 // pred_check
          %p755 = pneg %p233
        $region62: #{bert_classifier_forward.1} parent=43 // pred_check_branch
          %757 = sbr.rel (%p755) target = $region64
        $region63: #{bert_classifier_forward.1} parent=43 // pred_region
          %p758 = scmp.lt.s32.totalorder %s42, 1
          %s759 = scalar_select %p758, %s42, 1
          %s760 = smul.addr %s759, 16
          %s761 = smul.addr %s760, 8
          %s762 = scalar_lea.vmem %s7, %s761
        $region64: #{bert_classifier_forward.1} parent=43 // pred_fallthru
          _
        // Predicated region
        $region65: #{bert_classifier_forward.1} parent=43 // pred_check
          %p763 = pneg %p259
        $region66: #{bert_classifier_forward.1} parent=43 // pred_check_branch
          %765 = sbr.rel (%p763) target = $region68
        $region67: #{bert_classifier_forward.1} parent=43 // pred_region
          %p766 = scmp.lt.s32.totalorder %s42, 1
          %s767 = scalar_select %p766, %s42, 1
          %s768 = smul.addr %s767, 4
          %s769 = scalar_lea.vmem %s8, %s768
        $region68: #{bert_classifier_forward.1} parent=43 // pred_fallthru
          _
        // Predicated region
        $region69: #{bert_classifier_forward.1} parent=43 // pred_check
          %p770 = pneg %p285
        $region70: #{bert_classifier_forward.1} parent=43 // pred_check_branch
          %772 = sbr.rel (%p770) target = $region72
        $region71: #{bert_classifier_forward.1} parent=43 // pred_region
          %p773 = scmp.lt.s32.totalorder %s42, 1
          %s774 = scalar_select %p773, %s42, 1
          %s775 = smul.addr %s774, 16
          %s776 = smul.addr %s775, 8
          %s777 = scalar_lea.vmem %s9, %s776
        $region72: #{bert_classifier_forward.1} parent=43 // pred_fallthru
          _
        // Predicated region
        $region73: #{bert_classifier_forward.1} parent=43 // pred_check
          %p778 = pneg %p311
        $region74: #{bert_classifier_forward.1} parent=43 // pred_check_branch
          %780 = sbr.rel (%p778) target = $region76
        $region75: #{bert_classifier_forward.1} parent=43 // pred_region
          %p781 = scmp.lt.s32.totalorder %s42, 1
          %s782 = scalar_select %p781, %s42, 1
          %s783 = smul.addr %s782, 4
          %s784 = scalar_lea.vmem %s10, %s783
        $region76: #{bert_classifier_forward.1} parent=43 // pred_fallthru
          _
        // Predicated region
        $region77: #{bert_classifier_forward.1} parent=43 // pred_check
          %p785 = pneg %p337
        $region78: #{bert_classifier_forward.1} parent=43 // pred_check_branch
          %787 = sbr.rel (%p785) target = $region80
        $region79: #{bert_classifier_forward.1} parent=43 // pred_region
          %p788 = scmp.lt.s32.totalorder %s42, 1
          %s789 = scalar_select %p788, %s42, 1
          %s790 = smul.addr %s789, 4
          %s791 = smul.addr %s790, 8
          %s792 = scalar_lea.vmem %s11, %s791
        $region80: #{bert_classifier_forward.1} parent=43 // pred_fallthru
          _
        // Predicated region
        $region81: #{bert_classifier_forward.1} parent=43 // pred_check
          %p793 = pneg %p363
        $region82: #{bert_classifier_forward.1} parent=43 // pred_check_branch
          %795 = sbr.rel (%p793) target = $region84
        $region83: #{bert_classifier_forward.1} parent=43 // pred_region
          %p796 = scmp.lt.s32.totalorder %s42, 1
          %s797 = scalar_select %p796, %s42, 1
          %s798 = scalar_lea.vmem %s12, %s797
        $region84: #{bert_classifier_forward.1} parent=43 // pred_fallthru
          _
        // Predicated region
        $region85: #{bert_classifier_forward.1} parent=43 // pred_check
          %p799 = pneg %p389
        $region86: #{bert_classifier_forward.1} parent=43 // pred_check_branch
          %801 = sbr.rel (%p799) target = $region88
        $region87: #{bert_classifier_forward.1} parent=43 // pred_region
          %p802 = scmp.lt.s32.totalorder %s42, 1
          %s803 = scalar_select %p802, %s42, 1
          %s804 = scalar_lea.vmem %s13, %s803
        $region88: #{bert_classifier_forward.1} parent=43 // pred_fallthru
          _
        // Predicated region
        $region89: #{bert_classifier_forward.1} parent=43 // pred_check
          %p805 = pneg %p415
        $region90: #{bert_classifier_forward.1} parent=43 // pred_check_branch
          %807 = sbr.rel (%p805) target = $region92
        $region91: #{bert_classifier_forward.1} parent=43 // pred_region
          %p808 = scmp.lt.s32.totalorder %s42, 1
          %s809 = scalar_select %p808, %s42, 1
          %s810 = scalar_lea.vmem %s14, %s809
        $region92: #{bert_classifier_forward.1} parent=43 // pred_fallthru
          _
        // Predicated region
        $region93: #{bert_classifier_forward.1} parent=43 // pred_check
          %p811 = pneg %p441
        $region94: #{bert_classifier_forward.1} parent=43 // pred_check_branch
          %813 = sbr.rel (%p811) target = $region96
        $region95: #{bert_classifier_forward.1} parent=43 // pred_region
          %p814 = scmp.lt.s32.totalorder %s42, 1
          %s815 = scalar_select %p814, %s42, 1
          %s816 = smul.addr %s815, 4
          %s817 = smul.addr %s816, 8
          %s818 = scalar_lea.vmem %s15, %s817
        $region96: #{bert_classifier_forward.1} parent=43 // pred_fallthru
          _
        // Predicated region
        $region97: #{bert_classifier_forward.1} parent=43 // pred_check
          %p819 = pneg %p467
        $region98: #{bert_classifier_forward.1} parent=43 // pred_check_branch
          %821 = sbr.rel (%p819) target = $region100
        $region99: #{bert_classifier_forward.1} parent=43 // pred_region
          %p822 = scmp.lt.s32.totalorder %s42, 1
          %s823 = scalar_select %p822, %s42, 1
          %s824 = scalar_lea.vmem %s16, %s823
        $region100: #{bert_classifier_forward.1} parent=43 // pred_fallthru
          _
        // Predicated region
        $region101: #{bert_classifier_forward.1} parent=43 // pred_check
          %p825 = pneg %p493
        $region102: #{bert_classifier_forward.1} parent=43 // pred_check_branch
          %827 = sbr.rel (%p825) target = $region104
        $region103: #{bert_classifier_forward.1} parent=43 // pred_region
          %p828 = scmp.lt.s32.totalorder %s42, 1
          %s829 = scalar_select %p828, %s42, 1
          %s830 = smul.addr %s829, 8
          %s831 = smul.addr %s830, 8
          %s832 = scalar_lea.vmem %s17, %s831
        $region104: #{bert_classifier_forward.1} parent=43 // pred_fallthru
          _
        // Predicated region
        $region105: #{bert_classifier_forward.1} parent=43 // pred_check
          %p833 = pneg %p519
        $region106: #{bert_classifier_forward.1} parent=43 // pred_check_branch
          %835 = sbr.rel (%p833) target = $region108
        $region107: #{bert_classifier_forward.1} parent=43 // pred_region
          %p836 = scmp.lt.s32.totalorder %s42, 1
          %s837 = scalar_select %p836, %s42, 1
          %s838 = scalar_lea.vmem %s18, %s837
        $region108: #{bert_classifier_forward.1} parent=43 // pred_fallthru
          _
        // Predicated region
        $region109: #{bert_classifier_forward.1} parent=43 // pred_check
          %p839 = pneg %p545
        $region110: #{bert_classifier_forward.1} parent=43 // pred_check_branch
          %841 = sbr.rel (%p839) target = $region112
        $region111: #{bert_classifier_forward.1} parent=43 // pred_region
          %p842 = scmp.lt.s32.totalorder %s42, 1
          %s843 = scalar_select %p842, %s42, 1
          %s844 = scalar_lea.vmem %s19, %s843
        $region112: #{bert_classifier_forward.1} parent=43 // pred_fallthru
          _
        // Predicated region
        $region113: #{bert_classifier_forward.1} parent=43 // pred_check
          %p845 = pneg %p571
        $region114: #{bert_classifier_forward.1} parent=43 // pred_check_branch
          %847 = sbr.rel (%p845) target = $region116
        $region115: #{bert_classifier_forward.1} parent=43 // pred_region
          %p848 = scmp.lt.s32.totalorder %s42, 1
          %s849 = scalar_select %p848, %s42, 1
          %s850 = scalar_lea.vmem %s20, %s849
        $region116: #{bert_classifier_forward.1} parent=43 // pred_fallthru
          _
      $region44: #{bert_classifier_forward.1} parent=5 // pred_fallthru
        _
      %p851 = scmp.le.s32.totalorder 1, %s34
      %p852 = scmp.lt.s32.totalorder %s34, 5
      %p853 = pnand %p851, %p852
      %p854 = pneg %p853
      // Predicated region
      $region117: #{bert_classifier_forward.1} parent=5 // pred_check
        _
      $region118: #{bert_classifier_forward.1} parent=5 // pred_check_branch
        %856 = sbr.rel (%p853) target = $region120
      $region119: #{bert_classifier_forward.1} parent=5 // pred_region
        %s857 = ssub.s32 %s34, 1
        %p858 = scmp.lt.s32.totalorder %s43, 1
        %s859 = scalar_select %p858, %s43, 1
        %s860 = smul.addr %s859, 8
        %s861 = scalar_lea.vmem %s0, %s860
        %p862 = pneg %p72
        %p863 = pneg %p69
        %p864 = pneg %p93
        %p865 = pneg %p90
        %p866 = scmp.lt.s32.totalorder %s43, 1
        %s867 = scalar_select %p866, %s43, 1
        %s868 = scalar_lea.vmem %s2, %s867
        %p869 = pneg %p119
        %p870 = pneg %p116
        %p871 = pneg %p140
        %p872 = pneg %p137
        %p873 = pneg %p161
        %p874 = pneg %p158
        %p875 = scmp.lt.s32.totalorder %s44, 1
        %s876 = scalar_select %p875, %s44, 1
        %s877 = smul.addr %s876, 16
        %s878 = smul.addr %s877, 8
        %s879 = scalar_lea.vmem %s5, %s878
        %p880 = pneg %p187
        %p881 = pneg %p184
        %p882 = scmp.lt.s32.totalorder %s44, 1
        %s883 = scalar_select %p882, %s44, 1
        %s884 = smul.addr %s883, 4
        %s885 = scalar_lea.vmem %s6, %s884
        %p886 = pneg %p213
        %p887 = pneg %p210
        %p888 = scmp.lt.s32.totalorder %s44, 1
        %s889 = scalar_select %p888, %s44, 1
        %s890 = smul.addr %s889, 16
        %s891 = smul.addr %s890, 8
        %s892 = scalar_lea.vmem %s7, %s891
        %p893 = pneg %p239
        %p894 = pneg %p236
        %p895 = scmp.lt.s32.totalorder %s44, 1
        %s896 = scalar_select %p895, %s44, 1
        %s897 = smul.addr %s896, 4
        %s898 = scalar_lea.vmem %s8, %s897
        %p899 = pneg %p265
        %p900 = pneg %p262
        %p901 = scmp.lt.s32.totalorder %s44, 1
        %s902 = scalar_select %p901, %s44, 1
        %s903 = smul.addr %s902, 16
        %s904 = smul.addr %s903, 8
        %s905 = scalar_lea.vmem %s9, %s904
        %p906 = pneg %p291
        %p907 = pneg %p288
        %p908 = scmp.lt.s32.totalorder %s44, 1
        %s909 = scalar_select %p908, %s44, 1
        %s910 = smul.addr %s909, 4
        %s911 = scalar_lea.vmem %s10, %s910
        %p912 = pneg %p317
        %p913 = pneg %p314
        %p914 = scmp.lt.s32.totalorder %s44, 1
        %s915 = scalar_select %p914, %s44, 1
        %s916 = smul.addr %s915, 4
        %s917 = smul.addr %s916, 8
        %s918 = scalar_lea.vmem %s11, %s917
        %p919 = pneg %p343
        %p920 = pneg %p340
        %p921 = scmp.lt.s32.totalorder %s44, 1
        %s922 = scalar_select %p921, %s44, 1
        %s923 = scalar_lea.vmem %s12, %s922
        %p924 = pneg %p369
        %p925 = pneg %p366
        %p926 = scmp.lt.s32.totalorder %s44, 1
        %s927 = scalar_select %p926, %s44, 1
        %s928 = scalar_lea.vmem %s13, %s927
        %p929 = pneg %p395
        %p930 = pneg %p392
        %p931 = scmp.lt.s32.totalorder %s44, 1
        %s932 = scalar_select %p931, %s44, 1
        %s933 = scalar_lea.vmem %s14, %s932
        %p934 = pneg %p421
        %p935 = pneg %p418
        %p936 = scmp.lt.s32.totalorder %s44, 1
        %s937 = scalar_select %p936, %s44, 1
        %s938 = smul.addr %s937, 4
        %s939 = smul.addr %s938, 8
        %s940 = scalar_lea.vmem %s15, %s939
        %p941 = pneg %p447
        %p942 = pneg %p444
        %p943 = scmp.lt.s32.totalorder %s44, 1
        %s944 = scalar_select %p943, %s44, 1
        %s945 = scalar_lea.vmem %s16, %s944
        %p946 = pneg %p473
        %p947 = pneg %p470
        %p948 = scmp.lt.s32.totalorder %s44, 1
        %s949 = scalar_select %p948, %s44, 1
        %s950 = smul.addr %s949, 8
        %s951 = smul.addr %s950, 8
        %s952 = scalar_lea.vmem %s17, %s951
        %p953 = pneg %p499
        %p954 = pneg %p496
        %p955 = scmp.lt.s32.totalorder %s44, 1
        %s956 = scalar_select %p955, %s44, 1
        %s957 = scalar_lea.vmem %s18, %s956
        %p958 = pneg %p525
        %p959 = pneg %p522
        %p960 = scmp.lt.s32.totalorder %s44, 1
        %s961 = scalar_select %p960, %s44, 1
        %s962 = scalar_lea.vmem %s19, %s961
        %p963 = pneg %p551
        %p964 = pneg %p548
        %p965 = scmp.lt.s32.totalorder %s44, 1
        %s966 = scalar_select %p965, %s44, 1
        %s967 = scalar_lea.vmem %s20, %s966
        %p968 = pneg %p577
        %p969 = pneg %p574
        %p970 = pneg %p598
        %p971 = pneg %p595
        %p972 = pneg %p619
        %p973 = pneg %p616
        %p974 = pneg %p640
        %p975 = pneg %p637
        %p976 = pneg %p661
        %p977 = pneg %p658
        %p978 = pneg %p687
        %p979 = pneg %p684
        %s980 = sand.u32 %s674, 1
        %s981 = scalar_lea.sflag [#allocation4], %s980
        %s982 = sand.u32 %s674, 1
        %s983 = scalar_lea.vmem [#allocation3], %s982
        %p984 = scmp.lt.s32.totalorder %s43, 1
        %s985 = scalar_select %p984, %s43, 1
        %s986 = smul.addr %s985, 8
        %s987 = scalar_lea.vmem %s0, %s986
        %p988 = scmp.lt.s32.totalorder %s43, 1
        %s989 = scalar_select %p988, %s43, 1
        %s990 = scalar_lea.vmem %s2, %s989
        %p991 = scmp.lt.s32.totalorder %s44, 1
        %s992 = scalar_select %p991, %s44, 1
        %s993 = smul.addr %s992, 16
        %s994 = smul.addr %s993, 8
        %s995 = scalar_lea.vmem %s5, %s994
        %p996 = scmp.lt.s32.totalorder %s44, 1
        %s997 = scalar_select %p996, %s44, 1
        %s998 = smul.addr %s997, 4
        %s999 = scalar_lea.vmem %s6, %s998
        %p1000 = scmp.lt.s32.totalorder %s44, 1
        %s1001 = scalar_select %p1000, %s44, 1
        %s1002 = smul.addr %s1001, 16
        %s1003 = smul.addr %s1002, 8
        %s1004 = scalar_lea.vmem %s7, %s1003
        %p1005 = scmp.lt.s32.totalorder %s44, 1
        %s1006 = scalar_select %p1005, %s44, 1
        %s1007 = smul.addr %s1006, 4
        %s1008 = scalar_lea.vmem %s8, %s1007
        %p1009 = scmp.lt.s32.totalorder %s44, 1
        %s1010 = scalar_select %p1009, %s44, 1
        %s1011 = smul.addr %s1010, 16
        %s1012 = smul.addr %s1011, 8
        %s1013 = scalar_lea.vmem %s9, %s1012
        %p1014 = scmp.lt.s32.totalorder %s44, 1
        %s1015 = scalar_select %p1014, %s44, 1
        %s1016 = smul.addr %s1015, 4
        %s1017 = scalar_lea.vmem %s10, %s1016
        %p1018 = scmp.lt.s32.totalorder %s44, 1
        %s1019 = scalar_select %p1018, %s44, 1
        %s1020 = smul.addr %s1019, 4
        %s1021 = smul.addr %s1020, 8
        %s1022 = scalar_lea.vmem %s11, %s1021
        %p1023 = scmp.lt.s32.totalorder %s44, 1
        %s1024 = scalar_select %p1023, %s44, 1
        %s1025 = scalar_lea.vmem %s12, %s1024
        %p1026 = scmp.lt.s32.totalorder %s44, 1
        %s1027 = scalar_select %p1026, %s44, 1
        %s1028 = scalar_lea.vmem %s13, %s1027
        %p1029 = scmp.lt.s32.totalorder %s44, 1
        %s1030 = scalar_select %p1029, %s44, 1
        %s1031 = scalar_lea.vmem %s14, %s1030
        %p1032 = scmp.lt.s32.totalorder %s44, 1
        %s1033 = scalar_select %p1032, %s44, 1
        %s1034 = smul.addr %s1033, 4
        %s1035 = smul.addr %s1034, 8
        %s1036 = scalar_lea.vmem %s15, %s1035
        %p1037 = scmp.lt.s32.totalorder %s44, 1
        %s1038 = scalar_select %p1037, %s44, 1
        %s1039 = scalar_lea.vmem %s16, %s1038
        %p1040 = scmp.lt.s32.totalorder %s44, 1
        %s1041 = scalar_select %p1040, %s44, 1
        %s1042 = smul.addr %s1041, 8
        %s1043 = smul.addr %s1042, 8
        %s1044 = scalar_lea.vmem %s17, %s1043
        %p1045 = scmp.lt.s32.totalorder %s44, 1
        %s1046 = scalar_select %p1045, %s44, 1
        %s1047 = scalar_lea.vmem %s18, %s1046
        %p1048 = scmp.lt.s32.totalorder %s44, 1
        %s1049 = scalar_select %p1048, %s44, 1
        %s1050 = scalar_lea.vmem %s19, %s1049
        %p1051 = scmp.lt.s32.totalorder %s44, 1
        %s1052 = scalar_select %p1051, %s44, 1
        %s1053 = scalar_lea.vmem %s20, %s1052
        %p1054 = scmp.eq.s32.totalorder %s44, 0
        // Predicated region
        $region121: #{bert_classifier_forward.1} parent=119 // pred_check
          %p1055 = pneg %p1054
        $region122: #{bert_classifier_forward.1} parent=119 // pred_check_branch
          %1057 = sbr.rel (%p1055) target = $region124
        $region123: #{bert_classifier_forward.1} parent=119 // pred_region
          %v1058 = vld [vmem:[%s987] sm:$0xff]
          %v1059 = vld [vmem:[%s1] sm:$0xff]
          %v1060 = vadd.f32 %v1058, %v1059
          %v1061 = vld [vmem:[%s3] sm:$0x1]
          %v1062 = vld [vmem:[%s4] sm:$0x1]
          %vm1063 = vcmask 261120
          %v1064 = vsel %vm1063, %v1060, 0.0
          %1065 = vadd.xlane.f32.xlu0 %v1064
          %v1066 = vpop.xlane.xlu0 %1065
          %v1067 = vrcp.pop 32.0
          %v1068 = vmul.f32 %v1066, %v1067
          %v1069 = vsub.f32 %v1060, %v1068
          %v1070 = vmul.f32 %v1069, %v1069
          %v1071 = vsel %vm1063, %v1070, 0.0
          %1072 = vadd.xlane.f32.xlu0 %v1071
          %v1073 = vpop.xlane.xlu0 %1072
          %v1074 = vmul.f32 %v1073, %v1067
          %v1075 = vadd.f32 %v1074, 1e-12
          %v1076 = vrsqrt.pop %v1075
          %v1077 = vmul.f32 %v1069, %v1076
          %v1079 = vlaneseq
          %v1080 = vshrl.u32 %v1079, 7
          %v1081 = vsub.s32 0, %v1080
          %v1082 = vrot.slane %v1061, %v1081
          %v1084 = vmul.f32 %v1077, %v1082
          %v1086 = vlaneseq
          %v1087 = vshrl.u32 %v1086, 7
          %v1088 = vsub.s32 0, %v1087
          %v1089 = vrot.slane %v1062, %v1088
          %v1091 = vadd.f32 %v1084, %v1089
          %1092 = vst.msk [vmem:[#allocation2] sm:$0xff] %vm1063, %v1091
        $region124: #{bert_classifier_forward.1} parent=119 // pred_fallthru
          _
        %v1093 = vld [vmem:[#allocation2] sm:$0xff]
        %v1094 = vld [vmem:[%s990] sm:$0x1]
        %v1095 = vcvt.s32.f32 %v1094
        %v1096 = vsub.f32 1.0, %v1095
        %v1097 = vmul.f32 %v1096, -1e+09
        %v1098 = vld [vmem:[%s995] sm:$0xff]
        %v1099 = vld [vmem:[%s995 + $0x8] sm:$0xff]
        %v1100 = vld [vmem:[%s995 + $0x10] sm:$0xff]
        %v1101 = vld [vmem:[%s995 + $0x18] sm:$0xff]
        %v1102 = vld [vmem:[%s999] sm:$0x1]
        %v1104 = vlaneseq
        %v1105 = vshrl.u32 %v1104, 7
        %v1106 = vsub.s32 0, %v1105
        %v1107 = vrot.slane %v1102, %v1106
        %vm1109 = vcmask 261120
        %v1111 = vsel %vm1109, %v1093, 0
        %1113 = vmatprep.subr.mxu0 0.0
        %1114 = vmatpush1.msra.mxu0 %v1098
        %1115 = vmatprep.subr.mxu0 0.0
        %1116 = vmatpush1.msra.mxu0 %v1099
        %1117 = vmatprep.subr.mxu0 0.0
        %1118 = vmatpush1.msra.mxu0 %v1100
        %1119 = vmatprep.subr.mxu0 0.0
        %1120 = vmatpush1.msra.mxu0 %v1101
        %1121 = vmatprep.subr.mxu0 0.0
        %1122 = vmatpush1.msra.mxu0 0.0
        %1123 = vmatprep.subr.mxu0 0.0
        %1124 = vmatpush1.msra.mxu0 0.0
        %1125 = vmatprep.subr.mxu0 0.0
        %1126 = vmatpush1.msra.mxu0 0.0
        %1127 = vmatprep.subr.mxu0 0.0
        %1128 = vmatpush1.msra.mxu0 0.0
        %1129 = vmatprep.subr.mxu0 0.0
        %1130 = vmatpush1.msra.mxu0 0.0
        %1131 = vmatprep.subr.mxu0 0.0
        %1132 = vmatpush1.msra.mxu0 0.0
        %1133 = vmatprep.subr.mxu0 0.0
        %1134 = vmatpush1.msra.mxu0 0.0
        %1135 = vmatprep.subr.mxu0 0.0
        %1136 = vmatpush1.msra.mxu0 0.0
        %1137 = vmatprep.subr.mxu0 0.0
        %1138 = vmatpush1.msra.mxu0 0.0
        %1139 = vmatprep.subr.mxu0 0.0
        %1140 = vmatpush1.msra.mxu0 0.0
        %1141 = vmatprep.subr.mxu0 0.0
        %1142 = vmatpush1.msra.mxu0 0.0
        %1143 = vmatprep.subr.mxu0 0.0
        %1144 = vmatpush1.msra.mxu0 0.0
        %1145 = vmatprep.subr.mxu0 0.0
        %1146 = vmatpush1.msra.mxu0 0.0
        %1147 = vmatprep.subr.mxu0 0.0
        %1148 = vmatpush1.msra.mxu0 0.0
        %1149 = vmatprep.subr.mxu0 0.0
        %1150 = vmatpush1.msra.mxu0 0.0
        %1151 = vmatprep.subr.mxu0 0.0
        %1152 = vmatpush1.msra.mxu0 0.0
        %1153 = vmatprep.subr.mxu0 0.0
        %1154 = vmatpush1.msra.mxu0 0.0
        %1155 = vmatprep.subr.mxu0 0.0
        %1156 = vmatpush1.msra.mxu0 0.0
        %1157 = vmatprep.subr.mxu0 0.0
        %1158 = vmatpush1.msra.mxu0 0.0
        %1159 = vmatprep.subr.mxu0 0.0
        %1160 = vmatpush1.msra.mxu0 0.0
        %1161 = vmatprep.subr.mxu0 0.0
        %1162 = vmatpush1.msra.mxu0 0.0
        %1163 = vmatprep.subr.mxu0 0.0
        %1164 = vmatpush1.msra.mxu0 0.0
        %1165 = vmatprep.subr.mxu0 0.0
        %1166 = vmatpush1.msra.mxu0 0.0
        %1167 = vmatprep.subr.mxu0 0.0
        %1168 = vmatpush1.msra.mxu0 0.0
        %1169 = vmatprep.subr.mxu0 0.0
        %1170 = vmatpush1.msra.mxu0 0.0
        %1171 = vmatprep.subr.mxu0 0.0
        %1172 = vmatpush1.msra.mxu0 0.0
        %1173 = vmatprep.subr.mxu0 0.0
        %1174 = vmatpush1.msra.mxu0 0.0
        %1175 = vmatprep.subr.mxu0 0.0
        %1176 = vmatpush1.msra.mxu0 0.0
        %1177 = vmatprep.mubr.f32.mxu0 0.0
        %1178 = vmatmul.mubr.f32.gmra.mrb[0].mxu0 %v1111
        %v1179 = vpop.f32.mrb[0].mxu0
        %v1180 = vadd.f32 %v1107, %v1179
        %v1181 = vpop.f32.mrb[0].mxu0
        %1182 = vdwg.mxu0
        %v1183 = vld [vmem:[%s1004] sm:$0xff]
        %v1184 = vld [vmem:[%s1004 + $0x8] sm:$0xff]
        %v1185 = vld [vmem:[%s1004 + $0x10] sm:$0xff]
        %v1186 = vld [vmem:[%s1004 + $0x18] sm:$0xff]
        %v1187 = vld [vmem:[%s1008] sm:$0x1]
        %v1189 = vlaneseq
        %v1190 = vshrl.u32 %v1189, 7
        %v1191 = vsub.s32 0, %v1190
        %v1192 = vrot.slane %v1187, %v1191
        %1194 = vmatprep.subr.mxu0 0.0
        %1195 = vmatpush1.msra.mxu0 %v1183
        %1196 = vmatprep.subr.mxu0 0.0
        %1197 = vmatpush1.msra.mxu0 %v1184
        %1198 = vmatprep.subr.mxu0 0.0
        %1199 = vmatpush1.msra.mxu0 %v1185
        %1200 = vmatprep.subr.mxu0 0.0
        %1201 = vmatpush1.msra.mxu0 %v1186
        %1202 = vmatprep.subr.mxu0 0.0
        %1203 = vmatpush1.msra.mxu0 0.0
        %1204 = vmatprep.subr.mxu0 0.0
        %1205 = vmatpush1.msra.mxu0 0.0
        %1206 = vmatprep.subr.mxu0 0.0
        %1207 = vmatpush1.msra.mxu0 0.0
        %1208 = vmatprep.subr.mxu0 0.0
        %1209 = vmatpush1.msra.mxu0 0.0
        %1210 = vmatprep.subr.mxu0 0.0
        %1211 = vmatpush1.msra.mxu0 0.0
        %1212 = vmatprep.subr.mxu0 0.0
        %1213 = vmatpush1.msra.mxu0 0.0
        %1214 = vmatprep.subr.mxu0 0.0
        %1215 = vmatpush1.msra.mxu0 0.0
        %1216 = vmatprep.subr.mxu0 0.0
        %1217 = vmatpush1.msra.mxu0 0.0
        %1218 = vmatprep.subr.mxu0 0.0
        %1219 = vmatpush1.msra.mxu0 0.0
        %1220 = vmatprep.subr.mxu0 0.0
        %1221 = vmatpush1.msra.mxu0 0.0
        %1222 = vmatprep.subr.mxu0 0.0
        %1223 = vmatpush1.msra.mxu0 0.0
        %1224 = vmatprep.subr.mxu0 0.0
        %1225 = vmatpush1.msra.mxu0 0.0
        %1226 = vmatprep.subr.mxu0 0.0
        %1227 = vmatpush1.msra.mxu0 0.0
        %1228 = vmatprep.subr.mxu0 0.0
        %1229 = vmatpush1.msra.mxu0 0.0
        %1230 = vmatprep.subr.mxu0 0.0
        %1231 = vmatpush1.msra.mxu0 0.0
        %1232 = vmatprep.subr.mxu0 0.0
        %1233 = vmatpush1.msra.mxu0 0.0
        %1234 = vmatprep.subr.mxu0 0.0
        %1235 = vmatpush1.msra.mxu0 0.0
        %1236 = vmatprep.subr.mxu0 0.0
        %1237 = vmatpush1.msra.mxu0 0.0
        %1238 = vmatprep.subr.mxu0 0.0
        %1239 = vmatpush1.msra.mxu0 0.0
        %1240 = vmatprep.subr.mxu0 0.0
        %1241 = vmatpush1.msra.mxu0 0.0
        %1242 = vmatprep.subr.mxu0 0.0
        %1243 = vmatpush1.msra.mxu0 0.0
        %1244 = vmatprep.subr.mxu0 0.0
        %1245 = vmatpush1.msra.mxu0 0.0
        %1246 = vmatprep.subr.mxu0 0.0
        %1247 = vmatpush1.msra.mxu0 0.0
        %1248 = vmatprep.subr.mxu0 0.0
        %1249 = vmatpush1.msra.mxu0 0.0
        %1250 = vmatprep.subr.mxu0 0.0
        %1251 = vmatpush1.msra.mxu0 0.0
        %1252 = vmatprep.subr.mxu0 0.0
        %1253 = vmatpush1.msra.mxu0 0.0
        %1254 = vmatprep.subr.mxu0 0.0
        %1255 = vmatpush1.msra.mxu0 0.0
        %1256 = vmatprep.subr.mxu0 0.0
        %1257 = vmatpush1.msra.mxu0 0.0
        %1258 = vmatprep.mubr.f32.mxu0 0.0
        %1259 = vmatmul.mubr.f32.gmra.mrb[0].mxu0 %v1111
        %v1260 = vpop.f32.mrb[0].mxu0
        %v1261 = vadd.f32 %v1192, %v1260
        %v1262 = vpop.f32.mrb[0].mxu0
        %1263 = vdwg.mxu0
        %v1264 = vld [vmem:[%s1013] sm:$0xff]
        %v1265 = vld [vmem:[%s1013 + $0x8] sm:$0xff]
        %v1266 = vld [vmem:[%s1013 + $0x10] sm:$0xff]
        %v1267 = vld [vmem:[%s1013 + $0x18] sm:$0xff]
        %v1268 = vld [vmem:[%s1017] sm:$0x1]
        %v1270 = vlaneseq
        %v1271 = vshrl.u32 %v1270, 7
        %v1272 = vsub.s32 0, %v1271
        %v1273 = vrot.slane %v1268, %v1272
        %1275 = vmatprep.subr.mxu0 0.0
        %1276 = vmatpush1.msra.mxu0 %v1264
        %1277 = vmatprep.subr.mxu0 0.0
        %1278 = vmatpush1.msra.mxu0 %v1265
        %1279 = vmatprep.subr.mxu0 0.0
        %1280 = vmatpush1.msra.mxu0 %v1266
        %1281 = vmatprep.subr.mxu0 0.0
        %1282 = vmatpush1.msra.mxu0 %v1267
        %1283 = vmatprep.subr.mxu0 0.0
        %1284 = vmatpush1.msra.mxu0 0.0
        %1285 = vmatprep.subr.mxu0 0.0
        %1286 = vmatpush1.msra.mxu0 0.0
        %1287 = vmatprep.subr.mxu0 0.0
        %1288 = vmatpush1.msra.mxu0 0.0
        %1289 = vmatprep.subr.mxu0 0.0
        %1290 = vmatpush1.msra.mxu0 0.0
        %1291 = vmatprep.subr.mxu0 0.0
        %1292 = vmatpush1.msra.mxu0 0.0
        %1293 = vmatprep.subr.mxu0 0.0
        %1294 = vmatpush1.msra.mxu0 0.0
        %1295 = vmatprep.subr.mxu0 0.0
        %1296 = vmatpush1.msra.mxu0 0.0
        %1297 = vmatprep.subr.mxu0 0.0
        %1298 = vmatpush1.msra.mxu0 0.0
        %1299 = vmatprep.subr.mxu0 0.0
        %1300 = vmatpush1.msra.mxu0 0.0
        %1301 = vmatprep.subr.mxu0 0.0
        %1302 = vmatpush1.msra.mxu0 0.0
        %1303 = vmatprep.subr.mxu0 0.0
        %1304 = vmatpush1.msra.mxu0 0.0
        %1305 = vmatprep.subr.mxu0 0.0
        %1306 = vmatpush1.msra.mxu0 0.0
        %1307 = vmatprep.subr.mxu0 0.0
        %1308 = vmatpush1.msra.mxu0 0.0
        %1309 = vmatprep.subr.mxu0 0.0
        %1310 = vmatpush1.msra.mxu0 0.0
        %1311 = vmatprep.subr.mxu0 0.0
        %1312 = vmatpush1.msra.mxu0 0.0
        %1313 = vmatprep.subr.mxu0 0.0
        %1314 = vmatpush1.msra.mxu0 0.0
        %1315 = vmatprep.subr.mxu0 0.0
        %1316 = vmatpush1.msra.mxu0 0.0
        %1317 = vmatprep.subr.mxu0 0.0
        %1318 = vmatpush1.msra.mxu0 0.0
        %1319 = vmatprep.subr.mxu0 0.0
        %1320 = vmatpush1.msra.mxu0 0.0
        %1321 = vmatprep.subr.mxu0 0.0
        %1322 = vmatpush1.msra.mxu0 0.0
        %1323 = vmatprep.subr.mxu0 0.0
        %1324 = vmatpush1.msra.mxu0 0.0
        %1325 = vmatprep.subr.mxu0 0.0
        %1326 = vmatpush1.msra.mxu0 0.0
        %1327 = vmatprep.subr.mxu0 0.0
        %1328 = vmatpush1.msra.mxu0 0.0
        %1329 = vmatprep.subr.mxu0 0.0
        %1330 = vmatpush1.msra.mxu0 0.0
        %1331 = vmatprep.subr.mxu0 0.0
        %1332 = vmatpush1.msra.mxu0 0.0
        %1333 = vmatprep.subr.mxu0 0.0
        %1334 = vmatpush1.msra.mxu0 0.0
        %1335 = vmatprep.subr.mxu0 0.0
        %1336 = vmatpush1.msra.mxu0 0.0
        %1337 = vmatprep.subr.mxu0 0.0
        %1338 = vmatpush1.msra.mxu0 0.0
        %1339 = vmatprep.mubr.f32.mxu0 0.0
        %1340 = vmatmul.mubr.f32.gmra.mrb[0].mxu0 %v1111
        %v1341 = vpop.f32.mrb[0].mxu0
        %v1342 = vadd.f32 %v1273, %v1341
        %v1343 = vpop.f32.mrb[0].mxu0
        %1344 = vdwg.mxu0
        %s1345 = scalar_lea.vmem %s995, 32
        %v1346 = vld [vmem:[%s1345] sm:$0xff]
        %v1347 = vld [vmem:[%s1345 + $0x8] sm:$0xff]
        %v1348 = vld [vmem:[%s1345 + $0x10] sm:$0xff]
        %v1349 = vld [vmem:[%s1345 + $0x18] sm:$0xff]
        %s1350 = scalar_lea.vmem %s999, 1
        %v1351 = vld [vmem:[%s1350] sm:$0x1]
        %v1353 = vlaneseq
        %v1354 = vshrl.u32 %v1353, 7
        %v1355 = vsub.s32 0, %v1354
        %v1356 = vrot.slane %v1351, %v1355
        %1358 = vmatprep.subr.mxu0 0.0
        %1359 = vmatpush1.msra.mxu0 %v1346
        %1360 = vmatprep.subr.mxu0 0.0
        %1361 = vmatpush1.msra.mxu0 %v1347
        %1362 = vmatprep.subr.mxu0 0.0
        %1363 = vmatpush1.msra.mxu0 %v1348
        %1364 = vmatprep.subr.mxu0 0.0
        %1365 = vmatpush1.msra.mxu0 %v1349
        %1366 = vmatprep.subr.mxu0 0.0
        %1367 = vmatpush1.msra.mxu0 0.0
        %1368 = vmatprep.subr.mxu0 0.0
        %1369 = vmatpush1.msra.mxu0 0.0
        %1370 = vmatprep.subr.mxu0 0.0
        %1371 = vmatpush1.msra.mxu0 0.0
        %1372 = vmatprep.subr.mxu0 0.0
        %1373 = vmatpush1.msra.mxu0 0.0
        %1374 = vmatprep.subr.mxu0 0.0
        %1375 = vmatpush1.msra.mxu0 0.0
        %1376 = vmatprep.subr.mxu0 0.0
        %1377 = vmatpush1.msra.mxu0 0.0
        %1378 = vmatprep.subr.mxu0 0.0
        %1379 = vmatpush1.msra.mxu0 0.0
        %1380 = vmatprep.subr.mxu0 0.0
        %1381 = vmatpush1.msra.mxu0 0.0
        %1382 = vmatprep.subr.mxu0 0.0
        %1383 = vmatpush1.msra.mxu0 0.0
        %1384 = vmatprep.subr.mxu0 0.0
        %1385 = vmatpush1.msra.mxu0 0.0
        %1386 = vmatprep.subr.mxu0 0.0
        %1387 = vmatpush1.msra.mxu0 0.0
        %1388 = vmatprep.subr.mxu0 0.0
        %1389 = vmatpush1.msra.mxu0 0.0
        %1390 = vmatprep.subr.mxu0 0.0
        %1391 = vmatpush1.msra.mxu0 0.0
        %1392 = vmatprep.subr.mxu0 0.0
        %1393 = vmatpush1.msra.mxu0 0.0
        %1394 = vmatprep.subr.mxu0 0.0
        %1395 = vmatpush1.msra.mxu0 0.0
        %1396 = vmatprep.subr.mxu0 0.0
        %1397 = vmatpush1.msra.mxu0 0.0
        %1398 = vmatprep.subr.mxu0 0.0
        %1399 = vmatpush1.msra.mxu0 0.0
        %1400 = vmatprep.subr.mxu0 0.0
        %1401 = vmatpush1.msra.mxu0 0.0
        %1402 = vmatprep.subr.mxu0 0.0
        %1403 = vmatpush1.msra.mxu0 0.0
        %1404 = vmatprep.subr.mxu0 0.0
        %1405 = vmatpush1.msra.mxu0 0.0
        %1406 = vmatprep.subr.mxu0 0.0
        %1407 = vmatpush1.msra.mxu0 0.0
        %1408 = vmatprep.subr.mxu0 0.0
        %1409 = vmatpush1.msra.mxu0 0.0
        %1410 = vmatprep.subr.mxu0 0.0
        %1411 = vmatpush1.msra.mxu0 0.0
        %1412 = vmatprep.subr.mxu0 0.0
        %1413 = vmatpush1.msra.mxu0 0.0
        %1414 = vmatprep.subr.mxu0 0.0
        %1415 = vmatpush1.msra.mxu0 0.0
        %1416 = vmatprep.subr.mxu0 0.0
        %1417 = vmatpush1.msra.mxu0 0.0
        %1418 = vmatprep.subr.mxu0 0.0
        %1419 = vmatpush1.msra.mxu0 0.0
        %1420 = vmatprep.subr.mxu0 0.0
        %1421 = vmatpush1.msra.mxu0 0.0
        %1422 = vmatprep.mubr.f32.mxu0 0.0
        %1423 = vmatmul.mubr.f32.gmra.mrb[0].mxu0 %v1111
        %v1424 = vpop.f32.mrb[0].mxu0
        %v1425 = vadd.f32 %v1356, %v1424
        %v1426 = vpop.f32.mrb[0].mxu0
        %1427 = vdwg.mxu0
        %s1428 = scalar_lea.vmem %s1004, 32
        %v1429 = vld [vmem:[%s1428] sm:$0xff]
        %v1430 = vld [vmem:[%s1428 + $0x8] sm:$0xff]
        %v1431 = vld [vmem:[%s1428 + $0x10] sm:$0xff]
        %v1432 = vld [vmem:[%s1428 + $0x18] sm:$0xff]
        %s1433 = scalar_lea.vmem %s1008, 1
        %v1434 = vld [vmem:[%s1433] sm:$0x1]
        %v1436 = vlaneseq
        %v1437 = vshrl.u32 %v1436, 7
        %v1438 = vsub.s32 0, %v1437
        %v1439 = vrot.slane %v1434, %v1438
        %1441 = vmatprep.subr.mxu0 0.0
        %1442 = vmatpush1.msra.mxu0 %v1429
        %1443 = vmatprep.subr.mxu0 0.0
        %1444 = vmatpush1.msra.mxu0 %v1430
        %1445 = vmatprep.subr.mxu0 0.0
        %1446 = vmatpush1.msra.mxu0 %v1431
        %1447 = vmatprep.subr.mxu0 0.0
        %1448 = vmatpush1.msra.mxu0 %v1432
        %1449 = vmatprep.subr.mxu0 0.0
        %1450 = vmatpush1.msra.mxu0 0.0
        %1451 = vmatprep.subr.mxu0 0.0
        %1452 = vmatpush1.msra.mxu0 0.0
        %1453 = vmatprep.subr.mxu0 0.0
        %1454 = vmatpush1.msra.mxu0 0.0
        %1455 = vmatprep.subr.mxu0 0.0
        %1456 = vmatpush1.msra.mxu0 0.0
        %1457 = vmatprep.subr.mxu0 0.0
        %1458 = vmatpush1.msra.mxu0 0.0
        %1459 = vmatprep.subr.mxu0 0.0
        %1460 = vmatpush1.msra.mxu0 0.0
        %1461 = vmatprep.subr.mxu0 0.0
        %1462 = vmatpush1.msra.mxu0 0.0
        %1463 = vmatprep.subr.mxu0 0.0
        %1464 = vmatpush1.msra.mxu0 0.0
        %1465 = vmatprep.subr.mxu0 0.0
        %1466 = vmatpush1.msra.mxu0 0.0
        %1467 = vmatprep.subr.mxu0 0.0
        %1468 = vmatpush1.msra.mxu0 0.0
        %1469 = vmatprep.subr.mxu0 0.0
        %1470 = vmatpush1.msra.mxu0 0.0
        %1471 = vmatprep.subr.mxu0 0.0
        %1472 = vmatpush1.msra.mxu0 0.0
        %1473 = vmatprep.subr.mxu0 0.0
        %1474 = vmatpush1.msra.mxu0 0.0
        %1475 = vmatprep.subr.mxu0 0.0
        %1476 = vmatpush1.msra.mxu0 0.0
        %1477 = vmatprep.subr.mxu0 0.0
        %1478 = vmatpush1.msra.mxu0 0.0
        %1479 = vmatprep.subr.mxu0 0.0
        %1480 = vmatpush1.msra.mxu0 0.0
        %1481 = vmatprep.subr.mxu0 0.0
        %1482 = vmatpush1.msra.mxu0 0.0
        %1483 = vmatprep.subr.mxu0 0.0
        %1484 = vmatpush1.msra.mxu0 0.0
        %1485 = vmatprep.subr.mxu0 0.0
        %1486 = vmatpush1.msra.mxu0 0.0
        %1487 = vmatprep.subr.mxu0 0.0
        %1488 = vmatpush1.msra.mxu0 0.0
        %1489 = vmatprep.subr.mxu0 0.0
        %1490 = vmatpush1.msra.mxu0 0.0
        %1491 = vmatprep.subr.mxu0 0.0
        %1492 = vmatpush1.msra.mxu0 0.0
        %1493 = vmatprep.subr.mxu0 0.0
        %1494 = vmatpush1.msra.mxu0 0.0
        %1495 = vmatprep.subr.mxu0 0.0
        %1496 = vmatpush1.msra.mxu0 0.0
        %1497 = vmatprep.subr.mxu0 0.0
        %1498 = vmatpush1.msra.mxu0 0.0
        %1499 = vmatprep.subr.mxu0 0.0
        %1500 = vmatpush1.msra.mxu0 0.0
        %1501 = vmatprep.subr.mxu0 0.0
        %1502 = vmatpush1.msra.mxu0 0.0
        %1503 = vmatprep.subr.mxu0 0.0
        %1504 = vmatpush1.msra.mxu0 0.0
        %1505 = vmatprep.mubr.f32.mxu0 0.0
        %1506 = vmatmul.mubr.f32.gmra.mrb[0].mxu0 %v1111
        %v1507 = vpop.f32.mrb[0].mxu0
        %v1508 = vadd.f32 %v1439, %v1507
        %v1509 = vpop.f32.mrb[0].mxu0
        %1510 = vdwg.mxu0
        %s1511 = scalar_lea.vmem %s1013, 32
        %v1512 = vld [vmem:[%s1511] sm:$0xff]
        %v1513 = vld [vmem:[%s1511 + $0x8] sm:$0xff]
        %v1514 = vld [vmem:[%s1511 + $0x10] sm:$0xff]
        %v1515 = vld [vmem:[%s1511 + $0x18] sm:$0xff]
        %s1516 = scalar_lea.vmem %s1017, 1
        %v1517 = vld [vmem:[%s1516] sm:$0x1]
        %v1519 = vlaneseq
        %v1520 = vshrl.u32 %v1519, 7
        %v1521 = vsub.s32 0, %v1520
        %v1522 = vrot.slane %v1517, %v1521
        %1524 = vmatprep.subr.mxu0 0.0
        %1525 = vmatpush1.msra.mxu0 %v1512
        %1526 = vmatprep.subr.mxu0 0.0
        %1527 = vmatpush1.msra.mxu0 %v1513
        %1528 = vmatprep.subr.mxu0 0.0
        %1529 = vmatpush1.msra.mxu0 %v1514
        %1530 = vmatprep.subr.mxu0 0.0
        %1531 = vmatpush1.msra.mxu0 %v1515
        %1532 = vmatprep.subr.mxu0 0.0
        %1533 = vmatpush1.msra.mxu0 0.0
        %1534 = vmatprep.subr.mxu0 0.0
        %1535 = vmatpush1.msra.mxu0 0.0
        %1536 = vmatprep.subr.mxu0 0.0
        %1537 = vmatpush1.msra.mxu0 0.0
        %1538 = vmatprep.subr.mxu0 0.0
        %1539 = vmatpush1.msra.mxu0 0.0
        %1540 = vmatprep.subr.mxu0 0.0
        %1541 = vmatpush1.msra.mxu0 0.0
        %1542 = vmatprep.subr.mxu0 0.0
        %1543 = vmatpush1.msra.mxu0 0.0
        %1544 = vmatprep.subr.mxu0 0.0
        %1545 = vmatpush1.msra.mxu0 0.0
        %1546 = vmatprep.subr.mxu0 0.0
        %1547 = vmatpush1.msra.mxu0 0.0
        %1548 = vmatprep.subr.mxu0 0.0
        %1549 = vmatpush1.msra.mxu0 0.0
        %1550 = vmatprep.subr.mxu0 0.0
        %1551 = vmatpush1.msra.mxu0 0.0
        %1552 = vmatprep.subr.mxu0 0.0
        %1553 = vmatpush1.msra.mxu0 0.0
        %1554 = vmatprep.subr.mxu0 0.0
        %1555 = vmatpush1.msra.mxu0 0.0
        %1556 = vmatprep.subr.mxu0 0.0
        %1557 = vmatpush1.msra.mxu0 0.0
        %1558 = vmatprep.subr.mxu0 0.0
        %1559 = vmatpush1.msra.mxu0 0.0
        %1560 = vmatprep.subr.mxu0 0.0
        %1561 = vmatpush1.msra.mxu0 0.0
        %1562 = vmatprep.subr.mxu0 0.0
        %1563 = vmatpush1.msra.mxu0 0.0
        %1564 = vmatprep.subr.mxu0 0.0
        %1565 = vmatpush1.msra.mxu0 0.0
        %1566 = vmatprep.subr.mxu0 0.0
        %1567 = vmatpush1.msra.mxu0 0.0
        %1568 = vmatprep.subr.mxu0 0.0
        %1569 = vmatpush1.msra.mxu0 0.0
        %1570 = vmatprep.subr.mxu0 0.0
        %1571 = vmatpush1.msra.mxu0 0.0
        %1572 = vmatprep.subr.mxu0 0.0
        %1573 = vmatpush1.msra.mxu0 0.0
        %1574 = vmatprep.subr.mxu0 0.0
        %1575 = vmatpush1.msra.mxu0 0.0
        %1576 = vmatprep.subr.mxu0 0.0
        %1577 = vmatpush1.msra.mxu0 0.0
        %1578 = vmatprep.subr.mxu0 0.0
        %1579 = vmatpush1.msra.mxu0 0.0
        %1580 = vmatprep.subr.mxu0 0.0
        %1581 = vmatpush1.msra.mxu0 0.0
        %1582 = vmatprep.subr.mxu0 0.0
        %1583 = vmatpush1.msra.mxu0 0.0
        %1584 = vmatprep.subr.mxu0 0.0
        %1585 = vmatpush1.msra.mxu0 0.0
        %1586 = vmatprep.subr.mxu0 0.0
        %1587 = vmatpush1.msra.mxu0 0.0
        %1588 = vmatprep.mubr.f32.mxu0 0.0
        %1589 = vmatmul.mubr.f32.gmra.mrb[0].mxu0 %v1111
        %v1590 = vpop.f32.mrb[0].mxu0
        %v1591 = vadd.f32 %v1522, %v1590
        %v1592 = vpop.f32.mrb[0].mxu0
        %1593 = vdwg.mxu0
        %s1594 = scalar_lea.vmem %s995, 64
        %v1595 = vld [vmem:[%s1594] sm:$0xff]
        %v1596 = vld [vmem:[%s1594 + $0x8] sm:$0xff]
        %v1597 = vld [vmem:[%s1594 + $0x10] sm:$0xff]
        %v1598 = vld [vmem:[%s1594 + $0x18] sm:$0xff]
        %s1599 = scalar_lea.vmem %s999, 2
        %v1600 = vld [vmem:[%s1599] sm:$0x1]
        %v1602 = vlaneseq
        %v1603 = vshrl.u32 %v1602, 7
        %v1604 = vsub.s32 0, %v1603
        %v1605 = vrot.slane %v1600, %v1604
        %1607 = vmatprep.subr.mxu0 0.0
        %1608 = vmatpush1.msra.mxu0 %v1595
        %1609 = vmatprep.subr.mxu0 0.0
        %1610 = vmatpush1.msra.mxu0 %v1596
        %1611 = vmatprep.subr.mxu0 0.0
        %1612 = vmatpush1.msra.mxu0 %v1597
        %1613 = vmatprep.subr.mxu0 0.0
        %1614 = vmatpush1.msra.mxu0 %v1598
        %1615 = vmatprep.subr.mxu0 0.0
        %1616 = vmatpush1.msra.mxu0 0.0
        %1617 = vmatprep.subr.mxu0 0.0
        %1618 = vmatpush1.msra.mxu0 0.0
        %1619 = vmatprep.subr.mxu0 0.0
        %1620 = vmatpush1.msra.mxu0 0.0
        %1621 = vmatprep.subr.mxu0 0.0
        %1622 = vmatpush1.msra.mxu0 0.0
        %1623 = vmatprep.subr.mxu0 0.0
        %1624 = vmatpush1.msra.mxu0 0.0
        %1625 = vmatprep.subr.mxu0 0.0
        %1626 = vmatpush1.msra.mxu0 0.0
        %1627 = vmatprep.subr.mxu0 0.0
        %1628 = vmatpush1.msra.mxu0 0.0
        %1629 = vmatprep.subr.mxu0 0.0
        %1630 = vmatpush1.msra.mxu0 0.0
        %1631 = vmatprep.subr.mxu0 0.0
        %1632 = vmatpush1.msra.mxu0 0.0
        %1633 = vmatprep.subr.mxu0 0.0
        %1634 = vmatpush1.msra.mxu0 0.0
        %1635 = vmatprep.subr.mxu0 0.0
        %1636 = vmatpush1.msra.mxu0 0.0
        %1637 = vmatprep.subr.mxu0 0.0
        %1638 = vmatpush1.msra.mxu0 0.0
        %1639 = vmatprep.subr.mxu0 0.0
        %1640 = vmatpush1.msra.mxu0 0.0
        %1641 = vmatprep.subr.mxu0 0.0
        %1642 = vmatpush1.msra.mxu0 0.0
        %1643 = vmatprep.subr.mxu0 0.0
        %1644 = vmatpush1.msra.mxu0 0.0
        %1645 = vmatprep.subr.mxu0 0.0
        %1646 = vmatpush1.msra.mxu0 0.0
        %1647 = vmatprep.subr.mxu0 0.0
        %1648 = vmatpush1.msra.mxu0 0.0
        %1649 = vmatprep.subr.mxu0 0.0
        %1650 = vmatpush1.msra.mxu0 0.0
        %1651 = vmatprep.subr.mxu0 0.0
        %1652 = vmatpush1.msra.mxu0 0.0
        %1653 = vmatprep.subr.mxu0 0.0
        %1654 = vmatpush1.msra.mxu0 0.0
        %1655 = vmatprep.subr.mxu0 0.0
        %1656 = vmatpush1.msra.mxu0 0.0
        %1657 = vmatprep.subr.mxu0 0.0
        %1658 = vmatpush1.msra.mxu0 0.0
        %1659 = vmatprep.subr.mxu0 0.0
        %1660 = vmatpush1.msra.mxu0 0.0
        %1661 = vmatprep.subr.mxu0 0.0
        %1662 = vmatpush1.msra.mxu0 0.0
        %1663 = vmatprep.subr.mxu0 0.0
        %1664 = vmatpush1.msra.mxu0 0.0
        %1665 = vmatprep.subr.mxu0 0.0
        %1666 = vmatpush1.msra.mxu0 0.0
        %1667 = vmatprep.subr.mxu0 0.0
        %1668 = vmatpush1.msra.mxu0 0.0
        %1669 = vmatprep.subr.mxu0 0.0
        %1670 = vmatpush1.msra.mxu0 0.0
        %1671 = vmatprep.mubr.f32.mxu0 0.0
        %1672 = vmatmul.mubr.f32.gmra.mrb[0].mxu0 %v1111
        %v1673 = vpop.f32.mrb[0].mxu0
        %v1674 = vadd.f32 %v1605, %v1673
        %v1675 = vpop.f32.mrb[0].mxu0
        %1676 = vdwg.mxu0
        %s1677 = scalar_lea.vmem %s1004, 64
        %v1678 = vld [vmem:[%s1677] sm:$0xff]
        %v1679 = vld [vmem:[%s1677 + $0x8] sm:$0xff]
        %v1680 = vld [vmem:[%s1677 + $0x10] sm:$0xff]
        %v1681 = vld [vmem:[%s1677 + $0x18] sm:$0xff]
        %s1682 = scalar_lea.vmem %s1008, 2
        %v1683 = vld [vmem:[%s1682] sm:$0x1]
        %v1685 = vlaneseq
        %v1686 = vshrl.u32 %v1685, 7
        %v1687 = vsub.s32 0, %v1686
        %v1688 = vrot.slane %v1683, %v1687
        %1690 = vmatprep.subr.mxu0 0.0
        %1691 = vmatpush1.msra.mxu0 %v1678
        %1692 = vmatprep.subr.mxu0 0.0
        %1693 = vmatpush1.msra.mxu0 %v1679
        %1694 = vmatprep.subr.mxu0 0.0
        %1695 = vmatpush1.msra.mxu0 %v1680
        %1696 = vmatprep.subr.mxu0 0.0
        %1697 = vmatpush1.msra.mxu0 %v1681
        %1698 = vmatprep.subr.mxu0 0.0
        %1699 = vmatpush1.msra.mxu0 0.0
        %1700 = vmatprep.subr.mxu0 0.0
        %1701 = vmatpush1.msra.mxu0 0.0
        %1702 = vmatprep.subr.mxu0 0.0
        %1703 = vmatpush1.msra.mxu0 0.0
        %1704 = vmatprep.subr.mxu0 0.0
        %1705 = vmatpush1.msra.mxu0 0.0
        %1706 = vmatprep.subr.mxu0 0.0
        %1707 = vmatpush1.msra.mxu0 0.0
        %1708 = vmatprep.subr.mxu0 0.0
        %1709 = vmatpush1.msra.mxu0 0.0
        %1710 = vmatprep.subr.mxu0 0.0
        %1711 = vmatpush1.msra.mxu0 0.0
        %1712 = vmatprep.subr.mxu0 0.0
        %1713 = vmatpush1.msra.mxu0 0.0
        %1714 = vmatprep.subr.mxu0 0.0
        %1715 = vmatpush1.msra.mxu0 0.0
        %1716 = vmatprep.subr.mxu0 0.0
        %1717 = vmatpush1.msra.mxu0 0.0
        %1718 = vmatprep.subr.mxu0 0.0
        %1719 = vmatpush1.msra.mxu0 0.0
        %1720 = vmatprep.subr.mxu0 0.0
        %1721 = vmatpush1.msra.mxu0 0.0
        %1722 = vmatprep.subr.mxu0 0.0
        %1723 = vmatpush1.msra.mxu0 0.0
        %1724 = vmatprep.subr.mxu0 0.0
        %1725 = vmatpush1.msra.mxu0 0.0
        %1726 = vmatprep.subr.mxu0 0.0
        %1727 = vmatpush1.msra.mxu0 0.0
        %1728 = vmatprep.subr.mxu0 0.0
        %1729 = vmatpush1.msra.mxu0 0.0
        %1730 = vmatprep.subr.mxu0 0.0
        %1731 = vmatpush1.msra.mxu0 0.0
        %1732 = vmatprep.subr.mxu0 0.0
        %1733 = vmatpush1.msra.mxu0 0.0
        %1734 = vmatprep.subr.mxu0 0.0
        %1735 = vmatpush1.msra.mxu0 0.0
        %1736 = vmatprep.subr.mxu0 0.0
        %1737 = vmatpush1.msra.mxu0 0.0
        %1738 = vmatprep.subr.mxu0 0.0
        %1739 = vmatpush1.msra.mxu0 0.0
        %1740 = vmatprep.subr.mxu0 0.0
        %1741 = vmatpush1.msra.mxu0 0.0
        %1742 = vmatprep.subr.mxu0 0.0
        %1743 = vmatpush1.msra.mxu0 0.0
        %1744 = vmatprep.subr.mxu0 0.0
        %1745 = vmatpush1.msra.mxu0 0.0
        %1746 = vmatprep.subr.mxu0 0.0
        %1747 = vmatpush1.msra.mxu0 0.0
        %1748 = vmatprep.subr.mxu0 0.0
        %1749 = vmatpush1.msra.mxu0 0.0
        %1750 = vmatprep.subr.mxu0 0.0
        %1751 = vmatpush1.msra.mxu0 0.0
        %1752 = vmatprep.subr.mxu0 0.0
        %1753 = vmatpush1.msra.mxu0 0.0
        %1754 = vmatprep.mubr.f32.mxu0 0.0
        %1755 = vmatmul.mubr.f32.gmra.mrb[0].mxu0 %v1111
        %v1756 = vpop.f32.mrb[0].mxu0
        %v1757 = vadd.f32 %v1688, %v1756
        %v1758 = vpop.f32.mrb[0].mxu0
        %1759 = vdwg.mxu0
        %s1760 = scalar_lea.vmem %s1013, 64
        %v1761 = vld [vmem:[%s1760] sm:$0xff]
        %v1762 = vld [vmem:[%s1760 + $0x8] sm:$0xff]
        %v1763 = vld [vmem:[%s1760 + $0x10] sm:$0xff]
        %v1764 = vld [vmem:[%s1760 + $0x18] sm:$0xff]
        %s1765 = scalar_lea.vmem %s1017, 2
        %v1766 = vld [vmem:[%s1765] sm:$0x1]
        %v1768 = vlaneseq
        %v1769 = vshrl.u32 %v1768, 7
        %v1770 = vsub.s32 0, %v1769
        %v1771 = vrot.slane %v1766, %v1770
        %1773 = vmatprep.subr.mxu0 0.0
        %1774 = vmatpush1.msra.mxu0 %v1761
        %1775 = vmatprep.subr.mxu0 0.0
        %1776 = vmatpush1.msra.mxu0 %v1762
        %1777 = vmatprep.subr.mxu0 0.0
        %1778 = vmatpush1.msra.mxu0 %v1763
        %1779 = vmatprep.subr.mxu0 0.0
        %1780 = vmatpush1.msra.mxu0 %v1764
        %1781 = vmatprep.subr.mxu0 0.0
        %1782 = vmatpush1.msra.mxu0 0.0
        %1783 = vmatprep.subr.mxu0 0.0
        %1784 = vmatpush1.msra.mxu0 0.0
        %1785 = vmatprep.subr.mxu0 0.0
        %1786 = vmatpush1.msra.mxu0 0.0
        %1787 = vmatprep.subr.mxu0 0.0
        %1788 = vmatpush1.msra.mxu0 0.0
        %1789 = vmatprep.subr.mxu0 0.0
        %1790 = vmatpush1.msra.mxu0 0.0
        %1791 = vmatprep.subr.mxu0 0.0
        %1792 = vmatpush1.msra.mxu0 0.0
        %1793 = vmatprep.subr.mxu0 0.0
        %1794 = vmatpush1.msra.mxu0 0.0
        %1795 = vmatprep.subr.mxu0 0.0
        %1796 = vmatpush1.msra.mxu0 0.0
        %1797 = vmatprep.subr.mxu0 0.0
        %1798 = vmatpush1.msra.mxu0 0.0
        %1799 = vmatprep.subr.mxu0 0.0
        %1800 = vmatpush1.msra.mxu0 0.0
        %1801 = vmatprep.subr.mxu0 0.0
        %1802 = vmatpush1.msra.mxu0 0.0
        %1803 = vmatprep.subr.mxu0 0.0
        %1804 = vmatpush1.msra.mxu0 0.0
        %1805 = vmatprep.subr.mxu0 0.0
        %1806 = vmatpush1.msra.mxu0 0.0
        %1807 = vmatprep.subr.mxu0 0.0
        %1808 = vmatpush1.msra.mxu0 0.0
        %1809 = vmatprep.subr.mxu0 0.0
        %1810 = vmatpush1.msra.mxu0 0.0
        %1811 = vmatprep.subr.mxu0 0.0
        %1812 = vmatpush1.msra.mxu0 0.0
        %1813 = vmatprep.subr.mxu0 0.0
        %1814 = vmatpush1.msra.mxu0 0.0
        %1815 = vmatprep.subr.mxu0 0.0
        %1816 = vmatpush1.msra.mxu0 0.0
        %1817 = vmatprep.subr.mxu0 0.0
        %1818 = vmatpush1.msra.mxu0 0.0
        %1819 = vmatprep.subr.mxu0 0.0
        %1820 = vmatpush1.msra.mxu0 0.0
        %1821 = vmatprep.subr.mxu0 0.0
        %1822 = vmatpush1.msra.mxu0 0.0
        %1823 = vmatprep.subr.mxu0 0.0
        %1824 = vmatpush1.msra.mxu0 0.0
        %1825 = vmatprep.subr.mxu0 0.0
        %1826 = vmatpush1.msra.mxu0 0.0
        %1827 = vmatprep.subr.mxu0 0.0
        %1828 = vmatpush1.msra.mxu0 0.0
        %1829 = vmatprep.subr.mxu0 0.0
        %1830 = vmatpush1.msra.mxu0 0.0
        %1831 = vmatprep.subr.mxu0 0.0
        %1832 = vmatpush1.msra.mxu0 0.0
        %1833 = vmatprep.subr.mxu0 0.0
        %1834 = vmatpush1.msra.mxu0 0.0
        %1835 = vmatprep.subr.mxu0 0.0
        %1836 = vmatpush1.msra.mxu0 0.0
        %1837 = vmatprep.mubr.f32.mxu0 0.0
        %1838 = vmatmul.mubr.f32.gmra.mrb[0].mxu0 %v1111
        %v1839 = vpop.f32.mrb[0].mxu0
        %v1840 = vadd.f32 %v1771, %v1839
        %v1841 = vpop.f32.mrb[0].mxu0
        %1842 = vdwg.mxu0
        %s1843 = scalar_lea.vmem %s995, 96
        %v1844 = vld [vmem:[%s1843] sm:$0xff]
        %v1845 = vld [vmem:[%s1843 + $0x8] sm:$0xff]
        %v1846 = vld [vmem:[%s1843 + $0x10] sm:$0xff]
        %v1847 = vld [vmem:[%s1843 + $0x18] sm:$0xff]
        %s1848 = scalar_lea.vmem %s999, 3
        %v1849 = vld [vmem:[%s1848] sm:$0x1]
        %v1851 = vlaneseq
        %v1852 = vshrl.u32 %v1851, 7
        %v1853 = vsub.s32 0, %v1852
        %v1854 = vrot.slane %v1849, %v1853
        %1856 = vmatprep.subr.mxu0 0.0
        %1857 = vmatpush1.msra.mxu0 %v1844
        %1858 = vmatprep.subr.mxu0 0.0
        %1859 = vmatpush1.msra.mxu0 %v1845
        %1860 = vmatprep.subr.mxu0 0.0
        %1861 = vmatpush1.msra.mxu0 %v1846
        %1862 = vmatprep.subr.mxu0 0.0
        %1863 = vmatpush1.msra.mxu0 %v1847
        %1864 = vmatprep.subr.mxu0 0.0
        %1865 = vmatpush1.msra.mxu0 0.0
        %1866 = vmatprep.subr.mxu0 0.0
        %1867 = vmatpush1.msra.mxu0 0.0
        %1868 = vmatprep.subr.mxu0 0.0
        %1869 = vmatpush1.msra.mxu0 0.0
        %1870 = vmatprep.subr.mxu0 0.0
        %1871 = vmatpush1.msra.mxu0 0.0
        %1872 = vmatprep.subr.mxu0 0.0
        %1873 = vmatpush1.msra.mxu0 0.0
        %1874 = vmatprep.subr.mxu0 0.0
        %1875 = vmatpush1.msra.mxu0 0.0
        %1876 = vmatprep.subr.mxu0 0.0
        %1877 = vmatpush1.msra.mxu0 0.0
        %1878 = vmatprep.subr.mxu0 0.0
        %1879 = vmatpush1.msra.mxu0 0.0
        %1880 = vmatprep.subr.mxu0 0.0
        %1881 = vmatpush1.msra.mxu0 0.0
        %1882 = vmatprep.subr.mxu0 0.0
        %1883 = vmatpush1.msra.mxu0 0.0
        %1884 = vmatprep.subr.mxu0 0.0
        %1885 = vmatpush1.msra.mxu0 0.0
        %1886 = vmatprep.subr.mxu0 0.0
        %1887 = vmatpush1.msra.mxu0 0.0
        %1888 = vmatprep.subr.mxu0 0.0
        %1889 = vmatpush1.msra.mxu0 0.0
        %1890 = vmatprep.subr.mxu0 0.0
        %1891 = vmatpush1.msra.mxu0 0.0
        %1892 = vmatprep.subr.mxu0 0.0
        %1893 = vmatpush1.msra.mxu0 0.0
        %1894 = vmatprep.subr.mxu0 0.0
        %1895 = vmatpush1.msra.mxu0 0.0
        %1896 = vmatprep.subr.mxu0 0.0
        %1897 = vmatpush1.msra.mxu0 0.0
        %1898 = vmatprep.subr.mxu0 0.0
        %1899 = vmatpush1.msra.mxu0 0.0
        %1900 = vmatprep.subr.mxu0 0.0
        %1901 = vmatpush1.msra.mxu0 0.0
        %1902 = vmatprep.subr.mxu0 0.0
        %1903 = vmatpush1.msra.mxu0 0.0
        %1904 = vmatprep.subr.mxu0 0.0
        %1905 = vmatpush1.msra.mxu0 0.0
        %1906 = vmatprep.subr.mxu0 0.0
        %1907 = vmatpush1.msra.mxu0 0.0
        %1908 = vmatprep.subr.mxu0 0.0
        %1909 = vmatpush1.msra.mxu0 0.0
        %1910 = vmatprep.subr.mxu0 0.0
        %1911 = vmatpush1.msra.mxu0 0.0
        %1912 = vmatprep.subr.mxu0 0.0
        %1913 = vmatpush1.msra.mxu0 0.0
        %1914 = vmatprep.subr.mxu0 0.0
        %1915 = vmatpush1.msra.mxu0 0.0
        %1916 = vmatprep.subr.mxu0 0.0
        %1917 = vmatpush1.msra.mxu0 0.0
        %1918 = vmatprep.subr.mxu0 0.0
        %1919 = vmatpush1.msra.mxu0 0.0
        %1920 = vmatprep.mubr.f32.mxu0 0.0
        %1921 = vmatmul.mubr.f32.gmra.mrb[0].mxu0 %v1111
        %v1922 = vpop.f32.mrb[0].mxu0
        %v1923 = vadd.f32 %v1854, %v1922
        %v1924 = vpop.f32.mrb[0].mxu0
        %1925 = vdwg.mxu0
        %s1926 = scalar_lea.vmem %s1004, 96
        %v1927 = vld [vmem:[%s1926] sm:$0xff]
        %v1928 = vld [vmem:[%s1926 + $0x8] sm:$0xff]
        %v1929 = vld [vmem:[%s1926 + $0x10] sm:$0xff]
        %v1930 = vld [vmem:[%s1926 + $0x18] sm:$0xff]
        %s1931 = scalar_lea.vmem %s1008, 3
        %v1932 = vld [vmem:[%s1931] sm:$0x1]
        %v1934 = vlaneseq
        %v1935 = vshrl.u32 %v1934, 7
        %v1936 = vsub.s32 0, %v1935
        %v1937 = vrot.slane %v1932, %v1936
        %1939 = vmatprep.subr.mxu0 0.0
        %1940 = vmatpush1.msra.mxu0 %v1927
        %1941 = vmatprep.subr.mxu0 0.0
        %1942 = vmatpush1.msra.mxu0 %v1928
        %1943 = vmatprep.subr.mxu0 0.0
        %1944 = vmatpush1.msra.mxu0 %v1929
        %1945 = vmatprep.subr.mxu0 0.0
        %1946 = vmatpush1.msra.mxu0 %v1930
        %1947 = vmatprep.subr.mxu0 0.0
        %1948 = vmatpush1.msra.mxu0 0.0
        %1949 = vmatprep.subr.mxu0 0.0
        %1950 = vmatpush1.msra.mxu0 0.0
        %1951 = vmatprep.subr.mxu0 0.0
        %1952 = vmatpush1.msra.mxu0 0.0
        %1953 = vmatprep.subr.mxu0 0.0
        %1954 = vmatpush1.msra.mxu0 0.0
        %1955 = vmatprep.subr.mxu0 0.0
        %1956 = vmatpush1.msra.mxu0 0.0
        %1957 = vmatprep.subr.mxu0 0.0
        %1958 = vmatpush1.msra.mxu0 0.0
        %1959 = vmatprep.subr.mxu0 0.0
        %1960 = vmatpush1.msra.mxu0 0.0
        %1961 = vmatprep.subr.mxu0 0.0
        %1962 = vmatpush1.msra.mxu0 0.0
        %1963 = vmatprep.subr.mxu0 0.0
        %1964 = vmatpush1.msra.mxu0 0.0
        %1965 = vmatprep.subr.mxu0 0.0
        %1966 = vmatpush1.msra.mxu0 0.0
        %1967 = vmatprep.subr.mxu0 0.0
        %1968 = vmatpush1.msra.mxu0 0.0
        %1969 = vmatprep.subr.mxu0 0.0
        %1970 = vmatpush1.msra.mxu0 0.0
        %1971 = vmatprep.subr.mxu0 0.0
        %1972 = vmatpush1.msra.mxu0 0.0
        %1973 = vmatprep.subr.mxu0 0.0
        %1974 = vmatpush1.msra.mxu0 0.0
        %1975 = vmatprep.subr.mxu0 0.0
        %1976 = vmatpush1.msra.mxu0 0.0
        %1977 = vmatprep.subr.mxu0 0.0
        %1978 = vmatpush1.msra.mxu0 0.0
        %1979 = vmatprep.subr.mxu0 0.0
        %1980 = vmatpush1.msra.mxu0 0.0
        %1981 = vmatprep.subr.mxu0 0.0
        %1982 = vmatpush1.msra.mxu0 0.0
        %1983 = vmatprep.subr.mxu0 0.0
        %1984 = vmatpush1.msra.mxu0 0.0
        %1985 = vmatprep.subr.mxu0 0.0
        %1986 = vmatpush1.msra.mxu0 0.0
        %1987 = vmatprep.subr.mxu0 0.0
        %1988 = vmatpush1.msra.mxu0 0.0
        %1989 = vmatprep.subr.mxu0 0.0
        %1990 = vmatpush1.msra.mxu0 0.0
        %1991 = vmatprep.subr.mxu0 0.0
        %1992 = vmatpush1.msra.mxu0 0.0
        %1993 = vmatprep.subr.mxu0 0.0
        %1994 = vmatpush1.msra.mxu0 0.0
        %1995 = vmatprep.subr.mxu0 0.0
        %1996 = vmatpush1.msra.mxu0 0.0
        %1997 = vmatprep.subr.mxu0 0.0
        %1998 = vmatpush1.msra.mxu0 0.0
        %1999 = vmatprep.subr.mxu0 0.0
        %2000 = vmatpush1.msra.mxu0 0.0
        %2001 = vmatprep.subr.mxu0 0.0
        %2002 = vmatpush1.msra.mxu0 0.0
        %2003 = vmatprep.mubr.f32.mxu0 0.0
        %2004 = vmatmul.mubr.f32.gmra.mrb[0].mxu0 %v1111
        %v2005 = vpop.f32.mrb[0].mxu0
        %v2006 = vadd.f32 %v1937, %v2005
        %v2007 = vpop.f32.mrb[0].mxu0
        %2008 = vdwg.mxu0
        %s2009 = scalar_lea.vmem %s1013, 96
        %v2010 = vld [vmem:[%s2009] sm:$0xff]
        %v2011 = vld [vmem:[%s2009 + $0x8] sm:$0xff]
        %v2012 = vld [vmem:[%s2009 + $0x10] sm:$0xff]
        %v2013 = vld [vmem:[%s2009 + $0x18] sm:$0xff]
        %s2014 = scalar_lea.vmem %s1017, 3
        %v2015 = vld [vmem:[%s2014] sm:$0x1]
        %v2017 = vlaneseq
        %v2018 = vshrl.u32 %v2017, 7
        %v2019 = vsub.s32 0, %v2018
        %v2020 = vrot.slane %v2015, %v2019
        %2022 = vmatprep.subr.mxu0 0.0
        %2023 = vmatpush1.msra.mxu0 %v2010
        %2024 = vmatprep.subr.mxu0 0.0
        %2025 = vmatpush1.msra.mxu0 %v2011
        %2026 = vmatprep.subr.mxu0 0.0
        %2027 = vmatpush1.msra.mxu0 %v2012
        %2028 = vmatprep.subr.mxu0 0.0
        %2029 = vmatpush1.msra.mxu0 %v2013
        %2030 = vmatprep.subr.mxu0 0.0
        %2031 = vmatpush1.msra.mxu0 0.0
        %2032 = vmatprep.subr.mxu0 0.0
        %2033 = vmatpush1.msra.mxu0 0.0
        %2034 = vmatprep.subr.mxu0 0.0
        %2035 = vmatpush1.msra.mxu0 0.0
        %2036 = vmatprep.subr.mxu0 0.0
        %2037 = vmatpush1.msra.mxu0 0.0
        %2038 = vmatprep.subr.mxu0 0.0
        %2039 = vmatpush1.msra.mxu0 0.0
        %2040 = vmatprep.subr.mxu0 0.0
        %2041 = vmatpush1.msra.mxu0 0.0
        %2042 = vmatprep.subr.mxu0 0.0
        %2043 = vmatpush1.msra.mxu0 0.0
        %2044 = vmatprep.subr.mxu0 0.0
        %2045 = vmatpush1.msra.mxu0 0.0
        %2046 = vmatprep.subr.mxu0 0.0
        %2047 = vmatpush1.msra.mxu0 0.0
        %2048 = vmatprep.subr.mxu0 0.0
        %2049 = vmatpush1.msra.mxu0 0.0
        %2050 = vmatprep.subr.mxu0 0.0
        %2051 = vmatpush1.msra.mxu0 0.0
        %2052 = vmatprep.subr.mxu0 0.0
        %2053 = vmatpush1.msra.mxu0 0.0
        %2054 = vmatprep.subr.mxu0 0.0
        %2055 = vmatpush1.msra.mxu0 0.0
        %2056 = vmatprep.subr.mxu0 0.0
        %2057 = vmatpush1.msra.mxu0 0.0
        %2058 = vmatprep.subr.mxu0 0.0
        %2059 = vmatpush1.msra.mxu0 0.0
        %2060 = vmatprep.subr.mxu0 0.0
        %2061 = vmatpush1.msra.mxu0 0.0
        %2062 = vmatprep.subr.mxu0 0.0
        %2063 = vmatpush1.msra.mxu0 0.0
        %2064 = vmatprep.subr.mxu0 0.0
        %2065 = vmatpush1.msra.mxu0 0.0
        %2066 = vmatprep.subr.mxu0 0.0
        %2067 = vmatpush1.msra.mxu0 0.0
        %2068 = vmatprep.subr.mxu0 0.0
        %2069 = vmatpush1.msra.mxu0 0.0
        %2070 = vmatprep.subr.mxu0 0.0
        %2071 = vmatpush1.msra.mxu0 0.0
        %2072 = vmatprep.subr.mxu0 0.0
        %2073 = vmatpush1.msra.mxu0 0.0
        %2074 = vmatprep.subr.mxu0 0.0
        %2075 = vmatpush1.msra.mxu0 0.0
        %2076 = vmatprep.subr.mxu0 0.0
        %2077 = vmatpush1.msra.mxu0 0.0
        %2078 = vmatprep.subr.mxu0 0.0
        %2079 = vmatpush1.msra.mxu0 0.0
        %2080 = vmatprep.subr.mxu0 0.0
        %2081 = vmatpush1.msra.mxu0 0.0
        %2082 = vmatprep.subr.mxu0 0.0
        %2083 = vmatpush1.msra.mxu0 0.0
        %2084 = vmatprep.subr.mxu0 0.0
        %2085 = vmatpush1.msra.mxu0 0.0
        %2086 = vmatprep.mubr.f32.mxu0 0.0
        %2087 = vmatmul.mubr.f32.gmra.mrb[0].mxu0 %v1111
        %v2088 = vpop.f32.mrb[0].mxu0
        %v2089 = vadd.f32 %v2020, %v2088
        %v2090 = vpop.f32.mrb[0].mxu0
        %2091 = vdwg.mxu0
        %v2093 = vlaneseq
        %v2094 = vshrl.u32 %v2093, 7
        %v2095 = vsub.s32 0, %v2094
        %v2096 = vrot.slane %v1097, %v2095
        %vm2098 = vcmask 64512
        %v2100 = vsel %vm2098, %v1180, 0
        %v2103 = vsel %vm2098, %v1261, 0
        %2105 = vmatprep.subr.mxu0 0.0
        %2106 = vmatpush1.xpose.msra.mxu0 %v2103
        %2107 = vmatprep.subr.mxu0 0.0
        %2108 = vmatpush1.xpose.msra.mxu0 0.0
        %2109 = vmatprep.subr.mxu0 0.0
        %2110 = vmatpush1.xpose.msra.mxu0 0.0
        %2111 = vmatprep.subr.mxu0 0.0
        %2112 = vmatpush1.xpose.msra.mxu0 0.0
        %2113 = vmatprep.subr.mxu0 0.0
        %2114 = vmatpush1.xpose.msra.mxu0 0.0
        %2115 = vmatprep.subr.mxu0 0.0
        %2116 = vmatpush1.xpose.msra.mxu0 0.0
        %2117 = vmatprep.subr.mxu0 0.0
        %2118 = vmatpush1.xpose.msra.mxu0 0.0
        %2119 = vmatprep.subr.mxu0 0.0
        %2120 = vmatpush1.xpose.msra.mxu0 0.0
        %2121 = vmatprep.subr.mxu0 0.0
        %2122 = vmatpush1.xpose.msra.mxu0 0.0
        %2123 = vmatprep.subr.mxu0 0.0
        %2124 = vmatpush1.xpose.msra.mxu0 0.0
        %2125 = vmatprep.subr.mxu0 0.0
        %2126 = vmatpush1.xpose.msra.mxu0 0.0
        %2127 = vmatprep.subr.mxu0 0.0
        %2128 = vmatpush1.xpose.msra.mxu0 0.0
        %2129 = vmatprep.subr.mxu0 0.0
        %2130 = vmatpush1.xpose.msra.mxu0 0.0
        %2131 = vmatprep.subr.mxu0 0.0
        %2132 = vmatpush1.xpose.msra.mxu0 0.0
        %2133 = vmatprep.subr.mxu0 0.0
        %2134 = vmatpush1.xpose.msra.mxu0 0.0
        %2135 = vmatprep.subr.mxu0 0.0
        %2136 = vmatpush1.xpose.msra.mxu0 0.0
        %2137 = vmatprep.subr.mxu0 0.0
        %2138 = vmatpush1.xpose.msra.mxu0 0.0
        %2139 = vmatprep.subr.mxu0 0.0
        %2140 = vmatpush1.xpose.msra.mxu0 0.0
        %2141 = vmatprep.subr.mxu0 0.0
        %2142 = vmatpush1.xpose.msra.mxu0 0.0
        %2143 = vmatprep.subr.mxu0 0.0
        %2144 = vmatpush1.xpose.msra.mxu0 0.0
        %2145 = vmatprep.subr.mxu0 0.0
        %2146 = vmatpush1.xpose.msra.mxu0 0.0
        %2147 = vmatprep.subr.mxu0 0.0
        %2148 = vmatpush1.xpose.msra.mxu0 0.0
        %2149 = vmatprep.subr.mxu0 0.0
        %2150 = vmatpush1.xpose.msra.mxu0 0.0
        %2151 = vmatprep.subr.mxu0 0.0
        %2152 = vmatpush1.xpose.msra.mxu0 0.0
        %2153 = vmatprep.subr.mxu0 0.0
        %2154 = vmatpush1.xpose.msra.mxu0 0.0
        %2155 = vmatprep.subr.mxu0 0.0
        %2156 = vmatpush1.xpose.msra.mxu0 0.0
        %2157 = vmatprep.subr.mxu0 0.0
        %2158 = vmatpush1.xpose.msra.mxu0 0.0
        %2159 = vmatprep.subr.mxu0 0.0
        %2160 = vmatpush1.xpose.msra.mxu0 0.0
        %2161 = vmatprep.subr.mxu0 0.0
        %2162 = vmatpush1.xpose.msra.mxu0 0.0
        %2163 = vmatprep.subr.mxu0 0.0
        %2164 = vmatpush1.xpose.msra.mxu0 0.0
        %2165 = vmatprep.subr.mxu0 0.0
        %2166 = vmatpush1.xpose.msra.mxu0 0.0
        %2167 = vmatprep.subr.mxu0 0.0
        %2168 = vmatpush1.xpose.msra.mxu0 0.0
        %2169 = vmatprep.mubr.f32.mxu0 0.0
        %2170 = vmatmul.mubr.f32.gmra.mrb[0].mxu0 %v2100
        %v2171 = vpop.f32.mrb[0].mxu0
        %v2172 = vadd.f32 %v2096, %v2171
        %v2173 = vpop.f32.mrb[0].mxu0
        %2174 = vdwg.mxu0
        %v2176 = vsel %vm2098, %v1425, 0
        %v2179 = vsel %vm2098, %v1508, 0
        %2181 = vmatprep.subr.mxu0 0.0
        %2182 = vmatpush1.xpose.msra.mxu0 %v2179
        %2183 = vmatprep.subr.mxu0 0.0
        %2184 = vmatpush1.xpose.msra.mxu0 0.0
        %2185 = vmatprep.subr.mxu0 0.0
        %2186 = vmatpush1.xpose.msra.mxu0 0.0
        %2187 = vmatprep.subr.mxu0 0.0
        %2188 = vmatpush1.xpose.msra.mxu0 0.0
        %2189 = vmatprep.subr.mxu0 0.0
        %2190 = vmatpush1.xpose.msra.mxu0 0.0
        %2191 = vmatprep.subr.mxu0 0.0
        %2192 = vmatpush1.xpose.msra.mxu0 0.0
        %2193 = vmatprep.subr.mxu0 0.0
        %2194 = vmatpush1.xpose.msra.mxu0 0.0
        %2195 = vmatprep.subr.mxu0 0.0
        %2196 = vmatpush1.xpose.msra.mxu0 0.0
        %2197 = vmatprep.subr.mxu0 0.0
        %2198 = vmatpush1.xpose.msra.mxu0 0.0
        %2199 = vmatprep.subr.mxu0 0.0
        %2200 = vmatpush1.xpose.msra.mxu0 0.0
        %2201 = vmatprep.subr.mxu0 0.0
        %2202 = vmatpush1.xpose.msra.mxu0 0.0
        %2203 = vmatprep.subr.mxu0 0.0
        %2204 = vmatpush1.xpose.msra.mxu0 0.0
        %2205 = vmatprep.subr.mxu0 0.0
        %2206 = vmatpush1.xpose.msra.mxu0 0.0
        %2207 = vmatprep.subr.mxu0 0.0
        %2208 = vmatpush1.xpose.msra.mxu0 0.0
        %2209 = vmatprep.subr.mxu0 0.0
        %2210 = vmatpush1.xpose.msra.mxu0 0.0
        %2211 = vmatprep.subr.mxu0 0.0
        %2212 = vmatpush1.xpose.msra.mxu0 0.0
        %2213 = vmatprep.subr.mxu0 0.0
        %2214 = vmatpush1.xpose.msra.mxu0 0.0
        %2215 = vmatprep.subr.mxu0 0.0
        %2216 = vmatpush1.xpose.msra.mxu0 0.0
        %2217 = vmatprep.subr.mxu0 0.0
        %2218 = vmatpush1.xpose.msra.mxu0 0.0
        %2219 = vmatprep.subr.mxu0 0.0
        %2220 = vmatpush1.xpose.msra.mxu0 0.0
        %2221 = vmatprep.subr.mxu0 0.0
        %2222 = vmatpush1.xpose.msra.mxu0 0.0
        %2223 = vmatprep.subr.mxu0 0.0
        %2224 = vmatpush1.xpose.msra.mxu0 0.0
        %2225 = vmatprep.subr.mxu0 0.0
        %2226 = vmatpush1.xpose.msra.mxu0 0.0
        %2227 = vmatprep.subr.mxu0 0.0
        %2228 = vmatpush1.xpose.msra.mxu0 0.0
        %2229 = vmatprep.subr.mxu0 0.0
        %2230 = vmatpush1.xpose.msra.mxu0 0.0
        %2231 = vmatprep.subr.mxu0 0.0
        %2232 = vmatpush1.xpose.msra.mxu0 0.0
        %2233 = vmatprep.subr.mxu0 0.0
        %2234 = vmatpush1.xpose.msra.mxu0 0.0
        %2235 = vmatprep.subr.mxu0 0.0
        %2236 = vmatpush1.xpose.msra.mxu0 0.0
        %2237 = vmatprep.subr.mxu0 0.0
        %2238 = vmatpush1.xpose.msra.mxu0 0.0
        %2239 = vmatprep.subr.mxu0 0.0
        %2240 = vmatpush1.xpose.msra.mxu0 0.0
        %2241 = vmatprep.subr.mxu0 0.0
        %2242 = vmatpush1.xpose.msra.mxu0 0.0
        %2243 = vmatprep.subr.mxu0 0.0
        %2244 = vmatpush1.xpose.msra.mxu0 0.0
        %2245 = vmatprep.mubr.f32.mxu0 0.0
        %2246 = vmatmul.mubr.f32.gmra.mrb[0].mxu0 %v2176
        %v2247 = vpop.f32.mrb[0].mxu0
        %v2248 = vadd.f32 %v2096, %v2247
        %v2249 = vpop.f32.mrb[0].mxu0
        %2250 = vdwg.mxu0
        %v2252 = vsel %vm2098, %v1674, 0
        %v2255 = vsel %vm2098, %v1757, 0
        %2257 = vmatprep.subr.mxu0 0.0
        %2258 = vmatpush1.xpose.msra.mxu0 %v2255
        %2259 = vmatprep.subr.mxu0 0.0
        %2260 = vmatpush1.xpose.msra.mxu0 0.0
        %2261 = vmatprep.subr.mxu0 0.0
        %2262 = vmatpush1.xpose.msra.mxu0 0.0
        %2263 = vmatprep.subr.mxu0 0.0
        %2264 = vmatpush1.xpose.msra.mxu0 0.0
        %2265 = vmatprep.subr.mxu0 0.0
        %2266 = vmatpush1.xpose.msra.mxu0 0.0
        %2267 = vmatprep.subr.mxu0 0.0
        %2268 = vmatpush1.xpose.msra.mxu0 0.0
        %2269 = vmatprep.subr.mxu0 0.0
        %2270 = vmatpush1.xpose.msra.mxu0 0.0
        %2271 = vmatprep.subr.mxu0 0.0
        %2272 = vmatpush1.xpose.msra.mxu0 0.0
        %2273 = vmatprep.subr.mxu0 0.0
        %2274 = vmatpush1.xpose.msra.mxu0 0.0
        %2275 = vmatprep.subr.mxu0 0.0
        %2276 = vmatpush1.xpose.msra.mxu0 0.0
        %2277 = vmatprep.subr.mxu0 0.0
        %2278 = vmatpush1.xpose.msra.mxu0 0.0
        %2279 = vmatprep.subr.mxu0 0.0
        %2280 = vmatpush1.xpose.msra.mxu0 0.0
        %2281 = vmatprep.subr.mxu0 0.0
        %2282 = vmatpush1.xpose.msra.mxu0 0.0
        %2283 = vmatprep.subr.mxu0 0.0
        %2284 = vmatpush1.xpose.msra.mxu0 0.0
        %2285 = vmatprep.subr.mxu0 0.0
        %2286 = vmatpush1.xpose.msra.mxu0 0.0
        %2287 = vmatprep.subr.mxu0 0.0
        %2288 = vmatpush1.xpose.msra.mxu0 0.0
        %2289 = vmatprep.subr.mxu0 0.0
        %2290 = vmatpush1.xpose.msra.mxu0 0.0
        %2291 = vmatprep.subr.mxu0 0.0
        %2292 = vmatpush1.xpose.msra.mxu0 0.0
        %2293 = vmatprep.subr.mxu0 0.0
        %2294 = vmatpush1.xpose.msra.mxu0 0.0
        %2295 = vmatprep.subr.mxu0 0.0
        %2296 = vmatpush1.xpose.msra.mxu0 0.0
        %2297 = vmatprep.subr.mxu0 0.0
        %2298 = vmatpush1.xpose.msra.mxu0 0.0
        %2299 = vmatprep.subr.mxu0 0.0
        %2300 = vmatpush1.xpose.msra.mxu0 0.0
        %2301 = vmatprep.subr.mxu0 0.0
        %2302 = vmatpush1.xpose.msra.mxu0 0.0
        %2303 = vmatprep.subr.mxu0 0.0
        %2304 = vmatpush1.xpose.msra.mxu0 0.0
        %2305 = vmatprep.subr.mxu0 0.0
        %2306 = vmatpush1.xpose.msra.mxu0 0.0
        %2307 = vmatprep.subr.mxu0 0.0
        %2308 = vmatpush1.xpose.msra.mxu0 0.0
        %2309 = vmatprep.subr.mxu0 0.0
        %2310 = vmatpush1.xpose.msra.mxu0 0.0
        %2311 = vmatprep.subr.mxu0 0.0
        %2312 = vmatpush1.xpose.msra.mxu0 0.0
        %2313 = vmatprep.subr.mxu0 0.0
        %2314 = vmatpush1.xpose.msra.mxu0 0.0
        %2315 = vmatprep.subr.mxu0 0.0
        %2316 = vmatpush1.xpose.msra.mxu0 0.0
        %2317 = vmatprep.subr.mxu0 0.0
        %2318 = vmatpush1.xpose.msra.mxu0 0.0
        %2319 = vmatprep.subr.mxu0 0.0
        %2320 = vmatpush1.xpose.msra.mxu0 0.0
        %2321 = vmatprep.mubr.f32.mxu0 0.0
        %2322 = vmatmul.mubr.f32.gmra.mrb[0].mxu0 %v2252
        %v2323 = vpop.f32.mrb[0].mxu0
        %v2324 = vadd.f32 %v2096, %v2323
        %v2325 = vpop.f32.mrb[0].mxu0
        %2326 = vdwg.mxu0
        %v2328 = vsel %vm2098, %v1923, 0
        %v2331 = vsel %vm2098, %v2006, 0
        %2333 = vmatprep.subr.mxu0 0.0
        %2334 = vmatpush1.xpose.msra.mxu0 %v2331
        %2335 = vmatprep.subr.mxu0 0.0
        %2336 = vmatpush1.xpose.msra.mxu0 0.0
        %2337 = vmatprep.subr.mxu0 0.0
        %2338 = vmatpush1.xpose.msra.mxu0 0.0
        %2339 = vmatprep.subr.mxu0 0.0
        %2340 = vmatpush1.xpose.msra.mxu0 0.0
        %2341 = vmatprep.subr.mxu0 0.0
        %2342 = vmatpush1.xpose.msra.mxu0 0.0
        %2343 = vmatprep.subr.mxu0 0.0
        %2344 = vmatpush1.xpose.msra.mxu0 0.0
        %2345 = vmatprep.subr.mxu0 0.0
        %2346 = vmatpush1.xpose.msra.mxu0 0.0
        %2347 = vmatprep.subr.mxu0 0.0
        %2348 = vmatpush1.xpose.msra.mxu0 0.0
        %2349 = vmatprep.subr.mxu0 0.0
        %2350 = vmatpush1.xpose.msra.mxu0 0.0
        %2351 = vmatprep.subr.mxu0 0.0
        %2352 = vmatpush1.xpose.msra.mxu0 0.0
        %2353 = vmatprep.subr.mxu0 0.0
        %2354 = vmatpush1.xpose.msra.mxu0 0.0
        %2355 = vmatprep.subr.mxu0 0.0
        %2356 = vmatpush1.xpose.msra.mxu0 0.0
        %2357 = vmatprep.subr.mxu0 0.0
        %2358 = vmatpush1.xpose.msra.mxu0 0.0
        %2359 = vmatprep.subr.mxu0 0.0
        %2360 = vmatpush1.xpose.msra.mxu0 0.0
        %2361 = vmatprep.subr.mxu0 0.0
        %2362 = vmatpush1.xpose.msra.mxu0 0.0
        %2363 = vmatprep.subr.mxu0 0.0
        %2364 = vmatpush1.xpose.msra.mxu0 0.0
        %2365 = vmatprep.subr.mxu0 0.0
        %2366 = vmatpush1.xpose.msra.mxu0 0.0
        %2367 = vmatprep.subr.mxu0 0.0
        %2368 = vmatpush1.xpose.msra.mxu0 0.0
        %2369 = vmatprep.subr.mxu0 0.0
        %2370 = vmatpush1.xpose.msra.mxu0 0.0
        %2371 = vmatprep.subr.mxu0 0.0
        %2372 = vmatpush1.xpose.msra.mxu0 0.0
        %2373 = vmatprep.subr.mxu0 0.0
        %2374 = vmatpush1.xpose.msra.mxu0 0.0
        %2375 = vmatprep.subr.mxu0 0.0
        %2376 = vmatpush1.xpose.msra.mxu0 0.0
        %2377 = vmatprep.subr.mxu0 0.0
        %2378 = vmatpush1.xpose.msra.mxu0 0.0
        %2379 = vmatprep.subr.mxu0 0.0
        %2380 = vmatpush1.xpose.msra.mxu0 0.0
        %2381 = vmatprep.subr.mxu0 0.0
        %2382 = vmatpush1.xpose.msra.mxu0 0.0
        %2383 = vmatprep.subr.mxu0 0.0
        %2384 = vmatpush1.xpose.msra.mxu0 0.0
        %2385 = vmatprep.subr.mxu0 0.0
        %2386 = vmatpush1.xpose.msra.mxu0 0.0
        %2387 = vmatprep.subr.mxu0 0.0
        %2388 = vmatpush1.xpose.msra.mxu0 0.0
        %2389 = vmatprep.subr.mxu0 0.0
        %2390 = vmatpush1.xpose.msra.mxu0 0.0
        %2391 = vmatprep.subr.mxu0 0.0
        %2392 = vmatpush1.xpose.msra.mxu0 0.0
        %2393 = vmatprep.subr.mxu0 0.0
        %2394 = vmatpush1.xpose.msra.mxu0 0.0
        %2395 = vmatprep.subr.mxu0 0.0
        %2396 = vmatpush1.xpose.msra.mxu0 0.0
        %2397 = vmatprep.mubr.f32.mxu0 0.0
        %2398 = vmatmul.mubr.f32.gmra.mrb[0].mxu0 %v2328
        %v2399 = vpop.f32.mrb[0].mxu0
        %v2400 = vadd.f32 %v2096, %v2399
        %v2401 = vpop.f32.mrb[0].mxu0
        %2402 = vdwg.mxu0
        %v2403 = vsel %vm2098, %v2172, -inf
        %2404 = vmax.xlane.f32.xlu0 %v2403
        %v2405 = vpop.xlane.xlu0 %2404
        %v2406 = vsel %vm2098, %v2248, -inf
        %2407 = vmax.xlane.f32.xlu0 %v2406
        %v2408 = vpop.xlane.xlu0 %2407
        %v2409 = vsel %vm2098, %v2324, -inf
        %2410 = vmax.xlane.f32.xlu0 %v2409
        %v2411 = vpop.xlane.xlu0 %2410
        %v2412 = vsel %vm2098, %v2400, -inf
        %2413 = vmax.xlane.f32.xlu0 %v2412
        %v2414 = vpop.xlane.xlu0 %2413
        %v2415 = vsub.f32 %v2172, %v2405
        %v2416 = vsub.f32 %v2248, %v2408
        %v2417 = vsub.f32 %v2324, %v2411
        %v2418 = vsub.f32 %v2400, %v2414
        %v2419 = vmul.f32 %v2415, 1.442695
        %v2420 = vpow.pop %v2419
        %v2421 = vmul.f32 %v2416, 1.442695
        %v2422 = vpow.pop %v2421
        %v2423 = vmul.f32 %v2417, 1.442695
        %v2424 = vpow.pop %v2423
        %v2425 = vmul.f32 %v2418, 1.442695
        %v2426 = vpow.pop %v2425
        %v2427 = vsel %vm2098, %v2420, 0.0
        %2428 = vadd.xlane.f32.xlu0 %v2427
        %v2429 = vpop.xlane.xlu0 %2428
        %v2430 = vsel %vm2098, %v2422, 0.0
        %2431 = vadd.xlane.f32.xlu0 %v2430
        %v2432 = vpop.xlane.xlu0 %2431
        %v2433 = vsel %vm2098, %v2424, 0.0
        %2434 = vadd.xlane.f32.xlu0 %v2433
        %v2435 = vpop.xlane.xlu0 %2434
        %v2436 = vsel %vm2098, %v2426, 0.0
        %2437 = vadd.xlane.f32.xlu0 %v2436
        %v2438 = vpop.xlane.xlu0 %2437
        %v2439 = vrcp.pop %v2429
        %v2440 = vrcp.pop %v2432
        %v2441 = vrcp.pop %v2435
        %v2442 = vrcp.pop %v2438
        %v2443 = vmul.f32 %v2420, %v2439
        %v2444 = vmul.f32 %v2422, %v2440
        %v2445 = vmul.f32 %v2424, %v2441
        %v2446 = vmul.f32 %v2426, %v2442
        %v2448 = vsel %vm2098, %v2443, 0
        %2450 = vmatprep.subr.mxu0 0.0
        %2451 = vmatpush1.msra.mxu0 %v1342
        %2452 = vmatprep.subr.mxu0 0.0
        %2453 = vmatpush1.msra.mxu0 0.0
        %2454 = vmatprep.subr.mxu0 0.0
        %2455 = vmatpush1.msra.mxu0 0.0
        %2456 = vmatprep.subr.mxu0 0.0
        %2457 = vmatpush1.msra.mxu0 0.0
        %2458 = vmatprep.subr.mxu0 0.0
        %2459 = vmatpush1.msra.mxu0 0.0
        %2460 = vmatprep.subr.mxu0 0.0
        %2461 = vmatpush1.msra.mxu0 0.0
        %2462 = vmatprep.subr.mxu0 0.0
        %2463 = vmatpush1.msra.mxu0 0.0
        %2464 = vmatprep.subr.mxu0 0.0
        %2465 = vmatpush1.msra.mxu0 0.0
        %2466 = vmatprep.subr.mxu0 0.0
        %2467 = vmatpush1.msra.mxu0 0.0
        %2468 = vmatprep.subr.mxu0 0.0
        %2469 = vmatpush1.msra.mxu0 0.0
        %2470 = vmatprep.subr.mxu0 0.0
        %2471 = vmatpush1.msra.mxu0 0.0
        %2472 = vmatprep.subr.mxu0 0.0
        %2473 = vmatpush1.msra.mxu0 0.0
        %2474 = vmatprep.subr.mxu0 0.0
        %2475 = vmatpush1.msra.mxu0 0.0
        %2476 = vmatprep.subr.mxu0 0.0
        %2477 = vmatpush1.msra.mxu0 0.0
        %2478 = vmatprep.subr.mxu0 0.0
        %2479 = vmatpush1.msra.mxu0 0.0
        %2480 = vmatprep.subr.mxu0 0.0
        %2481 = vmatpush1.msra.mxu0 0.0
        %2482 = vmatprep.subr.mxu0 0.0
        %2483 = vmatpush1.msra.mxu0 0.0
        %2484 = vmatprep.subr.mxu0 0.0
        %2485 = vmatpush1.msra.mxu0 0.0
        %2486 = vmatprep.subr.mxu0 0.0
        %2487 = vmatpush1.msra.mxu0 0.0
        %2488 = vmatprep.subr.mxu0 0.0
        %2489 = vmatpush1.msra.mxu0 0.0
        %2490 = vmatprep.subr.mxu0 0.0
        %2491 = vmatpush1.msra.mxu0 0.0
        %2492 = vmatprep.subr.mxu0 0.0
        %2493 = vmatpush1.msra.mxu0 0.0
        %2494 = vmatprep.subr.mxu0 0.0
        %2495 = vmatpush1.msra.mxu0 0.0
        %2496 = vmatprep.subr.mxu0 0.0
        %2497 = vmatpush1.msra.mxu0 0.0
        %2498 = vmatprep.subr.mxu0 0.0
        %2499 = vmatpush1.msra.mxu0 0.0
        %2500 = vmatprep.subr.mxu0 0.0
        %2501 = vmatpush1.msra.mxu0 0.0
        %2502 = vmatprep.subr.mxu0 0.0
        %2503 = vmatpush1.msra.mxu0 0.0
        %2504 = vmatprep.subr.mxu0 0.0
        %2505 = vmatpush1.msra.mxu0 0.0
        %2506 = vmatprep.subr.mxu0 0.0
        %2507 = vmatpush1.msra.mxu0 0.0
        %2508 = vmatprep.subr.mxu0 0.0
        %2509 = vmatpush1.msra.mxu0 0.0
        %2510 = vmatprep.subr.mxu0 0.0
        %2511 = vmatpush1.msra.mxu0 0.0
        %2512 = vmatprep.subr.mxu0 0.0
        %2513 = vmatpush1.msra.mxu0 0.0
        %2514 = vmatprep.mubr.f32.mxu0 0.0
        %2515 = vmatmul.mubr.f32.gmra.mrb[0].mxu0 %v2448
        %v2516 = vpop.f32.mrb[0].mxu0
        %v2517 = vadd.f32 0.0, %v2516
        %v2518 = vpop.f32.mrb[0].mxu0
        %2519 = vdwg.mxu0
        %v2521 = vsel %vm2098, %v2444, 0
        %2523 = vmatprep.subr.mxu0 0.0
        %2524 = vmatpush1.msra.mxu0 %v1591
        %2525 = vmatprep.subr.mxu0 0.0
        %2526 = vmatpush1.msra.mxu0 0.0
        %2527 = vmatprep.subr.mxu0 0.0
        %2528 = vmatpush1.msra.mxu0 0.0
        %2529 = vmatprep.subr.mxu0 0.0
        %2530 = vmatpush1.msra.mxu0 0.0
        %2531 = vmatprep.subr.mxu0 0.0
        %2532 = vmatpush1.msra.mxu0 0.0
        %2533 = vmatprep.subr.mxu0 0.0
        %2534 = vmatpush1.msra.mxu0 0.0
        %2535 = vmatprep.subr.mxu0 0.0
        %2536 = vmatpush1.msra.mxu0 0.0
        %2537 = vmatprep.subr.mxu0 0.0
        %2538 = vmatpush1.msra.mxu0 0.0
        %2539 = vmatprep.subr.mxu0 0.0
        %2540 = vmatpush1.msra.mxu0 0.0
        %2541 = vmatprep.subr.mxu0 0.0
        %2542 = vmatpush1.msra.mxu0 0.0
        %2543 = vmatprep.subr.mxu0 0.0
        %2544 = vmatpush1.msra.mxu0 0.0
        %2545 = vmatprep.subr.mxu0 0.0
        %2546 = vmatpush1.msra.mxu0 0.0
        %2547 = vmatprep.subr.mxu0 0.0
        %2548 = vmatpush1.msra.mxu0 0.0
        %2549 = vmatprep.subr.mxu0 0.0
        %2550 = vmatpush1.msra.mxu0 0.0
        %2551 = vmatprep.subr.mxu0 0.0
        %2552 = vmatpush1.msra.mxu0 0.0
        %2553 = vmatprep.subr.mxu0 0.0
        %2554 = vmatpush1.msra.mxu0 0.0
        %2555 = vmatprep.subr.mxu0 0.0
        %2556 = vmatpush1.msra.mxu0 0.0
        %2557 = vmatprep.subr.mxu0 0.0
        %2558 = vmatpush1.msra.mxu0 0.0
        %2559 = vmatprep.subr.mxu0 0.0
        %2560 = vmatpush1.msra.mxu0 0.0
        %2561 = vmatprep.subr.mxu0 0.0
        %2562 = vmatpush1.msra.mxu0 0.0
        %2563 = vmatprep.subr.mxu0 0.0
        %2564 = vmatpush1.msra.mxu0 0.0
        %2565 = vmatprep.subr.mxu0 0.0
        %2566 = vmatpush1.msra.mxu0 0.0
        %2567 = vmatprep.subr.mxu0 0.0
        %2568 = vmatpush1.msra.mxu0 0.0
        %2569 = vmatprep.subr.mxu0 0.0
        %2570 = vmatpush1.msra.mxu0 0.0
        %2571 = vmatprep.subr.mxu0 0.0
        %2572 = vmatpush1.msra.mxu0 0.0
        %2573 = vmatprep.subr.mxu0 0.0
        %2574 = vmatpush1.msra.mxu0 0.0
        %2575 = vmatprep.subr.mxu0 0.0
        %2576 = vmatpush1.msra.mxu0 0.0
        %2577 = vmatprep.subr.mxu0 0.0
        %2578 = vmatpush1.msra.mxu0 0.0
        %2579 = vmatprep.subr.mxu0 0.0
        %2580 = vmatpush1.msra.mxu0 0.0
        %2581 = vmatprep.subr.mxu0 0.0
        %2582 = vmatpush1.msra.mxu0 0.0
        %2583 = vmatprep.subr.mxu0 0.0
        %2584 = vmatpush1.msra.mxu0 0.0
        %2585 = vmatprep.subr.mxu0 0.0
        %2586 = vmatpush1.msra.mxu0 0.0
        %2587 = vmatprep.mubr.f32.mxu0 0.0
        %2588 = vmatmul.mubr.f32.gmra.mrb[0].mxu0 %v2521
        %v2589 = vpop.f32.mrb[0].mxu0
        %v2590 = vadd.f32 0.0, %v2589
        %v2591 = vpop.f32.mrb[0].mxu0
        %2592 = vdwg.mxu0
        %v2594 = vsel %vm2098, %v2445, 0
        %2596 = vmatprep.subr.mxu0 0.0
        %2597 = vmatpush1.msra.mxu0 %v1840
        %2598 = vmatprep.subr.mxu0 0.0
        %2599 = vmatpush1.msra.mxu0 0.0
        %2600 = vmatprep.subr.mxu0 0.0
        %2601 = vmatpush1.msra.mxu0 0.0
        %2602 = vmatprep.subr.mxu0 0.0
        %2603 = vmatpush1.msra.mxu0 0.0
        %2604 = vmatprep.subr.mxu0 0.0
        %2605 = vmatpush1.msra.mxu0 0.0
        %2606 = vmatprep.subr.mxu0 0.0
        %2607 = vmatpush1.msra.mxu0 0.0
        %2608 = vmatprep.subr.mxu0 0.0
        %2609 = vmatpush1.msra.mxu0 0.0
        %2610 = vmatprep.subr.mxu0 0.0
        %2611 = vmatpush1.msra.mxu0 0.0
        %2612 = vmatprep.subr.mxu0 0.0
        %2613 = vmatpush1.msra.mxu0 0.0
        %2614 = vmatprep.subr.mxu0 0.0
        %2615 = vmatpush1.msra.mxu0 0.0
        %2616 = vmatprep.subr.mxu0 0.0
        %2617 = vmatpush1.msra.mxu0 0.0
        %2618 = vmatprep.subr.mxu0 0.0
        %2619 = vmatpush1.msra.mxu0 0.0
        %2620 = vmatprep.subr.mxu0 0.0
        %2621 = vmatpush1.msra.mxu0 0.0
        %2622 = vmatprep.subr.mxu0 0.0
        %2623 = vmatpush1.msra.mxu0 0.0
        %2624 = vmatprep.subr.mxu0 0.0
        %2625 = vmatpush1.msra.mxu0 0.0
        %2626 = vmatprep.subr.mxu0 0.0
        %2627 = vmatpush1.msra.mxu0 0.0
        %2628 = vmatprep.subr.mxu0 0.0
        %2629 = vmatpush1.msra.mxu0 0.0
        %2630 = vmatprep.subr.mxu0 0.0
        %2631 = vmatpush1.msra.mxu0 0.0
        %2632 = vmatprep.subr.mxu0 0.0
        %2633 = vmatpush1.msra.mxu0 0.0
        %2634 = vmatprep.subr.mxu0 0.0
        %2635 = vmatpush1.msra.mxu0 0.0
        %2636 = vmatprep.subr.mxu0 0.0
        %2637 = vmatpush1.msra.mxu0 0.0
        %2638 = vmatprep.subr.mxu0 0.0
        %2639 = vmatpush1.msra.mxu0 0.0
        %2640 = vmatprep.subr.mxu0 0.0
        %2641 = vmatpush1.msra.mxu0 0.0
        %2642 = vmatprep.subr.mxu0 0.0
        %2643 = vmatpush1.msra.mxu0 0.0
        %2644 = vmatprep.subr.mxu0 0.0
        %2645 = vmatpush1.msra.mxu0 0.0
        %2646 = vmatprep.subr.mxu0 0.0
        %2647 = vmatpush1.msra.mxu0 0.0
        %2648 = vmatprep.subr.mxu0 0.0
        %2649 = vmatpush1.msra.mxu0 0.0
        %2650 = vmatprep.subr.mxu0 0.0
        %2651 = vmatpush1.msra.mxu0 0.0
        %2652 = vmatprep.subr.mxu0 0.0
        %2653 = vmatpush1.msra.mxu0 0.0
        %2654 = vmatprep.subr.mxu0 0.0
        %2655 = vmatpush1.msra.mxu0 0.0
        %2656 = vmatprep.subr.mxu0 0.0
        %2657 = vmatpush1.msra.mxu0 0.0
        %2658 = vmatprep.subr.mxu0 0.0
        %2659 = vmatpush1.msra.mxu0 0.0
        %2660 = vmatprep.mubr.f32.mxu0 0.0
        %2661 = vmatmul.mubr.f32.gmra.mrb[0].mxu0 %v2594
        %v2662 = vpop.f32.mrb[0].mxu0
        %v2663 = vadd.f32 0.0, %v2662
        %v2664 = vpop.f32.mrb[0].mxu0
        %2665 = vdwg.mxu0
        %v2667 = vsel %vm2098, %v2446, 0
        %2669 = vmatprep.subr.mxu0 0.0
        %2670 = vmatpush1.msra.mxu0 %v2089
        %2671 = vmatprep.subr.mxu0 0.0
        %2672 = vmatpush1.msra.mxu0 0.0
        %2673 = vmatprep.subr.mxu0 0.0
        %2674 = vmatpush1.msra.mxu0 0.0
        %2675 = vmatprep.subr.mxu0 0.0
        %2676 = vmatpush1.msra.mxu0 0.0
        %2677 = vmatprep.subr.mxu0 0.0
        %2678 = vmatpush1.msra.mxu0 0.0
        %2679 = vmatprep.subr.mxu0 0.0
        %2680 = vmatpush1.msra.mxu0 0.0
        %2681 = vmatprep.subr.mxu0 0.0
        %2682 = vmatpush1.msra.mxu0 0.0
        %2683 = vmatprep.subr.mxu0 0.0
        %2684 = vmatpush1.msra.mxu0 0.0
        %2685 = vmatprep.subr.mxu0 0.0
        %2686 = vmatpush1.msra.mxu0 0.0
        %2687 = vmatprep.subr.mxu0 0.0
        %2688 = vmatpush1.msra.mxu0 0.0
        %2689 = vmatprep.subr.mxu0 0.0
        %2690 = vmatpush1.msra.mxu0 0.0
        %2691 = vmatprep.subr.mxu0 0.0
        %2692 = vmatpush1.msra.mxu0 0.0
        %2693 = vmatprep.subr.mxu0 0.0
        %2694 = vmatpush1.msra.mxu0 0.0
        %2695 = vmatprep.subr.mxu0 0.0
        %2696 = vmatpush1.msra.mxu0 0.0
        %2697 = vmatprep.subr.mxu0 0.0
        %2698 = vmatpush1.msra.mxu0 0.0
        %2699 = vmatprep.subr.mxu0 0.0
        %2700 = vmatpush1.msra.mxu0 0.0
        %2701 = vmatprep.subr.mxu0 0.0
        %2702 = vmatpush1.msra.mxu0 0.0
        %2703 = vmatprep.subr.mxu0 0.0
        %2704 = vmatpush1.msra.mxu0 0.0
        %2705 = vmatprep.subr.mxu0 0.0
        %2706 = vmatpush1.msra.mxu0 0.0
        %2707 = vmatprep.subr.mxu0 0.0
        %2708 = vmatpush1.msra.mxu0 0.0
        %2709 = vmatprep.subr.mxu0 0.0
        %2710 = vmatpush1.msra.mxu0 0.0
        %2711 = vmatprep.subr.mxu0 0.0
        %2712 = vmatpush1.msra.mxu0 0.0
        %2713 = vmatprep.subr.mxu0 0.0
        %2714 = vmatpush1.msra.mxu0 0.0
        %2715 = vmatprep.subr.mxu0 0.0
        %2716 = vmatpush1.msra.mxu0 0.0
        %2717 = vmatprep.subr.mxu0 0.0
        %2718 = vmatpush1.msra.mxu0 0.0
        %2719 = vmatprep.subr.mxu0 0.0
        %2720 = vmatpush1.msra.mxu0 0.0
        %2721 = vmatprep.subr.mxu0 0.0
        %2722 = vmatpush1.msra.mxu0 0.0
        %2723 = vmatprep.subr.mxu0 0.0
        %2724 = vmatpush1.msra.mxu0 0.0
        %2725 = vmatprep.subr.mxu0 0.0
        %2726 = vmatpush1.msra.mxu0 0.0
        %2727 = vmatprep.subr.mxu0 0.0
        %2728 = vmatpush1.msra.mxu0 0.0
        %2729 = vmatprep.subr.mxu0 0.0
        %2730 = vmatpush1.msra.mxu0 0.0
        %2731 = vmatprep.subr.mxu0 0.0
        %2732 = vmatpush1.msra.mxu0 0.0
        %2733 = vmatprep.mubr.f32.mxu0 0.0
        %2734 = vmatmul.mubr.f32.gmra.mrb[0].mxu0 %v2667
        %v2735 = vpop.f32.mrb[0].mxu0
        %v2736 = vadd.f32 0.0, %v2735
        %v2737 = vpop.f32.mrb[0].mxu0
        %2738 = vdwg.mxu0
        %v2739 = vld [vmem:[%s1025] sm:$0x1]
        %v2740 = vld [vmem:[%s1022] sm:$0xff]
        %v2742 = vsel %vm2098, %v2517, 0
        %2744 = vmatprep.subr.mxu0 0.0
        %2745 = vmatpush1.msra.mxu0 %v2740
        %2746 = vmatprep.subr.mxu0 0.0
        %2747 = vmatpush1.msra.mxu0 0.0
        %2748 = vmatprep.subr.mxu0 0.0
        %2749 = vmatpush1.msra.mxu0 0.0
        %2750 = vmatprep.subr.mxu0 0.0
        %2751 = vmatpush1.msra.mxu0 0.0
        %2752 = vmatprep.subr.mxu0 0.0
        %2753 = vmatpush1.msra.mxu0 0.0
        %2754 = vmatprep.subr.mxu0 0.0
        %2755 = vmatpush1.msra.mxu0 0.0
        %2756 = vmatprep.subr.mxu0 0.0
        %2757 = vmatpush1.msra.mxu0 0.0
        %2758 = vmatprep.subr.mxu0 0.0
        %2759 = vmatpush1.msra.mxu0 0.0
        %2760 = vmatprep.subr.mxu0 0.0
        %2761 = vmatpush1.msra.mxu0 0.0
        %2762 = vmatprep.subr.mxu0 0.0
        %2763 = vmatpush1.msra.mxu0 0.0
        %2764 = vmatprep.subr.mxu0 0.0
        %2765 = vmatpush1.msra.mxu0 0.0
        %2766 = vmatprep.subr.mxu0 0.0
        %2767 = vmatpush1.msra.mxu0 0.0
        %2768 = vmatprep.subr.mxu0 0.0
        %2769 = vmatpush1.msra.mxu0 0.0
        %2770 = vmatprep.subr.mxu0 0.0
        %2771 = vmatpush1.msra.mxu0 0.0
        %2772 = vmatprep.subr.mxu0 0.0
        %2773 = vmatpush1.msra.mxu0 0.0
        %2774 = vmatprep.subr.mxu0 0.0
        %2775 = vmatpush1.msra.mxu0 0.0
        %2776 = vmatprep.subr.mxu0 0.0
        %2777 = vmatpush1.msra.mxu0 0.0
        %2778 = vmatprep.subr.mxu0 0.0
        %2779 = vmatpush1.msra.mxu0 0.0
        %2780 = vmatprep.subr.mxu0 0.0
        %2781 = vmatpush1.msra.mxu0 0.0
        %2782 = vmatprep.subr.mxu0 0.0
        %2783 = vmatpush1.msra.mxu0 0.0
        %2784 = vmatprep.subr.mxu0 0.0
        %2785 = vmatpush1.msra.mxu0 0.0
        %2786 = vmatprep.subr.mxu0 0.0
        %2787 = vmatpush1.msra.mxu0 0.0
        %2788 = vmatprep.subr.mxu0 0.0
        %2789 = vmatpush1.msra.mxu0 0.0
        %2790 = vmatprep.subr.mxu0 0.0
        %2791 = vmatpush1.msra.mxu0 0.0
        %2792 = vmatprep.subr.mxu0 0.0
        %2793 = vmatpush1.msra.mxu0 0.0
        %2794 = vmatprep.subr.mxu0 0.0
        %2795 = vmatpush1.msra.mxu0 0.0
        %2796 = vmatprep.subr.mxu0 0.0
        %2797 = vmatpush1.msra.mxu0 0.0
        %2798 = vmatprep.subr.mxu0 0.0
        %2799 = vmatpush1.msra.mxu0 0.0
        %2800 = vmatprep.subr.mxu0 0.0
        %2801 = vmatpush1.msra.mxu0 0.0
        %2802 = vmatprep.subr.mxu0 0.0
        %2803 = vmatpush1.msra.mxu0 0.0
        %2804 = vmatprep.subr.mxu0 0.0
        %2805 = vmatpush1.msra.mxu0 0.0
        %2806 = vmatprep.subr.mxu0 0.0
        %2807 = vmatpush1.msra.mxu0 0.0
        %2808 = vmatprep.mubr.f32.mxu0 0.0
        %2809 = vmatmul.mubr.f32.gmra.mrb[0].mxu0 %v2742
        %v2810 = vpop.f32.mrb[0].mxu0
        %v2811 = vadd.f32 0.0, %v2810
        %v2812 = vpop.f32.mrb[0].mxu0
        %2813 = vdwg.mxu0
        %v2815 = vlaneseq
        %v2816 = vshrl.u32 %v2815, 7
        %v2817 = vsub.s32 0, %v2816
        %v2818 = vrot.slane %v2739, %v2817
        %v2820 = vadd.f32 %v2818, %v2811
        %s2821 = scalar_lea.vmem %s1022, 8
        %v2822 = vld [vmem:[%s2821] sm:$0xff]
        %v2824 = vsel %vm2098, %v2590, 0
        %2826 = vmatprep.subr.mxu0 0.0
        %2827 = vmatpush1.msra.mxu0 %v2822
        %2828 = vmatprep.subr.mxu0 0.0
        %2829 = vmatpush1.msra.mxu0 0.0
        %2830 = vmatprep.subr.mxu0 0.0
        %2831 = vmatpush1.msra.mxu0 0.0
        %2832 = vmatprep.subr.mxu0 0.0
        %2833 = vmatpush1.msra.mxu0 0.0
        %2834 = vmatprep.subr.mxu0 0.0
        %2835 = vmatpush1.msra.mxu0 0.0
        %2836 = vmatprep.subr.mxu0 0.0
        %2837 = vmatpush1.msra.mxu0 0.0
        %2838 = vmatprep.subr.mxu0 0.0
        %2839 = vmatpush1.msra.mxu0 0.0
        %2840 = vmatprep.subr.mxu0 0.0
        %2841 = vmatpush1.msra.mxu0 0.0
        %2842 = vmatprep.subr.mxu0 0.0
        %2843 = vmatpush1.msra.mxu0 0.0
        %2844 = vmatprep.subr.mxu0 0.0
        %2845 = vmatpush1.msra.mxu0 0.0
        %2846 = vmatprep.subr.mxu0 0.0
        %2847 = vmatpush1.msra.mxu0 0.0
        %2848 = vmatprep.subr.mxu0 0.0
        %2849 = vmatpush1.msra.mxu0 0.0
        %2850 = vmatprep.subr.mxu0 0.0
        %2851 = vmatpush1.msra.mxu0 0.0
        %2852 = vmatprep.subr.mxu0 0.0
        %2853 = vmatpush1.msra.mxu0 0.0
        %2854 = vmatprep.subr.mxu0 0.0
        %2855 = vmatpush1.msra.mxu0 0.0
        %2856 = vmatprep.subr.mxu0 0.0
        %2857 = vmatpush1.msra.mxu0 0.0
        %2858 = vmatprep.subr.mxu0 0.0
        %2859 = vmatpush1.msra.mxu0 0.0
        %2860 = vmatprep.subr.mxu0 0.0
        %2861 = vmatpush1.msra.mxu0 0.0
        %2862 = vmatprep.subr.mxu0 0.0
        %2863 = vmatpush1.msra.mxu0 0.0
        %2864 = vmatprep.subr.mxu0 0.0
        %2865 = vmatpush1.msra.mxu0 0.0
        %2866 = vmatprep.subr.mxu0 0.0
        %2867 = vmatpush1.msra.mxu0 0.0
        %2868 = vmatprep.subr.mxu0 0.0
        %2869 = vmatpush1.msra.mxu0 0.0
        %2870 = vmatprep.subr.mxu0 0.0
        %2871 = vmatpush1.msra.mxu0 0.0
        %2872 = vmatprep.subr.mxu0 0.0
        %2873 = vmatpush1.msra.mxu0 0.0
        %2874 = vmatprep.subr.mxu0 0.0
        %2875 = vmatpush1.msra.mxu0 0.0
        %2876 = vmatprep.subr.mxu0 0.0
        %2877 = vmatpush1.msra.mxu0 0.0
        %2878 = vmatprep.subr.mxu0 0.0
        %2879 = vmatpush1.msra.mxu0 0.0
        %2880 = vmatprep.subr.mxu0 0.0
        %2881 = vmatpush1.msra.mxu0 0.0
        %2882 = vmatprep.subr.mxu0 0.0
        %2883 = vmatpush1.msra.mxu0 0.0
        %2884 = vmatprep.subr.mxu0 0.0
        %2885 = vmatpush1.msra.mxu0 0.0
        %2886 = vmatprep.subr.mxu0 0.0
        %2887 = vmatpush1.msra.mxu0 0.0
        %2888 = vmatprep.subr.mxu0 0.0
        %2889 = vmatpush1.msra.mxu0 0.0
        %2890 = vmatprep.mubr.f32.mxu0 0.0
        %2891 = vmatmul.mubr.f32.gmra.mrb[0].mxu0 %v2824
        %v2892 = vpop.f32.mrb[0].mxu0
        %v2893 = vadd.f32 0.0, %v2892
        %v2894 = vpop.f32.mrb[0].mxu0
        %2895 = vdwg.mxu0
        %v2896 = vadd.f32 %v2820, %v2893
        %s2897 = scalar_lea.vmem %s1022, 16
        %v2898 = vld [vmem:[%s2897] sm:$0xff]
        %v2900 = vsel %vm2098, %v2663, 0
        %2902 = vmatprep.subr.mxu0 0.0
        %2903 = vmatpush1.msra.mxu0 %v2898
        %2904 = vmatprep.subr.mxu0 0.0
        %2905 = vmatpush1.msra.mxu0 0.0
        %2906 = vmatprep.subr.mxu0 0.0
        %2907 = vmatpush1.msra.mxu0 0.0
        %2908 = vmatprep.subr.mxu0 0.0
        %2909 = vmatpush1.msra.mxu0 0.0
        %2910 = vmatprep.subr.mxu0 0.0
        %2911 = vmatpush1.msra.mxu0 0.0
        %2912 = vmatprep.subr.mxu0 0.0
        %2913 = vmatpush1.msra.mxu0 0.0
        %2914 = vmatprep.subr.mxu0 0.0
        %2915 = vmatpush1.msra.mxu0 0.0
        %2916 = vmatprep.subr.mxu0 0.0
        %2917 = vmatpush1.msra.mxu0 0.0
        %2918 = vmatprep.subr.mxu0 0.0
        %2919 = vmatpush1.msra.mxu0 0.0
        %2920 = vmatprep.subr.mxu0 0.0
        %2921 = vmatpush1.msra.mxu0 0.0
        %2922 = vmatprep.subr.mxu0 0.0
        %2923 = vmatpush1.msra.mxu0 0.0
        %2924 = vmatprep.subr.mxu0 0.0
        %2925 = vmatpush1.msra.mxu0 0.0
        %2926 = vmatprep.subr.mxu0 0.0
        %2927 = vmatpush1.msra.mxu0 0.0
        %2928 = vmatprep.subr.mxu0 0.0
        %2929 = vmatpush1.msra.mxu0 0.0
        %2930 = vmatprep.subr.mxu0 0.0
        %2931 = vmatpush1.msra.mxu0 0.0
        %2932 = vmatprep.subr.mxu0 0.0
        %2933 = vmatpush1.msra.mxu0 0.0
        %2934 = vmatprep.subr.mxu0 0.0
        %2935 = vmatpush1.msra.mxu0 0.0
        %2936 = vmatprep.subr.mxu0 0.0
        %2937 = vmatpush1.msra.mxu0 0.0
        %2938 = vmatprep.subr.mxu0 0.0
        %2939 = vmatpush1.msra.mxu0 0.0
        %2940 = vmatprep.subr.mxu0 0.0
        %2941 = vmatpush1.msra.mxu0 0.0
        %2942 = vmatprep.subr.mxu0 0.0
        %2943 = vmatpush1.msra.mxu0 0.0
        %2944 = vmatprep.subr.mxu0 0.0
        %2945 = vmatpush1.msra.mxu0 0.0
        %2946 = vmatprep.subr.mxu0 0.0
        %2947 = vmatpush1.msra.mxu0 0.0
        %2948 = vmatprep.subr.mxu0 0.0
        %2949 = vmatpush1.msra.mxu0 0.0
        %2950 = vmatprep.subr.mxu0 0.0
        %2951 = vmatpush1.msra.mxu0 0.0
        %2952 = vmatprep.subr.mxu0 0.0
        %2953 = vmatpush1.msra.mxu0 0.0
        %2954 = vmatprep.subr.mxu0 0.0
        %2955 = vmatpush1.msra.mxu0 0.0
        %2956 = vmatprep.subr.mxu0 0.0
        %2957 = vmatpush1.msra.mxu0 0.0
        %2958 = vmatprep.subr.mxu0 0.0
        %2959 = vmatpush1.msra.mxu0 0.0
        %2960 = vmatprep.subr.mxu0 0.0
        %2961 = vmatpush1.msra.mxu0 0.0
        %2962 = vmatprep.subr.mxu0 0.0
        %2963 = vmatpush1.msra.mxu0 0.0
        %2964 = vmatprep.subr.mxu0 0.0
        %2965 = vmatpush1.msra.mxu0 0.0
        %2966 = vmatprep.mubr.f32.mxu0 0.0
        %2967 = vmatmul.mubr.f32.gmra.mrb[0].mxu0 %v2900
        %v2968 = vpop.f32.mrb[0].mxu0
        %v2969 = vadd.f32 0.0, %v2968
        %v2970 = vpop.f32.mrb[0].mxu0
        %2971 = vdwg.mxu0
        %v2972 = vadd.f32 %v2896, %v2969
        %s2973 = scalar_lea.vmem %s1022, 24
        %v2974 = vld [vmem:[%s2973] sm:$0xff]
        %v2976 = vsel %vm2098, %v2736, 0
        %2978 = vmatprep.subr.mxu0 0.0
        %2979 = vmatpush1.msra.mxu0 %v2974
        %2980 = vmatprep.subr.mxu0 0.0
        %2981 = vmatpush1.msra.mxu0 0.0
        %2982 = vmatprep.subr.mxu0 0.0
        %2983 = vmatpush1.msra.mxu0 0.0
        %2984 = vmatprep.subr.mxu0 0.0
        %2985 = vmatpush1.msra.mxu0 0.0
        %2986 = vmatprep.subr.mxu0 0.0
        %2987 = vmatpush1.msra.mxu0 0.0
        %2988 = vmatprep.subr.mxu0 0.0
        %2989 = vmatpush1.msra.mxu0 0.0
        %2990 = vmatprep.subr.mxu0 0.0
        %2991 = vmatpush1.msra.mxu0 0.0
        %2992 = vmatprep.subr.mxu0 0.0
        %2993 = vmatpush1.msra.mxu0 0.0
        %2994 = vmatprep.subr.mxu0 0.0
        %2995 = vmatpush1.msra.mxu0 0.0
        %2996 = vmatprep.subr.mxu0 0.0
        %2997 = vmatpush1.msra.mxu0 0.0
        %2998 = vmatprep.subr.mxu0 0.0
        %2999 = vmatpush1.msra.mxu0 0.0
        %3000 = vmatprep.subr.mxu0 0.0
        %3001 = vmatpush1.msra.mxu0 0.0
        %3002 = vmatprep.subr.mxu0 0.0
        %3003 = vmatpush1.msra.mxu0 0.0
        %3004 = vmatprep.subr.mxu0 0.0
        %3005 = vmatpush1.msra.mxu0 0.0
        %3006 = vmatprep.subr.mxu0 0.0
        %3007 = vmatpush1.msra.mxu0 0.0
        %3008 = vmatprep.subr.mxu0 0.0
        %3009 = vmatpush1.msra.mxu0 0.0
        %3010 = vmatprep.subr.mxu0 0.0
        %3011 = vmatpush1.msra.mxu0 0.0
        %3012 = vmatprep.subr.mxu0 0.0
        %3013 = vmatpush1.msra.mxu0 0.0
        %3014 = vmatprep.subr.mxu0 0.0
        %3015 = vmatpush1.msra.mxu0 0.0
        %3016 = vmatprep.subr.mxu0 0.0
        %3017 = vmatpush1.msra.mxu0 0.0
        %3018 = vmatprep.subr.mxu0 0.0
        %3019 = vmatpush1.msra.mxu0 0.0
        %3020 = vmatprep.subr.mxu0 0.0
        %3021 = vmatpush1.msra.mxu0 0.0
        %3022 = vmatprep.subr.mxu0 0.0
        %3023 = vmatpush1.msra.mxu0 0.0
        %3024 = vmatprep.subr.mxu0 0.0
        %3025 = vmatpush1.msra.mxu0 0.0
        %3026 = vmatprep.subr.mxu0 0.0
        %3027 = vmatpush1.msra.mxu0 0.0
        %3028 = vmatprep.subr.mxu0 0.0
        %3029 = vmatpush1.msra.mxu0 0.0
        %3030 = vmatprep.subr.mxu0 0.0
        %3031 = vmatpush1.msra.mxu0 0.0
        %3032 = vmatprep.subr.mxu0 0.0
        %3033 = vmatpush1.msra.mxu0 0.0
        %3034 = vmatprep.subr.mxu0 0.0
        %3035 = vmatpush1.msra.mxu0 0.0
        %3036 = vmatprep.subr.mxu0 0.0
        %3037 = vmatpush1.msra.mxu0 0.0
        %3038 = vmatprep.subr.mxu0 0.0
        %3039 = vmatpush1.msra.mxu0 0.0
        %3040 = vmatprep.subr.mxu0 0.0
        %3041 = vmatpush1.msra.mxu0 0.0
        %3042 = vmatprep.mubr.f32.mxu0 0.0
        %3043 = vmatmul.mubr.f32.gmra.mrb[0].mxu0 %v2976
        %v3044 = vpop.f32.mrb[0].mxu0
        %v3045 = vadd.f32 0.0, %v3044
        %v3046 = vpop.f32.mrb[0].mxu0
        %3047 = vdwg.mxu0
        %v3048 = vadd.f32 %v2972, %v3045
        %v3049 = vadd.f32 %v3048, %v1093
        %v3050 = vld [vmem:[%s1028] sm:$0x1]
        %v3051 = vld [vmem:[%s1031] sm:$0x1]
        %v3052 = vsel %vm1109, %v3049, 0.0
        %3053 = vadd.xlane.f32.xlu0 %v3052
        %v3054 = vpop.xlane.xlu0 %3053
        %v3055 = vrcp.pop 32.0
        %v3056 = vmul.f32 %v3054, %v3055
        %v3057 = vsub.f32 %v3049, %v3056
        %v3058 = vmul.f32 %v3057, %v3057
        %v3059 = vsel %vm1109, %v3058, 0.0
        %3060 = vadd.xlane.f32.xlu0 %v3059
        %v3061 = vpop.xlane.xlu0 %3060
        %v3062 = vmul.f32 %v3061, %v3055
        %v3063 = vadd.f32 %v3062, 1e-12
        %v3064 = vrsqrt.pop %v3063
        %v3065 = vmul.f32 %v3057, %v3064
        %v3067 = vlaneseq
        %v3068 = vshrl.u32 %v3067, 7
        %v3069 = vsub.s32 0, %v3068
        %v3070 = vrot.slane %v3050, %v3069
        %v3072 = vmul.f32 %v3065, %v3070
        %v3074 = vlaneseq
        %v3075 = vshrl.u32 %v3074, 7
        %v3076 = vsub.s32 0, %v3075
        %v3077 = vrot.slane %v3051, %v3076
        %v3079 = vadd.f32 %v3072, %v3077
        %v3080 = vld [vmem:[%s1036] sm:$0xff]
        %v3081 = vld [vmem:[%s1036 + $0x8] sm:$0xff]
        %v3082 = vld [vmem:[%s1036 + $0x10] sm:$0xff]
        %v3083 = vld [vmem:[%s1036 + $0x18] sm:$0xff]
        %v3084 = vld [vmem:[%s1039] sm:$0x1]
        %v3086 = vlaneseq
        %v3087 = vshrl.u32 %v3086, 7
        %v3088 = vsub.s32 0, %v3087
        %v3089 = vrot.slane %v3084, %v3088
        %v3092 = vsel %vm1109, %v3079, 0
        %3094 = vmatprep.subr.mxu0 0.0
        %3095 = vmatpush1.msra.mxu0 %v3080
        %3096 = vmatprep.subr.mxu0 0.0
        %3097 = vmatpush1.msra.mxu0 %v3081
        %3098 = vmatprep.subr.mxu0 0.0
        %3099 = vmatpush1.msra.mxu0 %v3082
        %3100 = vmatprep.subr.mxu0 0.0
        %3101 = vmatpush1.msra.mxu0 %v3083
        %3102 = vmatprep.subr.mxu0 0.0
        %3103 = vmatpush1.msra.mxu0 0.0
        %3104 = vmatprep.subr.mxu0 0.0
        %3105 = vmatpush1.msra.mxu0 0.0
        %3106 = vmatprep.subr.mxu0 0.0
        %3107 = vmatpush1.msra.mxu0 0.0
        %3108 = vmatprep.subr.mxu0 0.0
        %3109 = vmatpush1.msra.mxu0 0.0
        %3110 = vmatprep.subr.mxu0 0.0
        %3111 = vmatpush1.msra.mxu0 0.0
        %3112 = vmatprep.subr.mxu0 0.0
        %3113 = vmatpush1.msra.mxu0 0.0
        %3114 = vmatprep.subr.mxu0 0.0
        %3115 = vmatpush1.msra.mxu0 0.0
        %3116 = vmatprep.subr.mxu0 0.0
        %3117 = vmatpush1.msra.mxu0 0.0
        %3118 = vmatprep.subr.mxu0 0.0
        %3119 = vmatpush1.msra.mxu0 0.0
        %3120 = vmatprep.subr.mxu0 0.0
        %3121 = vmatpush1.msra.mxu0 0.0
        %3122 = vmatprep.subr.mxu0 0.0
        %3123 = vmatpush1.msra.mxu0 0.0
        %3124 = vmatprep.subr.mxu0 0.0
        %3125 = vmatpush1.msra.mxu0 0.0
        %3126 = vmatprep.subr.mxu0 0.0
        %3127 = vmatpush1.msra.mxu0 0.0
        %3128 = vmatprep.subr.mxu0 0.0
        %3129 = vmatpush1.msra.mxu0 0.0
        %3130 = vmatprep.subr.mxu0 0.0
        %3131 = vmatpush1.msra.mxu0 0.0
        %3132 = vmatprep.subr.mxu0 0.0
        %3133 = vmatpush1.msra.mxu0 0.0
        %3134 = vmatprep.subr.mxu0 0.0
        %3135 = vmatpush1.msra.mxu0 0.0
        %3136 = vmatprep.subr.mxu0 0.0
        %3137 = vmatpush1.msra.mxu0 0.0
        %3138 = vmatprep.subr.mxu0 0.0
        %3139 = vmatpush1.msra.mxu0 0.0
        %3140 = vmatprep.subr.mxu0 0.0
        %3141 = vmatpush1.msra.mxu0 0.0
        %3142 = vmatprep.subr.mxu0 0.0
        %3143 = vmatpush1.msra.mxu0 0.0
        %3144 = vmatprep.subr.mxu0 0.0
        %3145 = vmatpush1.msra.mxu0 0.0
        %3146 = vmatprep.subr.mxu0 0.0
        %3147 = vmatpush1.msra.mxu0 0.0
        %3148 = vmatprep.subr.mxu0 0.0
        %3149 = vmatpush1.msra.mxu0 0.0
        %3150 = vmatprep.subr.mxu0 0.0
        %3151 = vmatpush1.msra.mxu0 0.0
        %3152 = vmatprep.subr.mxu0 0.0
        %3153 = vmatpush1.msra.mxu0 0.0
        %3154 = vmatprep.subr.mxu0 0.0
        %3155 = vmatpush1.msra.mxu0 0.0
        %3156 = vmatprep.subr.mxu0 0.0
        %3157 = vmatpush1.msra.mxu0 0.0
        %3158 = vmatprep.mubr.f32.mxu0 0.0
        %3159 = vmatmul.mubr.f32.gmra.mrb[0].mxu0 %v3092
        %v3160 = vpop.f32.mrb[0].mxu0
        %v3161 = vadd.f32 %v3089, %v3160
        %v3162 = vpop.f32.mrb[0].mxu0
        %3163 = vdwg.mxu0
        %v3164 = vmul.f32 %v3161, 0.5
        %v3165 = vmul.f32 %v3161, 0.70710677
        %v3166 = verf.f32.pop %v3165
        %v3167 = vadd.f32 %v3166, 1.0
        %v3168 = vmul.f32 %v3164, %v3167
        %v3169 = vld [vmem:[%s1044] sm:$0xff]
        %v3170 = vld [vmem:[%s1044 + $0x8] sm:$0xff]
        %v3171 = vld [vmem:[%s1044 + $0x10] sm:$0xff]
        %v3172 = vld [vmem:[%s1044 + $0x18] sm:$0xff]
        %v3173 = vld [vmem:[%s1044 + $0x20] sm:$0xff]
        %v3174 = vld [vmem:[%s1044 + $0x28] sm:$0xff]
        %v3175 = vld [vmem:[%s1044 + $0x30] sm:$0xff]
        %v3176 = vld [vmem:[%s1044 + $0x38] sm:$0xff]
        %v3177 = vld [vmem:[%s1047] sm:$0x1]
        %v3179 = vlaneseq
        %v3180 = vshrl.u32 %v3179, 7
        %v3181 = vsub.s32 0, %v3180
        %v3182 = vrot.slane %v3177, %v3181
        %vm3184 = vcmask 523264
        %v3186 = vsel %vm3184, %v3168, 0
        %3188 = vmatprep.subr.mxu0 0.0
        %3189 = vmatpush1.msra.mxu0 %v3169
        %3190 = vmatprep.subr.mxu0 0.0
        %3191 = vmatpush1.msra.mxu0 %v3170
        %3192 = vmatprep.subr.mxu0 0.0
        %3193 = vmatpush1.msra.mxu0 %v3171
        %3194 = vmatprep.subr.mxu0 0.0
        %3195 = vmatpush1.msra.mxu0 %v3172
        %3196 = vmatprep.subr.mxu0 0.0
        %3197 = vmatpush1.msra.mxu0 %v3173
        %3198 = vmatprep.subr.mxu0 0.0
        %3199 = vmatpush1.msra.mxu0 %v3174
        %3200 = vmatprep.subr.mxu0 0.0
        %3201 = vmatpush1.msra.mxu0 %v3175
        %3202 = vmatprep.subr.mxu0 0.0
        %3203 = vmatpush1.msra.mxu0 %v3176
        %3204 = vmatprep.subr.mxu0 0.0
        %3205 = vmatpush1.msra.mxu0 0.0
        %3206 = vmatprep.subr.mxu0 0.0
        %3207 = vmatpush1.msra.mxu0 0.0
        %3208 = vmatprep.subr.mxu0 0.0
        %3209 = vmatpush1.msra.mxu0 0.0
        %3210 = vmatprep.subr.mxu0 0.0
        %3211 = vmatpush1.msra.mxu0 0.0
        %3212 = vmatprep.subr.mxu0 0.0
        %3213 = vmatpush1.msra.mxu0 0.0
        %3214 = vmatprep.subr.mxu0 0.0
        %3215 = vmatpush1.msra.mxu0 0.0
        %3216 = vmatprep.subr.mxu0 0.0
        %3217 = vmatpush1.msra.mxu0 0.0
        %3218 = vmatprep.subr.mxu0 0.0
        %3219 = vmatpush1.msra.mxu0 0.0
        %3220 = vmatprep.subr.mxu0 0.0
        %3221 = vmatpush1.msra.mxu0 0.0
        %3222 = vmatprep.subr.mxu0 0.0
        %3223 = vmatpush1.msra.mxu0 0.0
        %3224 = vmatprep.subr.mxu0 0.0
        %3225 = vmatpush1.msra.mxu0 0.0
        %3226 = vmatprep.subr.mxu0 0.0
        %3227 = vmatpush1.msra.mxu0 0.0
        %3228 = vmatprep.subr.mxu0 0.0
        %3229 = vmatpush1.msra.mxu0 0.0
        %3230 = vmatprep.subr.mxu0 0.0
        %3231 = vmatpush1.msra.mxu0 0.0
        %3232 = vmatprep.subr.mxu0 0.0
        %3233 = vmatpush1.msra.mxu0 0.0
        %3234 = vmatprep.subr.mxu0 0.0
        %3235 = vmatpush1.msra.mxu0 0.0
        %3236 = vmatprep.subr.mxu0 0.0
        %3237 = vmatpush1.msra.mxu0 0.0
        %3238 = vmatprep.subr.mxu0 0.0
        %3239 = vmatpush1.msra.mxu0 0.0
        %3240 = vmatprep.subr.mxu0 0.0
        %3241 = vmatpush1.msra.mxu0 0.0
        %3242 = vmatprep.subr.mxu0 0.0
        %3243 = vmatpush1.msra.mxu0 0.0
        %3244 = vmatprep.subr.mxu0 0.0
        %3245 = vmatpush1.msra.mxu0 0.0
        %3246 = vmatprep.subr.mxu0 0.0
        %3247 = vmatpush1.msra.mxu0 0.0
        %3248 = vmatprep.subr.mxu0 0.0
        %3249 = vmatpush1.msra.mxu0 0.0
        %3250 = vmatprep.subr.mxu0 0.0
        %3251 = vmatpush1.msra.mxu0 0.0
        %3252 = vmatprep.mubr.f32.mxu0 0.0
        %3253 = vmatmul.mubr.f32.gmra.mrb[0].mxu0 %v3186
        %v3254 = vpop.f32.mrb[0].mxu0
        %v3255 = vadd.f32 %v3182, %v3254
        %v3256 = vpop.f32.mrb[0].mxu0
        %3257 = vdwg.mxu0
        %v3258 = vadd.f32 %v3255, %v3079
        %v3259 = vld [vmem:[%s1050] sm:$0x1]
        %v3260 = vld [vmem:[%s1053] sm:$0x1]
        %v3261 = vsel %vm1109, %v3258, 0.0
        %3262 = vadd.xlane.f32.xlu0 %v3261
        %v3263 = vpop.xlane.xlu0 %3262
        %v3264 = vmul.f32 %v3263, %v3055
        %v3265 = vsub.f32 %v3258, %v3264
        %v3266 = vmul.f32 %v3265, %v3265
        %v3267 = vsel %vm1109, %v3266, 0.0
        %3268 = vadd.xlane.f32.xlu0 %v3267
        %v3269 = vpop.xlane.xlu0 %3268
        %v3270 = vmul.f32 %v3269, %v3055
        %v3271 = vadd.f32 %v3270, 1e-12
        %v3272 = vrsqrt.pop %v3271
        %v3273 = vmul.f32 %v3265, %v3272
        %v3275 = vlaneseq
        %v3276 = vshrl.u32 %v3275, 7
        %v3277 = vsub.s32 0, %v3276
        %v3278 = vrot.slane %v3259, %v3277
        %v3280 = vmul.f32 %v3273, %v3278
        %v3282 = vlaneseq
        %v3283 = vshrl.u32 %v3282, 7
        %v3284 = vsub.s32 0, %v3283
        %v3285 = vrot.slane %v3260, %v3284
        %v3287 = vadd.f32 %v3280, %v3285
        %3288 = vst.msk [vmem:[#allocation2] sm:$0xff] %vm1109, %v3287
        %p3289 = scmp.eq.s32.totalorder %s44, 1
        // Predicated region
        $region125: #{bert_classifier_forward.1} parent=119 // pred_check
          %p3290 = pneg %p3289
        $region126: #{bert_classifier_forward.1} parent=119 // pred_check_branch
          %3292 = sbr.rel (%p3290) target = $region128
        $region127: #{bert_classifier_forward.1} parent=119 // pred_region
          %v3293 = vld [vmem:[%s21] sm:$0xff]
          %v3294 = vld [vmem:[%s21 + $0x8] sm:$0xff]
          %v3295 = vld [vmem:[%s21 + $0x10] sm:$0xff]
          %v3296 = vld [vmem:[%s21 + $0x18] sm:$0xff]
          %v3297 = vld [vmem:[%s22] sm:$0x1]
          %v3299 = vsel %vm1109, %v3287, 0
          %3301 = vmatprep.subr.mxu0 0.0
          %3302 = vmatpush1.msra.mxu0 %v3293
          %3303 = vmatprep.subr.mxu0 0.0
          %3304 = vmatpush1.msra.mxu0 %v3294
          %3305 = vmatprep.subr.mxu0 0.0
          %3306 = vmatpush1.msra.mxu0 %v3295
          %3307 = vmatprep.subr.mxu0 0.0
          %3308 = vmatpush1.msra.mxu0 %v3296
          %3309 = vmatprep.subr.mxu0 0.0
          %3310 = vmatpush1.msra.mxu0 0.0
          %3311 = vmatprep.subr.mxu0 0.0
          %3312 = vmatpush1.msra.mxu0 0.0
          %3313 = vmatprep.subr.mxu0 0.0
          %3314 = vmatpush1.msra.mxu0 0.0
          %3315 = vmatprep.subr.mxu0 0.0
          %3316 = vmatpush1.msra.mxu0 0.0
          %3317 = vmatprep.subr.mxu0 0.0
          %3318 = vmatpush1.msra.mxu0 0.0
          %3319 = vmatprep.subr.mxu0 0.0
          %3320 = vmatpush1.msra.mxu0 0.0
          %3321 = vmatprep.subr.mxu0 0.0
          %3322 = vmatpush1.msra.mxu0 0.0
          %3323 = vmatprep.subr.mxu0 0.0
          %3324 = vmatpush1.msra.mxu0 0.0
          %3325 = vmatprep.subr.mxu0 0.0
          %3326 = vmatpush1.msra.mxu0 0.0
          %3327 = vmatprep.subr.mxu0 0.0
          %3328 = vmatpush1.msra.mxu0 0.0
          %3329 = vmatprep.subr.mxu0 0.0
          %3330 = vmatpush1.msra.mxu0 0.0
          %3331 = vmatprep.subr.mxu0 0.0
          %3332 = vmatpush1.msra.mxu0 0.0
          %3333 = vmatprep.subr.mxu0 0.0
          %3334 = vmatpush1.msra.mxu0 0.0
          %3335 = vmatprep.subr.mxu0 0.0
          %3336 = vmatpush1.msra.mxu0 0.0
          %3337 = vmatprep.subr.mxu0 0.0
          %3338 = vmatpush1.msra.mxu0 0.0
          %3339 = vmatprep.subr.mxu0 0.0
          %3340 = vmatpush1.msra.mxu0 0.0
          %3341 = vmatprep.subr.mxu0 0.0
          %3342 = vmatpush1.msra.mxu0 0.0
          %3343 = vmatprep.subr.mxu0 0.0
          %3344 = vmatpush1.msra.mxu0 0.0
          %3345 = vmatprep.subr.mxu0 0.0
          %3346 = vmatpush1.msra.mxu0 0.0
          %3347 = vmatprep.subr.mxu0 0.0
          %3348 = vmatpush1.msra.mxu0 0.0
          %3349 = vmatprep.subr.mxu0 0.0
          %3350 = vmatpush1.msra.mxu0 0.0
          %3351 = vmatprep.subr.mxu0 0.0
          %3352 = vmatpush1.msra.mxu0 0.0
          %3353 = vmatprep.subr.mxu0 0.0
          %3354 = vmatpush1.msra.mxu0 0.0
          %3355 = vmatprep.subr.mxu0 0.0
          %3356 = vmatpush1.msra.mxu0 0.0
          %3357 = vmatprep.subr.mxu0 0.0
          %3358 = vmatpush1.msra.mxu0 0.0
          %3359 = vmatprep.subr.mxu0 0.0
          %3360 = vmatpush1.msra.mxu0 0.0
          %3361 = vmatprep.subr.mxu0 0.0
          %3362 = vmatpush1.msra.mxu0 0.0
          %3363 = vmatprep.subr.mxu0 0.0
          %3364 = vmatpush1.msra.mxu0 0.0
          %3365 = vmatprep.mubr.f32.mxu0 0.0
          %3366 = vmatmul.mubr.f32.gmra.mrb[0].mxu0 %v3299
          %v3367 = vpop.f32.mrb[0].mxu0
          %v3368 = vadd.f32 %v3297, %v3367
          %v3369 = vpop.f32.mrb[0].mxu0
          %3370 = vdwg.mxu0
          %v3371 = vmax.f32 %v3368, 0.0
          %v3372 = vld [vmem:[%s23] sm:$0xff]
          %v3373 = vld [vmem:[%s23 + $0x8] sm:$0xff]
          %v3374 = vld [vmem:[%s23 + $0x10] sm:$0xff]
          %v3375 = vld [vmem:[%s23 + $0x18] sm:$0xff]
          %v3376 = vld [vmem:[%s24] sm:$0x1]
          %v3378 = vsel %vm1109, %v3371, 0
          %3380 = vmatprep.subr.mxu0 0.0
          %3381 = vmatpush1.msra.mxu0 %v3372
          %3382 = vmatprep.subr.mxu0 0.0
          %3383 = vmatpush1.msra.mxu0 %v3373
          %3384 = vmatprep.subr.mxu0 0.0
          %3385 = vmatpush1.msra.mxu0 %v3374
          %3386 = vmatprep.subr.mxu0 0.0
          %3387 = vmatpush1.msra.mxu0 %v3375
          %3388 = vmatprep.subr.mxu0 0.0
          %3389 = vmatpush1.msra.mxu0 0.0
          %3390 = vmatprep.subr.mxu0 0.0
          %3391 = vmatpush1.msra.mxu0 0.0
          %3392 = vmatprep.subr.mxu0 0.0
          %3393 = vmatpush1.msra.mxu0 0.0
          %3394 = vmatprep.subr.mxu0 0.0
          %3395 = vmatpush1.msra.mxu0 0.0
          %3396 = vmatprep.subr.mxu0 0.0
          %3397 = vmatpush1.msra.mxu0 0.0
          %3398 = vmatprep.subr.mxu0 0.0
          %3399 = vmatpush1.msra.mxu0 0.0
          %3400 = vmatprep.subr.mxu0 0.0
          %3401 = vmatpush1.msra.mxu0 0.0
          %3402 = vmatprep.subr.mxu0 0.0
          %3403 = vmatpush1.msra.mxu0 0.0
          %3404 = vmatprep.subr.mxu0 0.0
          %3405 = vmatpush1.msra.mxu0 0.0
          %3406 = vmatprep.subr.mxu0 0.0
          %3407 = vmatpush1.msra.mxu0 0.0
          %3408 = vmatprep.subr.mxu0 0.0
          %3409 = vmatpush1.msra.mxu0 0.0
          %3410 = vmatprep.subr.mxu0 0.0
          %3411 = vmatpush1.msra.mxu0 0.0
          %3412 = vmatprep.subr.mxu0 0.0
          %3413 = vmatpush1.msra.mxu0 0.0
          %3414 = vmatprep.subr.mxu0 0.0
          %3415 = vmatpush1.msra.mxu0 0.0
          %3416 = vmatprep.subr.mxu0 0.0
          %3417 = vmatpush1.msra.mxu0 0.0
          %3418 = vmatprep.subr.mxu0 0.0
          %3419 = vmatpush1.msra.mxu0 0.0
          %3420 = vmatprep.subr.mxu0 0.0
          %3421 = vmatpush1.msra.mxu0 0.0
          %3422 = vmatprep.subr.mxu0 0.0
          %3423 = vmatpush1.msra.mxu0 0.0
          %3424 = vmatprep.subr.mxu0 0.0
          %3425 = vmatpush1.msra.mxu0 0.0
          %3426 = vmatprep.subr.mxu0 0.0
          %3427 = vmatpush1.msra.mxu0 0.0
          %3428 = vmatprep.subr.mxu0 0.0
          %3429 = vmatpush1.msra.mxu0 0.0
          %3430 = vmatprep.subr.mxu0 0.0
          %3431 = vmatpush1.msra.mxu0 0.0
          %3432 = vmatprep.subr.mxu0 0.0
          %3433 = vmatpush1.msra.mxu0 0.0
          %3434 = vmatprep.subr.mxu0 0.0
          %3435 = vmatpush1.msra.mxu0 0.0
          %3436 = vmatprep.subr.mxu0 0.0
          %3437 = vmatpush1.msra.mxu0 0.0
          %3438 = vmatprep.subr.mxu0 0.0
          %3439 = vmatpush1.msra.mxu0 0.0
          %3440 = vmatprep.subr.mxu0 0.0
          %3441 = vmatpush1.msra.mxu0 0.0
          %3442 = vmatprep.subr.mxu0 0.0
          %3443 = vmatpush1.msra.mxu0 0.0
          %3444 = vmatprep.mubr.f32.mxu0 0.0
          %3445 = vmatmul.mubr.f32.gmra.mrb[0].mxu0 %v3378
          %v3446 = vpop.f32.mrb[0].mxu0
          %v3447 = vadd.f32 %v3376, %v3446
          %v3448 = vpop.f32.mrb[0].mxu0
          %3449 = vdwg.mxu0
          %vm3450 = vcmask 16384
          %3451 = vst.msk [vmem:[%s983] sm:$0x1] %vm3450, %v3447
        $region128: #{bert_classifier_forward.1} parent=119 // pred_fallthru
          _
        %s3452 = sand.u32 %s674, 1
        %s3453 = scalar_lea.sflag [#allocation4], %s3452
        %s3454 = sand.u32 %s674, 1
        %s3455 = scalar_lea.vmem [#allocation3], %s3454
        // Predicated region
        $region129: #{bert_classifier_forward.1} parent=119 // pred_check
          %p3456 = pneg %p684
        $region130: #{bert_classifier_forward.1} parent=119 // pred_check_branch
          %3458 = sbr.rel (%p3456) target = $region132
        $region131: #{bert_classifier_forward.1} parent=119 // pred_region
          %s3460 = ssub.s32 16, 16
          %3461 = vsyncadd %s3453, %s3460
          %s3462 = smul.addr %s43, 16
          %s3463 = scalar_lea.hbm %s25, %s3462
          %s3465 = sshll.u32 %s3455, 4
          %s3466 = int_to_ptr.vmem [resolvable:$true] %s3465
          %3468 = dma.vmem_to_hbm [thread:$0]  %s3466, 16, %s3463, %s3453
        $region132: #{bert_classifier_forward.1} parent=119 // pred_fallthru
          _
      $region120: #{bert_classifier_forward.1} parent=5 // pred_fallthru
        _
      %p3469 = scmp.le.s32.totalorder 2, %s34
      // Predicated region
      $region133: #{bert_classifier_forward.1} parent=5 // pred_check
        %p3470 = pneg %p3469
      $region134: #{bert_classifier_forward.1} parent=5 // pred_check_branch
        %3472 = sbr.rel (%p3470) target = $region136
      $region135: #{bert_classifier_forward.1} parent=5 // pred_region
        %s3473 = ssub.s32 %s34, 2
        // Predicated region
        $region137: #{bert_classifier_forward.1} parent=135 // pred_check
          %p3474 = pneg %p690
        $region138: #{bert_classifier_forward.1} parent=135 // pred_check_branch
          %3476 = sbr.rel (%p3474) target = $region140
        $region139: #{bert_classifier_forward.1} parent=135 // pred_region
          %s3477 = sand.u32 %s675, 1
          %s3478 = scalar_lea.sflag [#allocation4], %s3477
          %s3479 = sand.u32 %s675, 1
          %s3480 = scalar_lea.vmem [#allocation3], %s3479
          %3481 = dma.done %s3478, 16
        $region140: #{bert_classifier_forward.1} parent=135 // pred_fallthru
          _
      $region136: #{bert_classifier_forward.1} parent=5 // pred_fallthru
        _
    $region6: #{bert_classifier_forward.1} parent=1 // loop_footer
      %s38 = sadd.s32 1, %s34
    $region7: #{bert_classifier_forward.1} parent=1 // loop_footer_branch
      %33 = sbr.rel target = $region3
    $region8: #{bert_classifier_forward.1} parent=1 // loop_exit
      _
    %3482 = vsyncpa [#allocation4], 1
    %s3483 = scalar_lea.sflag [#allocation4], 1
    %3484 = vsyncpa %s3483, 1

</llo_original>
